<compile_context>
chip_gen: v6e
topology: v6e:2x2x1
jax: 0.10.0
libtpu: 0.0.40
codegen_flags: <defaults>
</compile_context>

<pallas_src>
import functools
import math

import jax
import jax.numpy as jnp
from jax import lax
from jax.experimental import pallas as pl
from jax.experimental.pallas import tpu as pltpu


# ------------------------- fused decoder-stack kernel ------------------------


def _decoder_stack_kernel(x_ref, enc_ref, smask_ref, emask_ref,
                          wsq_ref, wsk_ref, wsv_ref, wso_ref,
                          weq_ref, wek_ref, wev_ref, weo_ref,
                          w1_ref, w2_ref,
                          out_ref, *attn_refs,
                          n_layers, n_heads, d_k, return_attns):
    """Entire decoder stack for ONE batch element; activations stay in VMEM."""
    x = x_ref[0]            # [T, D]
    enc = enc_ref[0]        # [Lk, De]
    smask = smask_ref[0]    # [T, T]   1.0 == masked
    emask = emask_ref[0]    # [T, Lk]  1.0 == masked
    if return_attns:
        sattn_ref, eattn_ref = attn_refs

    def layer_norm(y):
        # one-pass variance: E[y^2] - mean^2  (gamma=1, beta=0, eps=1e-5)
        mean = jnp.mean(y, axis=-1, keepdims=True)
        var = jnp.mean(y * y, axis=-1, keepdims=True) - mean * mean
        return (y - mean) * lax.rsqrt(var + 1e-5)

    def mha(xq, xkv, mask, wqh, wkh, wvh, wo):
        # wqh/wkh/wvh: [H, Din, d_k]  (1/sqrt(d_k) already folded into wqh)
        # wo: [H*d_k, Dq]
        H = n_heads
        lq, lk = xq.shape[0], xkv.shape[0]
        xq_b = jnp.broadcast_to(xq[None], (H, lq, xq.shape[1]))
        xkv_b = jnp.broadcast_to(xkv[None], (H, lk, xkv.shape[1]))
        qh = lax.dot_general(xq_b, wqh, (((2,), (1,)), ((0,), (0,))),
                             preferred_element_type=jnp.float32)      # [H, Lq, dk]
        kh = lax.dot_general(xkv_b, wkh, (((2,), (1,)), ((0,), (0,))),
                             preferred_element_type=jnp.float32)      # [H, Lk, dk]
        vh = lax.dot_general(xkv_b, wvh, (((2,), (1,)), ((0,), (0,))),
                             preferred_element_type=jnp.float32)      # [H, Lk, dv]
        # batched scores over heads: one dot_general, head = batch dim
        scores = lax.dot_general(qh, kh, (((2,), (2,)), ((0,), (0,))),
                                 preferred_element_type=jnp.float32)  # [H, Lq, Lk]
        scores = jnp.where(mask[None] > 0.5, jnp.float32(-1e9), scores)
        scores = scores - jnp.max(scores, axis=-1, keepdims=True)
        e = jnp.exp(scores)
        attn = e * pl.reciprocal(jnp.sum(e, axis=-1, keepdims=True), approx=True)
        ctx = lax.dot_general(attn, vh, (((2,), (1,)), ((0,), (0,))),
                              preferred_element_type=jnp.float32)     # [H, Lq, dv]
        # single output projection on the concatenated heads
        ctx_cat = jnp.concatenate([ctx[h] for h in range(H)], axis=-1)  # [Lq, H*dv]
        out = jnp.dot(ctx_cat, wo, preferred_element_type=jnp.float32) + xq
        return layer_norm(out), attn

    for l in range(n_layers):          # small & static -> unrolled
        x, sa = mha(x, x, smask, wsq_ref[l], wsk_ref[l], wsv_ref[l], wso_ref[l])
        x, ea = mha(x, enc, emask, weq_ref[l], wek_ref[l], wev_ref[l], weo_ref[l])
        if return_attns:
            for h in range(n_heads):
                sattn_ref[0, l * n_heads + h] = sa[h]
                eattn_ref[0, l * n_heads + h] = ea[h]
        hid = jnp.maximum(
            jnp.dot(x, w1_ref[l], preferred_element_type=jnp.float32), 0.0)
        x = layer_norm(jnp.dot(hid, w2_ref[l],
                               preferred_element_type=jnp.float32) + x)

    out_ref[0] = x


# ------------------------------ wrapper --------------------------------------


def decoder_stack(x_emb, enc_outputs, self_mask, enc_mask, stacked, *,
                  n_heads, d_k, return_attns=True):
    B, T, D = x_emb.shape
    _, Lk, De = enc_outputs.shape
    n_layers = stacked["w1"].shape[0]
    d_ff = stacked["w1"].shape[-1]

    def full(shape):
        n = len(shape)
        return pl.BlockSpec(shape, lambda b, n=n: (0,) * n)

    in_specs = [
        pl.BlockSpec((1, T, D), lambda b: (b, 0, 0)),      # decoder activations
        pl.BlockSpec((1, Lk, De), lambda b: (b, 0, 0)),    # encoder outputs
        pl.BlockSpec((1, T, T), lambda b: (b, 0, 0)),      # self-attn mask
        pl.BlockSpec((1, T, Lk), lambda b: (b, 0, 0)),     # enc-attn mask
        full((n_layers, n_heads, D, d_k)),                 # wq_self (scaled)
        full((n_layers, n_heads, D, d_k)),                 # wk_self
        full((n_layers, n_heads, D, d_k)),                 # wv_self
        full((n_layers, n_heads * d_k, D)),                # wo_self
        full((n_layers, n_heads, D, d_k)),                 # wq_enc (scaled)
        full((n_layers, n_heads, De, d_k)),                # wk_enc
        full((n_layers, n_heads, De, d_k)),                # wv_enc
        full((n_layers, n_heads * d_k, D)),                # wo_enc
        full((n_layers, D, d_ff)),                         # ffn w1
        full((n_layers, d_ff, D)),                         # ffn w2
    ]
    out_shape = [jax.ShapeDtypeStruct((B, T, D), jnp.float32)]
    out_specs = [pl.BlockSpec((1, T, D), lambda b: (b, 0, 0))]
    if return_attns:
        out_shape += [
            jax.ShapeDtypeStruct((B, n_layers * n_heads, T, T), jnp.float32),
            jax.ShapeDtypeStruct((B, n_layers * n_heads, T, Lk), jnp.float32),
        ]
        out_specs += [
            pl.BlockSpec((1, n_layers * n_heads, T, T), lambda b: (b, 0, 0, 0)),
            pl.BlockSpec((1, n_layers * n_heads, T, Lk), lambda b: (b, 0, 0, 0)),
        ]

    kernel = functools.partial(_decoder_stack_kernel, n_layers=n_layers,
                               n_heads=n_heads, d_k=d_k,
                               return_attns=return_attns)
    outs = pl.pallas_call(
        kernel,
        out_shape=tuple(out_shape),
        grid=(B,),
        in_specs=in_specs,
        out_specs=tuple(out_specs),
        compiler_params=pltpu.CompilerParams(
            dimension_semantics=("parallel",)),   # 2-way parallel -> v7x dual TC
    )(x_emb, enc_outputs, self_mask, enc_mask,
      stacked["wq_self"], stacked["wk_self"], stacked["wv_self"], stacked["wo_self"],
      stacked["wq_enc"], stacked["wk_enc"], stacked["wv_enc"], stacked["wo_enc"],
      stacked["w1"], stacked["w2"])

    if return_attns:
        dec_out, sattn, eattn = outs
        sattn = sattn.reshape(B, n_layers, n_heads, T, T)
        eattn = eattn.reshape(B, n_layers, n_heads, T, Lk)
        return dec_out, sattn, eattn
    return outs[0], None, None


# --------------------------- model construction -----------------------------


def build_positional_encoding(max_len, d_model):
    position = jnp.arange(max_len, dtype=jnp.float32)[:, None]
    div_term = jnp.exp(jnp.arange(0, d_model, 2, dtype=jnp.float32)
                       * (-math.log(10000.0) / d_model))
    pe = jnp.zeros((max_len, d_model), jnp.float32)
    pe = pe.at[:, 0::2].set(jnp.sin(position * div_term))
    pe = pe.at[:, 1::2].set(jnp.cos(position * div_term))
    return pe                                                 # [max_len, d_model]


def init_params(key, *, tgt_vocab_size, word_size, hidden_size, padding_idx,
                n_heads, d_k, d_ff, n_layers):
    n_per_layer = 10
    keys = jax.random.split(key, 1 + n_per_layer * n_layers)
    emb = 0.02 * jax.random.normal(keys[0], (tgt_vocab_size, word_size), jnp.float32)
    emb = emb.at[padding_idx].set(0.0)                        # nn.Embedding padding_idx

    def lin(kk, fan_in, fan_out):
        bound = 1.0 / math.sqrt(fan_in)
        return jax.random.uniform(kk, (fan_in, fan_out), jnp.float32, -bound, bound)

    layers = []
    for i in range(n_layers):
        k = keys[1 + i * n_per_layer: 1 + (i + 1) * n_per_layer]
        layers.append(dict(
            self_wq=lin(k[0], word_size, n_heads * d_k),
            self_wk=lin(k[1], word_size, n_heads * d_k),
            self_wv=lin(k[2], word_size, n_heads * d_k),
            self_wo=lin(k[3], n_heads * d_k, word_size),
            enc_wq=lin(k[4], word_size, n_heads * d_k),
            enc_wk=lin(k[5], hidden_size, n_heads * d_k),
            enc_wv=lin(k[6], hidden_size, n_heads * d_k),
            enc_wo=lin(k[7], n_heads * d_k, word_size),
            ffn_w1=lin(k[8], word_size, d_ff),
            ffn_w2=lin(k[9], d_ff, word_size),
        ))
    return emb, layers


def pack_layer_weights(layers, *, n_heads, d_k):
    """Stack per-layer weights along a leading axis; Q/K/V are reshaped to
    per-head [H, Din, d_k]; the 1/sqrt(d_k) score scale is folded into W_Q."""
    def heads(w):   # [Din, H*dk] -> [H, Din, dk]
        din = w.shape[0]
        return w.reshape(din, n_heads, d_k).transpose(1, 0, 2)

    scale = 1.0 / math.sqrt(d_k)
    return dict(
        wq_self=jnp.stack([heads(lp["self_wq"]) * scale for lp in layers]),
        wk_self=jnp.stack([heads(lp["self_wk"]) for lp in layers]),
        wv_self=jnp.stack([heads(lp["self_wv"]) for lp in layers]),
        wo_self=jnp.stack([lp["self_wo"] for lp in layers]),
        wq_enc=jnp.stack([heads(lp["enc_wq"]) * scale for lp in layers]),
        wk_enc=jnp.stack([heads(lp["enc_wk"]) for lp in layers]),
        wv_enc=jnp.stack([heads(lp["enc_wv"]) for lp in layers]),
        wo_enc=jnp.stack([lp["enc_wo"] for lp in layers]),
        w1=jnp.stack([lp["ffn_w1"] for lp in layers]),
        w2=jnp.stack([lp["ffn_w2"] for lp in layers]),
    )


def transpeaker_decoder_forward(params, dec_inputs, enc_outputs, ctx_mask, *,
                                n_heads, d_k, return_attns=True):
    """dec_inputs: int32 [B, T]; enc_outputs: f32 [B, Lk, hidden];
    ctx_mask: bool [B, Lk] (True == masked) or None."""
    emb_table, stacked = params
    n_layers = stacked["w1"].shape[0]
    B, T = dec_inputs.shape
    _, Lk, _ = enc_outputs.shape
    word_size = emb_table.shape[1]

    # embedding + positional encoding (glue)
    dec_outputs = jnp.take(emb_table, dec_inputs, axis=0)          # [B, T, word_size]
    pe = build_positional_encoding(T, word_size)
    dec_outputs = dec_outputs + pe[None, :, :]

    # masks (glue): 1.0 == masked
    pad_mask = (dec_inputs == 0)[:, None, :]                       # [B, 1, T]
    pad_mask = jnp.broadcast_to(pad_mask, (B, T, T)).astype(jnp.float32)
    sub_mask = jnp.triu(jnp.ones((T, T), jnp.float32), k=1)[None, :, :]
    dec_self_attn_mask = ((pad_mask + sub_mask) > 0).astype(jnp.float32)
    if ctx_mask is not None:
        dec_enc_attn_mask = jnp.broadcast_to(
            ctx_mask[:, None, :], (B, T, Lk)).astype(jnp.float32)
    else:
        dec_enc_attn_mask = jnp.zeros((B, T, Lk), jnp.float32)

    dec_out, sattn, eattn = decoder_stack(
        dec_outputs, enc_outputs, dec_self_attn_mask, dec_enc_attn_mask,
        stacked, n_heads=n_heads, d_k=d_k, return_attns=return_attns)

    if return_attns:
        dec_self_attns = [sattn[:, l] for l in range(n_layers)]
        dec_enc_attns = [eattn[:, l] for l in range(n_layers)]
    else:
        dec_self_attns, dec_enc_attns = [], []
    return dec_out, dec_self_attns, dec_enc_attns


# --------------------------------- main --------------------------------------

if __name__ == "__main__":
    # hyper-params implied by the module's __init__ / global args
    tgt_vocab_size = 50
    word_size = 32        # d_model of decoder tokens (Q_size)
    hidden_size = 32      # encoder hidden (K_size), args.h_dim
    padding_idx = 0
    n_heads = 2           # args.speaker_head_num
    d_k = 16              # args.aemb
    d_ff = 64             # args.proj_hidden
    n_layers = 2          # args.speaker_layer_num

    B, T, Lk = 2, 8, 10

    key = jax.random.PRNGKey(0)
    kp, kd, ke = jax.random.split(key, 3)

    emb, layers = init_params(kp, tgt_vocab_size=tgt_vocab_size, word_size=word_size,
                              hidden_size=hidden_size, padding_idx=padding_idx,
                              n_heads=n_heads, d_k=d_k, d_ff=d_ff, n_layers=n_layers)
    stacked = pack_layer_weights(layers, n_heads=n_heads, d_k=d_k)
    params = (emb, stacked)

    dec_inputs = jax.random.randint(kd, (B, T), 1, tgt_vocab_size, dtype=jnp.int32)
    dec_inputs = dec_inputs.at[:, -2:].set(0)                 # some padding tokens
    enc_outputs = jax.random.normal(ke, (B, Lk, hidden_size), jnp.float32)
    ctx_mask = jnp.zeros((B, Lk), jnp.bool_).at[:, -2:].set(True)   # True == masked

    dec_out, self_attns, enc_attns = transpeaker_decoder_forward(
        params, dec_inputs, enc_outputs, ctx_mask, n_heads=n_heads, d_k=d_k)

    jax.block_until_ready(dec_out)
    for a in self_attns + enc_attns:
        jax.block_until_ready(a)

    assert dec_out.shape == (B, T, word_size)
    assert len(self_attns) == n_layers and len(enc_attns) == n_layers
    assert self_attns[0].shape == (B, n_heads, T, T)
    assert enc_attns[0].shape == (B, n_heads, T, Lk)
    assert bool(jnp.all(jnp.isfinite(dec_out)))
    print("KERNEL_OK")
</pallas_src>

<mosaic_0001>
module attributes {stable_mosaic.version = 11 : i64} {
  func.func @_decoder_stack_kernel(%arg0: i32, %arg1: memref<1x8x32xf32, #tpu.memory_space<vmem>>, %arg2: memref<1x10x32xf32, #tpu.memory_space<vmem>>, %arg3: memref<1x8x8xf32, #tpu.memory_space<vmem>>, %arg4: memref<1x8x10xf32, #tpu.memory_space<vmem>>, %arg5: memref<2x2x32x16xf32, #tpu.memory_space<vmem>>, %arg6: memref<2x2x32x16xf32, #tpu.memory_space<vmem>>, %arg7: memref<2x2x32x16xf32, #tpu.memory_space<vmem>>, %arg8: memref<2x32x32xf32, #tpu.memory_space<vmem>>, %arg9: memref<2x2x32x16xf32, #tpu.memory_space<vmem>>, %arg10: memref<2x2x32x16xf32, #tpu.memory_space<vmem>>, %arg11: memref<2x2x32x16xf32, #tpu.memory_space<vmem>>, %arg12: memref<2x32x32xf32, #tpu.memory_space<vmem>>, %arg13: memref<2x32x64xf32, #tpu.memory_space<vmem>>, %arg14: memref<2x64x32xf32, #tpu.memory_space<vmem>>, %arg15: memref<1x8x32xf32, #tpu.memory_space<vmem>>, %arg16: memref<1x4x8x8xf32, #tpu.memory_space<vmem>>, %arg17: memref<1x4x8x10xf32, #tpu.memory_space<vmem>>) attributes {dimension_semantics = [#tpu.dimension_semantics<parallel>], iteration_bounds = array<i64: 2>, scalar_prefetch = 0 : i64, scratch_operands = 0 : i64, tpu.core_type = #tpu.core_type<tc>, window_params = [{transform_indices = @transform_0, window_bounds = array<i64: 1, 8, 32>}, {transform_indices = @transform_1, window_bounds = array<i64: 1, 10, 32>}, {transform_indices = @transform_2, window_bounds = array<i64: 1, 8, 8>}, {transform_indices = @transform_3, window_bounds = array<i64: 1, 8, 10>}, {pipeline_mode = #tpu.pipeline_mode<synchronous>, transform_indices = @transform_4, window_bounds = array<i64: 2, 2, 32, 16>}, {pipeline_mode = #tpu.pipeline_mode<synchronous>, transform_indices = @transform_5, window_bounds = array<i64: 2, 2, 32, 16>}, {pipeline_mode = #tpu.pipeline_mode<synchronous>, transform_indices = @transform_6, window_bounds = array<i64: 2, 2, 32, 16>}, {pipeline_mode = #tpu.pipeline_mode<synchronous>, transform_indices = @transform_7, window_bounds = array<i64: 2, 32, 32>}, {pipeline_mode = #tpu.pipeline_mode<synchronous>, transform_indices = @transform_8, window_bounds = array<i64: 2, 2, 32, 16>}, {pipeline_mode = #tpu.pipeline_mode<synchronous>, transform_indices = @transform_9, window_bounds = array<i64: 2, 2, 32, 16>}, {pipeline_mode = #tpu.pipeline_mode<synchronous>, transform_indices = @transform_10, window_bounds = array<i64: 2, 2, 32, 16>}, {pipeline_mode = #tpu.pipeline_mode<synchronous>, transform_indices = @transform_11, window_bounds = array<i64: 2, 32, 32>}, {pipeline_mode = #tpu.pipeline_mode<synchronous>, transform_indices = @transform_12, window_bounds = array<i64: 2, 32, 64>}, {pipeline_mode = #tpu.pipeline_mode<synchronous>, transform_indices = @transform_13, window_bounds = array<i64: 2, 64, 32>}, {transform_indices = @transform_14, window_bounds = array<i64: 1, 8, 32>}, {transform_indices = @transform_15, window_bounds = array<i64: 1, 4, 8, 8>}, {transform_indices = @transform_16, window_bounds = array<i64: 1, 4, 8, 10>}]} {
    %c0 = arith.constant 0 : index
    %c0_0 = arith.constant 0 : index
    %c0_1 = arith.constant 0 : index
    %0 = vector.load %arg1[%c0, %c0_0, %c0_1] : memref<1x8x32xf32, #tpu.memory_space<vmem>>, vector<1x8x32xf32>
    %1 = vector.shape_cast %0 : vector<1x8x32xf32> to vector<8x32xf32>
    %c0_2 = arith.constant 0 : index
    %c0_3 = arith.constant 0 : index
    %c0_4 = arith.constant 0 : index
    %2 = vector.load %arg2[%c0_2, %c0_3, %c0_4] : memref<1x10x32xf32, #tpu.memory_space<vmem>>, vector<1x10x32xf32>
    %3 = vector.shape_cast %2 : vector<1x10x32xf32> to vector<10x32xf32>
    %c0_5 = arith.constant 0 : index
    %c0_6 = arith.constant 0 : index
    %c0_7 = arith.constant 0 : index
    %4 = vector.load %arg3[%c0_5, %c0_6, %c0_7] : memref<1x8x8xf32, #tpu.memory_space<vmem>>, vector<1x8x8xf32>
    %5 = vector.shape_cast %4 : vector<1x8x8xf32> to vector<8x8xf32>
    %c0_8 = arith.constant 0 : index
    %c0_9 = arith.constant 0 : index
    %c0_10 = arith.constant 0 : index
    %6 = vector.load %arg4[%c0_8, %c0_9, %c0_10] : memref<1x8x10xf32, #tpu.memory_space<vmem>>, vector<1x8x10xf32>
    %7 = vector.shape_cast %6 : vector<1x8x10xf32> to vector<8x10xf32>
    %c0_11 = arith.constant 0 : index
    %c0_12 = arith.constant 0 : index
    %c0_13 = arith.constant 0 : index
    %c0_14 = arith.constant 0 : index
    %8 = vector.load %arg5[%c0_11, %c0_12, %c0_13, %c0_14] : memref<2x2x32x16xf32, #tpu.memory_space<vmem>>, vector<1x2x32x16xf32>
    %9 = vector.shape_cast %8 : vector<1x2x32x16xf32> to vector<2x32x16xf32>
    %c0_15 = arith.constant 0 : index
    %c0_16 = arith.constant 0 : index
    %c0_17 = arith.constant 0 : index
    %c0_18 = arith.constant 0 : index
    %10 = vector.load %arg6[%c0_15, %c0_16, %c0_17, %c0_18] : memref<2x2x32x16xf32, #tpu.memory_space<vmem>>, vector<1x2x32x16xf32>
    %11 = vector.shape_cast %10 : vector<1x2x32x16xf32> to vector<2x32x16xf32>
    %c0_19 = arith.constant 0 : index
    %c0_20 = arith.constant 0 : index
    %c0_21 = arith.constant 0 : index
    %c0_22 = arith.constant 0 : index
    %12 = vector.load %arg7[%c0_19, %c0_20, %c0_21, %c0_22] : memref<2x2x32x16xf32, #tpu.memory_space<vmem>>, vector<1x2x32x16xf32>
    %13 = vector.shape_cast %12 : vector<1x2x32x16xf32> to vector<2x32x16xf32>
    %c0_23 = arith.constant 0 : index
    %c0_24 = arith.constant 0 : index
    %c0_25 = arith.constant 0 : index
    %14 = vector.load %arg8[%c0_23, %c0_24, %c0_25] : memref<2x32x32xf32, #tpu.memory_space<vmem>>, vector<1x32x32xf32>
    %15 = vector.shape_cast %14 : vector<1x32x32xf32> to vector<32x32xf32>
    %16 = vector.shape_cast %1 : vector<8x32xf32> to vector<1x8x32xf32>
    %17 = vector.shape_cast %16 : vector<1x8x32xf32> to vector<1x8x32xf32>
    %18 = vector.broadcast %17 : vector<1x8x32xf32> to vector<2x8x32xf32>
    %19 = vector.shape_cast %1 : vector<8x32xf32> to vector<1x8x32xf32>
    %20 = vector.shape_cast %19 : vector<1x8x32xf32> to vector<1x8x32xf32>
    %21 = vector.broadcast %20 : vector<1x8x32xf32> to vector<2x8x32xf32>
    %cst = arith.constant dense<0.000000e+00> : vector<2x8x16xf32>
    %22 = tpu.matmul %18, %9, %cst {dimension_numbers = #tpu.dot_dimension_numbers<[2], [1], [1], [2], [0, 0, 0, 1, 1, 2], [0], [0]>} : vector<2x8x32xf32>, vector<2x32x16xf32>, vector<2x8x16xf32> -> vector<2x8x16xf32>
    %cst_26 = arith.constant dense<0.000000e+00> : vector<2x8x16xf32>
    %23 = tpu.matmul %21, %11, %cst_26 {dimension_numbers = #tpu.dot_dimension_numbers<[2], [1], [1], [2], [0, 0, 0, 1, 1, 2], [0], [0]>} : vector<2x8x32xf32>, vector<2x32x16xf32>, vector<2x8x16xf32> -> vector<2x8x16xf32>
    %cst_27 = arith.constant dense<0.000000e+00> : vector<2x8x16xf32>
    %24 = tpu.matmul %21, %13, %cst_27 {dimension_numbers = #tpu.dot_dimension_numbers<[2], [1], [1], [2], [0, 0, 0, 1, 1, 2], [0], [0]>} : vector<2x8x32xf32>, vector<2x32x16xf32>, vector<2x8x16xf32> -> vector<2x8x16xf32>
    %cst_28 = arith.constant dense<0.000000e+00> : vector<2x8x8xf32>
    %25 = tpu.matmul %22, %23, %cst_28 {dimension_numbers = #tpu.dot_dimension_numbers<[2], [2], [1], [1], [0, 0, 0, 1, 1, 1], [0], [0]>} : vector<2x8x16xf32>, vector<2x8x16xf32>, vector<2x8x8xf32> -> vector<2x8x8xf32>
    %26 = vector.shape_cast %5 : vector<8x8xf32> to vector<1x8x8xf32>
    %cst_29 = arith.constant 5.000000e-01 : f32
    %27 = vector.broadcast %cst_29 : f32 to vector<1x8x8xf32>
    %28 = arith.cmpf ogt, %26, %27 : vector<1x8x8xf32>
    %cst_30 = arith.constant -1.000000e+09 : f32
    %29 = vector.shape_cast %28 : vector<1x8x8xi1> to vector<1x8x8xi1>
    %30 = vector.broadcast %29 : vector<1x8x8xi1> to vector<2x8x8xi1>
    %31 = vector.broadcast %cst_30 : f32 to vector<2x8x8xf32>
    %32 = arith.select %30, %31, %25 : vector<2x8x8xi1>, vector<2x8x8xf32>
    %cst_31 = arith.constant dense<0xFF800000> : vector<2x8xf32>
    %33 = vector.multi_reduction <maximumf>, %32, %cst_31 [2] : vector<2x8x8xf32> to vector<2x8xf32>
    %34 = vector.shape_cast %33 : vector<2x8xf32> to vector<2x8x1xf32>
    %35 = vector.broadcast %34 : vector<2x8x1xf32> to vector<2x8x8xf32>
    %36 = arith.subf %32, %35 : vector<2x8x8xf32>
    %37 = math.exp %36 : vector<2x8x8xf32>
    %cst_32 = arith.constant dense<0.000000e+00> : vector<2x8xf32>
    %38 = vector.multi_reduction <add>, %37, %cst_32 [2] : vector<2x8x8xf32> to vector<2x8xf32>
    %39 = vector.shape_cast %38 : vector<2x8xf32> to vector<2x8x1xf32>
    %40 = tpu.reciprocal %39 {approx = true} : vector<2x8x1xf32> -> vector<2x8x1xf32>
    %41 = vector.broadcast %40 : vector<2x8x1xf32> to vector<2x8x8xf32>
    %42 = arith.mulf %37, %41 : vector<2x8x8xf32>
    %cst_33 = arith.constant dense<0.000000e+00> : vector<2x8x16xf32>
    %43 = tpu.matmul %42, %24, %cst_33 {dimension_numbers = #tpu.dot_dimension_numbers<[2], [1], [1], [2], [0, 0, 0, 1, 1, 2], [0], [0]>} : vector<2x8x8xf32>, vector<2x8x16xf32>, vector<2x8x16xf32> -> vector<2x8x16xf32>
    %44 = vector.extract_strided_slice %43 {offsets = [0, 0, 0], sizes = [1, 8, 16], strides = [1, 1, 1]} : vector<2x8x16xf32> to vector<1x8x16xf32>
    %45 = vector.shape_cast %44 : vector<1x8x16xf32> to vector<8x16xf32>
    %46 = vector.extract_strided_slice %43 {offsets = [1, 0, 0], sizes = [1, 8, 16], strides = [1, 1, 1]} : vector<2x8x16xf32> to vector<1x8x16xf32>
    %47 = vector.shape_cast %46 : vector<1x8x16xf32> to vector<8x16xf32>
    %48 = tpu.concatenate %45, %47 in 1 : vector<8x16xf32>, vector<8x16xf32> -> vector<8x32xf32>
    %cst_34 = arith.constant dense<0.000000e+00> : vector<8x32xf32>
    %49 = tpu.matmul %48, %15, %cst_34 {dimension_numbers = #tpu.dot_dimension_numbers<[1], [0], [0], [1], [0, 0, 1, 1], [], []>} : vector<8x32xf32>, vector<32x32xf32>, vector<8x32xf32> -> vector<8x32xf32>
    %50 = arith.addf %49, %1 : vector<8x32xf32>
    %cst_35 = arith.constant dense<0.000000e+00> : vector<8xf32>
    %51 = vector.multi_reduction <add>, %50, %cst_35 [1] : vector<8x32xf32> to vector<8xf32>
    %52 = vector.shape_cast %51 : vector<8xf32> to vector<8x1xf32>
    %cst_36 = arith.constant 3.200000e+01 : f32
    %53 = vector.broadcast %cst_36 : f32 to vector<8x1xf32>
    %54 = arith.divf %52, %53 : vector<8x1xf32>
    %55 = arith.mulf %50, %50 : vector<8x32xf32>
    %cst_37 = arith.constant dense<0.000000e+00> : vector<8xf32>
    %56 = vector.multi_reduction <add>, %55, %cst_37 [1] : vector<8x32xf32> to vector<8xf32>
    %57 = vector.shape_cast %56 : vector<8xf32> to vector<8x1xf32>
    %cst_38 = arith.constant 3.200000e+01 : f32
    %58 = vector.broadcast %cst_38 : f32 to vector<8x1xf32>
    %59 = arith.divf %57, %58 : vector<8x1xf32>
    %60 = arith.mulf %54, %54 : vector<8x1xf32>
    %61 = arith.subf %59, %60 : vector<8x1xf32>
    %62 = vector.broadcast %54 : vector<8x1xf32> to vector<8x32xf32>
    %63 = arith.subf %50, %62 : vector<8x32xf32>
    %cst_39 = arith.constant 9.99999974E-6 : f32
    %64 = vector.broadcast %cst_39 : f32 to vector<8x1xf32>
    %65 = arith.addf %61, %64 : vector<8x1xf32>
    %66 = math.rsqrt %65 : vector<8x1xf32>
    %67 = vector.broadcast %66 : vector<8x1xf32> to vector<8x32xf32>
    %68 = arith.mulf %63, %67 : vector<8x32xf32>
    %c0_40 = arith.constant 0 : index
    %c0_41 = arith.constant 0 : index
    %c0_42 = arith.constant 0 : index
    %c0_43 = arith.constant 0 : index
    %69 = vector.load %arg9[%c0_40, %c0_41, %c0_42, %c0_43] : memref<2x2x32x16xf32, #tpu.memory_space<vmem>>, vector<1x2x32x16xf32>
    %70 = vector.shape_cast %69 : vector<1x2x32x16xf32> to vector<2x32x16xf32>
    %c0_44 = arith.constant 0 : index
    %c0_45 = arith.constant 0 : index
    %c0_46 = arith.constant 0 : index
    %c0_47 = arith.constant 0 : index
    %71 = vector.load %arg10[%c0_44, %c0_45, %c0_46, %c0_47] : memref<2x2x32x16xf32, #tpu.memory_space<vmem>>, vector<1x2x32x16xf32>
    %72 = vector.shape_cast %71 : vector<1x2x32x16xf32> to vector<2x32x16xf32>
    %c0_48 = arith.constant 0 : index
    %c0_49 = arith.constant 0 : index
    %c0_50 = arith.constant 0 : index
    %c0_51 = arith.constant 0 : index
    %73 = vector.load %arg11[%c0_48, %c0_49, %c0_50, %c0_51] : memref<2x2x32x16xf32, #tpu.memory_space<vmem>>, vector<1x2x32x16xf32>
    %74 = vector.shape_cast %73 : vector<1x2x32x16xf32> to vector<2x32x16xf32>
    %c0_52 = arith.constant 0 : index
    %c0_53 = arith.constant 0 : index
    %c0_54 = arith.constant 0 : index
    %75 = vector.load %arg12[%c0_52, %c0_53, %c0_54] : memref<2x32x32xf32, #tpu.memory_space<vmem>>, vector<1x32x32xf32>
    %76 = vector.shape_cast %75 : vector<1x32x32xf32> to vector<32x32xf32>
    %77 = vector.shape_cast %68 : vector<8x32xf32> to vector<1x8x32xf32>
    %78 = vector.shape_cast %77 : vector<1x8x32xf32> to vector<1x8x32xf32>
    %79 = vector.broadcast %78 : vector<1x8x32xf32> to vector<2x8x32xf32>
    %80 = vector.shape_cast %3 : vector<10x32xf32> to vector<1x10x32xf32>
    %81 = vector.shape_cast %80 : vector<1x10x32xf32> to vector<1x10x32xf32>
    %82 = vector.broadcast %81 : vector<1x10x32xf32> to vector<2x10x32xf32>
    %cst_55 = arith.constant dense<0.000000e+00> : vector<2x8x16xf32>
    %83 = tpu.matmul %79, %70, %cst_55 {dimension_numbers = #tpu.dot_dimension_numbers<[2], [1], [1], [2], [0, 0, 0, 1, 1, 2], [0], [0]>} : vector<2x8x32xf32>, vector<2x32x16xf32>, vector<2x8x16xf32> -> vector<2x8x16xf32>
    %cst_56 = arith.constant dense<0.000000e+00> : vector<2x10x16xf32>
    %84 = tpu.matmul %82, %72, %cst_56 {dimension_numbers = #tpu.dot_dimension_numbers<[2], [1], [1], [2], [0, 0, 0, 1, 1, 2], [0], [0]>} : vector<2x10x32xf32>, vector<2x32x16xf32>, vector<2x10x16xf32> -> vector<2x10x16xf32>
    %cst_57 = arith.constant dense<0.000000e+00> : vector<2x10x16xf32>
    %85 = tpu.matmul %82, %74, %cst_57 {dimension_numbers = #tpu.dot_dimension_numbers<[2], [1], [1], [2], [0, 0, 0, 1, 1, 2], [0], [0]>} : vector<2x10x32xf32>, vector<2x32x16xf32>, vector<2x10x16xf32> -> vector<2x10x16xf32>
    %cst_58 = arith.constant dense<0.000000e+00> : vector<2x8x10xf32>
    %86 = tpu.matmul %83, %84, %cst_58 {dimension_numbers = #tpu.dot_dimension_numbers<[2], [2], [1], [1], [0, 0, 0, 1, 1, 1], [0], [0]>} : vector<2x8x16xf32>, vector<2x10x16xf32>, vector<2x8x10xf32> -> vector<2x8x10xf32>
    %87 = vector.shape_cast %7 : vector<8x10xf32> to vector<1x8x10xf32>
    %cst_59 = arith.constant 5.000000e-01 : f32
    %88 = vector.broadcast %cst_59 : f32 to vector<1x8x10xf32>
    %89 = arith.cmpf ogt, %87, %88 : vector<1x8x10xf32>
    %cst_60 = arith.constant -1.000000e+09 : f32
    %90 = vector.shape_cast %89 : vector<1x8x10xi1> to vector<1x8x10xi1>
    %91 = vector.broadcast %90 : vector<1x8x10xi1> to vector<2x8x10xi1>
    %92 = vector.broadcast %cst_60 : f32 to vector<2x8x10xf32>
    %93 = arith.select %91, %92, %86 : vector<2x8x10xi1>, vector<2x8x10xf32>
    %cst_61 = arith.constant dense<0xFF800000> : vector<2x8xf32>
    %94 = vector.multi_reduction <maximumf>, %93, %cst_61 [2] : vector<2x8x10xf32> to vector<2x8xf32>
    %95 = vector.shape_cast %94 : vector<2x8xf32> to vector<2x8x1xf32>
    %96 = vector.broadcast %95 : vector<2x8x1xf32> to vector<2x8x10xf32>
    %97 = arith.subf %93, %96 : vector<2x8x10xf32>
    %98 = math.exp %97 : vector<2x8x10xf32>
    %cst_62 = arith.constant dense<0.000000e+00> : vector<2x8xf32>
    %99 = vector.multi_reduction <add>, %98, %cst_62 [2] : vector<2x8x10xf32> to vector<2x8xf32>
    %100 = vector.shape_cast %99 : vector<2x8xf32> to vector<2x8x1xf32>
    %101 = tpu.reciprocal %100 {approx = true} : vector<2x8x1xf32> -> vector<2x8x1xf32>
    %102 = vector.broadcast %101 : vector<2x8x1xf32> to vector<2x8x10xf32>
    %103 = arith.mulf %98, %102 : vector<2x8x10xf32>
    %cst_63 = arith.constant dense<0.000000e+00> : vector<2x8x16xf32>
    %104 = tpu.matmul %103, %85, %cst_63 {dimension_numbers = #tpu.dot_dimension_numbers<[2], [1], [1], [2], [0, 0, 0, 1, 1, 2], [0], [0]>} : vector<2x8x10xf32>, vector<2x10x16xf32>, vector<2x8x16xf32> -> vector<2x8x16xf32>
    %105 = vector.extract_strided_slice %104 {offsets = [0, 0, 0], sizes = [1, 8, 16], strides = [1, 1, 1]} : vector<2x8x16xf32> to vector<1x8x16xf32>
    %106 = vector.shape_cast %105 : vector<1x8x16xf32> to vector<8x16xf32>
    %107 = vector.extract_strided_slice %104 {offsets = [1, 0, 0], sizes = [1, 8, 16], strides = [1, 1, 1]} : vector<2x8x16xf32> to vector<1x8x16xf32>
    %108 = vector.shape_cast %107 : vector<1x8x16xf32> to vector<8x16xf32>
    %109 = tpu.concatenate %106, %108 in 1 : vector<8x16xf32>, vector<8x16xf32> -> vector<8x32xf32>
    %cst_64 = arith.constant dense<0.000000e+00> : vector<8x32xf32>
    %110 = tpu.matmul %109, %76, %cst_64 {dimension_numbers = #tpu.dot_dimension_numbers<[1], [0], [0], [1], [0, 0, 1, 1], [], []>} : vector<8x32xf32>, vector<32x32xf32>, vector<8x32xf32> -> vector<8x32xf32>
    %111 = arith.addf %110, %68 : vector<8x32xf32>
    %cst_65 = arith.constant dense<0.000000e+00> : vector<8xf32>
    %112 = vector.multi_reduction <add>, %111, %cst_65 [1] : vector<8x32xf32> to vector<8xf32>
    %113 = vector.shape_cast %112 : vector<8xf32> to vector<8x1xf32>
    %cst_66 = arith.constant 3.200000e+01 : f32
    %114 = vector.broadcast %cst_66 : f32 to vector<8x1xf32>
    %115 = arith.divf %113, %114 : vector<8x1xf32>
    %116 = arith.mulf %111, %111 : vector<8x32xf32>
    %cst_67 = arith.constant dense<0.000000e+00> : vector<8xf32>
    %117 = vector.multi_reduction <add>, %116, %cst_67 [1] : vector<8x32xf32> to vector<8xf32>
    %118 = vector.shape_cast %117 : vector<8xf32> to vector<8x1xf32>
    %cst_68 = arith.constant 3.200000e+01 : f32
    %119 = vector.broadcast %cst_68 : f32 to vector<8x1xf32>
    %120 = arith.divf %118, %119 : vector<8x1xf32>
    %121 = arith.mulf %115, %115 : vector<8x1xf32>
    %122 = arith.subf %120, %121 : vector<8x1xf32>
    %123 = vector.broadcast %115 : vector<8x1xf32> to vector<8x32xf32>
    %124 = arith.subf %111, %123 : vector<8x32xf32>
    %cst_69 = arith.constant 9.99999974E-6 : f32
    %125 = vector.broadcast %cst_69 : f32 to vector<8x1xf32>
    %126 = arith.addf %122, %125 : vector<8x1xf32>
    %127 = math.rsqrt %126 : vector<8x1xf32>
    %128 = vector.broadcast %127 : vector<8x1xf32> to vector<8x32xf32>
    %129 = arith.mulf %124, %128 : vector<8x32xf32>
    %130 = vector.extract_strided_slice %42 {offsets = [0, 0, 0], sizes = [1, 8, 8], strides = [1, 1, 1]} : vector<2x8x8xf32> to vector<1x8x8xf32>
    %131 = vector.shape_cast %130 : vector<1x8x8xf32> to vector<8x8xf32>
    %c0_70 = arith.constant 0 : index
    %c0_71 = arith.constant 0 : index
    %c0_72 = arith.constant 0 : index
    %c0_73 = arith.constant 0 : index
    %132 = vector.load %arg16[%c0_70, %c0_71, %c0_72, %c0_73] : memref<1x4x8x8xf32, #tpu.memory_space<vmem>>, vector<1x1x8x8xf32>
    %133 = vector.shape_cast %132 : vector<1x1x8x8xf32> to vector<8x8xf32>
    %134 = vector.shape_cast %131 : vector<8x8xf32> to vector<1x1x8x8xf32>
    tpu.vector_store %arg16[%c0_70, %c0_71, %c0_72, %c0_73], %134 {strides = array<i32>} : memref<1x4x8x8xf32, #tpu.memory_space<vmem>>, vector<1x1x8x8xf32>,
    %135 = vector.extract_strided_slice %103 {offsets = [0, 0, 0], sizes = [1, 8, 10], strides = [1, 1, 1]} : vector<2x8x10xf32> to vector<1x8x10xf32>
    %136 = vector.shape_cast %135 : vector<1x8x10xf32> to vector<8x10xf32>
    %c0_74 = arith.constant 0 : index
    %c0_75 = arith.constant 0 : index
    %c0_76 = arith.constant 0 : index
    %c0_77 = arith.constant 0 : index
    %137 = vector.load %arg17[%c0_74, %c0_75, %c0_76, %c0_77] : memref<1x4x8x10xf32, #tpu.memory_space<vmem>>, vector<1x1x8x10xf32>
    %138 = vector.shape_cast %137 : vector<1x1x8x10xf32> to vector<8x10xf32>
    %139 = vector.shape_cast %136 : vector<8x10xf32> to vector<1x1x8x10xf32>
    tpu.vector_store %arg17[%c0_74, %c0_75, %c0_76, %c0_77], %139 {strides = array<i32>} : memref<1x4x8x10xf32, #tpu.memory_space<vmem>>, vector<1x1x8x10xf32>,
    %140 = vector.extract_strided_slice %42 {offsets = [1, 0, 0], sizes = [1, 8, 8], strides = [1, 1, 1]} : vector<2x8x8xf32> to vector<1x8x8xf32>
    %141 = vector.shape_cast %140 : vector<1x8x8xf32> to vector<8x8xf32>
    %c0_78 = arith.constant 0 : index
    %c1 = arith.constant 1 : index
    %c0_79 = arith.constant 0 : index
    %c0_80 = arith.constant 0 : index
    %142 = vector.load %arg16[%c0_78, %c1, %c0_79, %c0_80] : memref<1x4x8x8xf32, #tpu.memory_space<vmem>>, vector<1x1x8x8xf32>
    %143 = vector.shape_cast %142 : vector<1x1x8x8xf32> to vector<8x8xf32>
    %144 = vector.shape_cast %141 : vector<8x8xf32> to vector<1x1x8x8xf32>
    tpu.vector_store %arg16[%c0_78, %c1, %c0_79, %c0_80], %144 {strides = array<i32>} : memref<1x4x8x8xf32, #tpu.memory_space<vmem>>, vector<1x1x8x8xf32>,
    %145 = vector.extract_strided_slice %103 {offsets = [1, 0, 0], sizes = [1, 8, 10], strides = [1, 1, 1]} : vector<2x8x10xf32> to vector<1x8x10xf32>
    %146 = vector.shape_cast %145 : vector<1x8x10xf32> to vector<8x10xf32>
    %c0_81 = arith.constant 0 : index
    %c1_82 = arith.constant 1 : index
    %c0_83 = arith.constant 0 : index
    %c0_84 = arith.constant 0 : index
    %147 = vector.load %arg17[%c0_81, %c1_82, %c0_83, %c0_84] : memref<1x4x8x10xf32, #tpu.memory_space<vmem>>, vector<1x1x8x10xf32>
    %148 = vector.shape_cast %147 : vector<1x1x8x10xf32> to vector<8x10xf32>
    %149 = vector.shape_cast %146 : vector<8x10xf32> to vector<1x1x8x10xf32>
    tpu.vector_store %arg17[%c0_81, %c1_82, %c0_83, %c0_84], %149 {strides = array<i32>} : memref<1x4x8x10xf32, #tpu.memory_space<vmem>>, vector<1x1x8x10xf32>,
    %c0_85 = arith.constant 0 : index
    %c0_86 = arith.constant 0 : index
    %c0_87 = arith.constant 0 : index
    %150 = vector.load %arg13[%c0_85, %c0_86, %c0_87] : memref<2x32x64xf32, #tpu.memory_space<vmem>>, vector<1x32x64xf32>
    %151 = vector.shape_cast %150 : vector<1x32x64xf32> to vector<32x64xf32>
    %cst_88 = arith.constant dense<0.000000e+00> : vector<8x64xf32>
    %152 = tpu.matmul %129, %151, %cst_88 {dimension_numbers = #tpu.dot_dimension_numbers<[1], [0], [0], [1], [0, 0, 1, 1], [], []>} : vector<8x32xf32>, vector<32x64xf32>, vector<8x64xf32> -> vector<8x64xf32>
    %cst_89 = arith.constant 0.000000e+00 : f32
    %153 = vector.broadcast %cst_89 : f32 to vector<8x64xf32>
    %154 = arith.maximumf %152, %153 : vector<8x64xf32>
    %c0_90 = arith.constant 0 : index
    %c0_91 = arith.constant 0 : index
    %c0_92 = arith.constant 0 : index
    %155 = vector.load %arg14[%c0_90, %c0_91, %c0_92] : memref<2x64x32xf32, #tpu.memory_space<vmem>>, vector<1x64x32xf32>
    %156 = vector.shape_cast %155 : vector<1x64x32xf32> to vector<64x32xf32>
    %cst_93 = arith.constant dense<0.000000e+00> : vector<8x32xf32>
    %157 = tpu.matmul %154, %156, %cst_93 {dimension_numbers = #tpu.dot_dimension_numbers<[1], [0], [0], [1], [0, 0, 1, 1], [], []>} : vector<8x64xf32>, vector<64x32xf32>, vector<8x32xf32> -> vector<8x32xf32>
    %158 = arith.addf %157, %129 : vector<8x32xf32>
    %cst_94 = arith.constant dense<0.000000e+00> : vector<8xf32>
    %159 = vector.multi_reduction <add>, %158, %cst_94 [1] : vector<8x32xf32> to vector<8xf32>
    %160 = vector.shape_cast %159 : vector<8xf32> to vector<8x1xf32>
    %cst_95 = arith.constant 3.200000e+01 : f32
    %161 = vector.broadcast %cst_95 : f32 to vector<8x1xf32>
    %162 = arith.divf %160, %161 : vector<8x1xf32>
    %163 = arith.mulf %158, %158 : vector<8x32xf32>
    %cst_96 = arith.constant dense<0.000000e+00> : vector<8xf32>
    %164 = vector.multi_reduction <add>, %163, %cst_96 [1] : vector<8x32xf32> to vector<8xf32>
    %165 = vector.shape_cast %164 : vector<8xf32> to vector<8x1xf32>
    %cst_97 = arith.constant 3.200000e+01 : f32
    %166 = vector.broadcast %cst_97 : f32 to vector<8x1xf32>
    %167 = arith.divf %165, %166 : vector<8x1xf32>
    %168 = arith.mulf %162, %162 : vector<8x1xf32>
    %169 = arith.subf %167, %168 : vector<8x1xf32>
    %170 = vector.broadcast %162 : vector<8x1xf32> to vector<8x32xf32>
    %171 = arith.subf %158, %170 : vector<8x32xf32>
    %cst_98 = arith.constant 9.99999974E-6 : f32
    %172 = vector.broadcast %cst_98 : f32 to vector<8x1xf32>
    %173 = arith.addf %169, %172 : vector<8x1xf32>
    %174 = math.rsqrt %173 : vector<8x1xf32>
    %175 = vector.broadcast %174 : vector<8x1xf32> to vector<8x32xf32>
    %176 = arith.mulf %171, %175 : vector<8x32xf32>
    %c1_99 = arith.constant 1 : index
    %c0_100 = arith.constant 0 : index
    %c0_101 = arith.constant 0 : index
    %c0_102 = arith.constant 0 : index
    %177 = vector.load %arg5[%c1_99, %c0_100, %c0_101, %c0_102] : memref<2x2x32x16xf32, #tpu.memory_space<vmem>>, vector<1x2x32x16xf32>
    %178 = vector.shape_cast %177 : vector<1x2x32x16xf32> to vector<2x32x16xf32>
    %c1_103 = arith.constant 1 : index
    %c0_104 = arith.constant 0 : index
    %c0_105 = arith.constant 0 : index
    %c0_106 = arith.constant 0 : index
    %179 = vector.load %arg6[%c1_103, %c0_104, %c0_105, %c0_106] : memref<2x2x32x16xf32, #tpu.memory_space<vmem>>, vector<1x2x32x16xf32>
    %180 = vector.shape_cast %179 : vector<1x2x32x16xf32> to vector<2x32x16xf32>
    %c1_107 = arith.constant 1 : index
    %c0_108 = arith.constant 0 : index
    %c0_109 = arith.constant 0 : index
    %c0_110 = arith.constant 0 : index
    %181 = vector.load %arg7[%c1_107, %c0_108, %c0_109, %c0_110] : memref<2x2x32x16xf32, #tpu.memory_space<vmem>>, vector<1x2x32x16xf32>
    %182 = vector.shape_cast %181 : vector<1x2x32x16xf32> to vector<2x32x16xf32>
    %c1_111 = arith.constant 1 : index
    %c0_112 = arith.constant 0 : index
    %c0_113 = arith.constant 0 : index
    %183 = vector.load %arg8[%c1_111, %c0_112, %c0_113] : memref<2x32x32xf32, #tpu.memory_space<vmem>>, vector<1x32x32xf32>
    %184 = vector.shape_cast %183 : vector<1x32x32xf32> to vector<32x32xf32>
    %185 = vector.shape_cast %176 : vector<8x32xf32> to vector<1x8x32xf32>
    %186 = vector.shape_cast %185 : vector<1x8x32xf32> to vector<1x8x32xf32>
    %187 = vector.broadcast %186 : vector<1x8x32xf32> to vector<2x8x32xf32>
    %188 = vector.shape_cast %176 : vector<8x32xf32> to vector<1x8x32xf32>
    %189 = vector.shape_cast %188 : vector<1x8x32xf32> to vector<1x8x32xf32>
    %190 = vector.broadcast %189 : vector<1x8x32xf32> to vector<2x8x32xf32>
    %cst_114 = arith.constant dense<0.000000e+00> : vector<2x8x16xf32>
    %191 = tpu.matmul %187, %178, %cst_114 {dimension_numbers = #tpu.dot_dimension_numbers<[2], [1], [1], [2], [0, 0, 0, 1, 1, 2], [0], [0]>} : vector<2x8x32xf32>, vector<2x32x16xf32>, vector<2x8x16xf32> -> vector<2x8x16xf32>
    %cst_115 = arith.constant dense<0.000000e+00> : vector<2x8x16xf32>
    %192 = tpu.matmul %190, %180, %cst_115 {dimension_numbers = #tpu.dot_dimension_numbers<[2], [1], [1], [2], [0, 0, 0, 1, 1, 2], [0], [0]>} : vector<2x8x32xf32>, vector<2x32x16xf32>, vector<2x8x16xf32> -> vector<2x8x16xf32>
    %cst_116 = arith.constant dense<0.000000e+00> : vector<2x8x16xf32>
    %193 = tpu.matmul %190, %182, %cst_116 {dimension_numbers = #tpu.dot_dimension_numbers<[2], [1], [1], [2], [0, 0, 0, 1, 1, 2], [0], [0]>} : vector<2x8x32xf32>, vector<2x32x16xf32>, vector<2x8x16xf32> -> vector<2x8x16xf32>
    %cst_117 = arith.constant dense<0.000000e+00> : vector<2x8x8xf32>
    %194 = tpu.matmul %191, %192, %cst_117 {dimension_numbers = #tpu.dot_dimension_numbers<[2], [2], [1], [1], [0, 0, 0, 1, 1, 1], [0], [0]>} : vector<2x8x16xf32>, vector<2x8x16xf32>, vector<2x8x8xf32> -> vector<2x8x8xf32>
    %195 = vector.shape_cast %5 : vector<8x8xf32> to vector<1x8x8xf32>
    %cst_118 = arith.constant 5.000000e-01 : f32
    %196 = vector.broadcast %cst_118 : f32 to vector<1x8x8xf32>
    %197 = arith.cmpf ogt, %195, %196 : vector<1x8x8xf32>
    %cst_119 = arith.constant -1.000000e+09 : f32
    %198 = vector.shape_cast %197 : vector<1x8x8xi1> to vector<1x8x8xi1>
    %199 = vector.broadcast %198 : vector<1x8x8xi1> to vector<2x8x8xi1>
    %200 = vector.broadcast %cst_119 : f32 to vector<2x8x8xf32>
    %201 = arith.select %199, %200, %194 : vector<2x8x8xi1>, vector<2x8x8xf32>
    %cst_120 = arith.constant dense<0xFF800000> : vector<2x8xf32>
    %202 = vector.multi_reduction <maximumf>, %201, %cst_120 [2] : vector<2x8x8xf32> to vector<2x8xf32>
    %203 = vector.shape_cast %202 : vector<2x8xf32> to vector<2x8x1xf32>
    %204 = vector.broadcast %203 : vector<2x8x1xf32> to vector<2x8x8xf32>
    %205 = arith.subf %201, %204 : vector<2x8x8xf32>
    %206 = math.exp %205 : vector<2x8x8xf32>
    %cst_121 = arith.constant dense<0.000000e+00> : vector<2x8xf32>
    %207 = vector.multi_reduction <add>, %206, %cst_121 [2] : vector<2x8x8xf32> to vector<2x8xf32>
    %208 = vector.shape_cast %207 : vector<2x8xf32> to vector<2x8x1xf32>
    %209 = tpu.reciprocal %208 {approx = true} : vector<2x8x1xf32> -> vector<2x8x1xf32>
    %210 = vector.broadcast %209 : vector<2x8x1xf32> to vector<2x8x8xf32>
    %211 = arith.mulf %206, %210 : vector<2x8x8xf32>
    %cst_122 = arith.constant dense<0.000000e+00> : vector<2x8x16xf32>
    %212 = tpu.matmul %211, %193, %cst_122 {dimension_numbers = #tpu.dot_dimension_numbers<[2], [1], [1], [2], [0, 0, 0, 1, 1, 2], [0], [0]>} : vector<2x8x8xf32>, vector<2x8x16xf32>, vector<2x8x16xf32> -> vector<2x8x16xf32>
    %213 = vector.extract_strided_slice %212 {offsets = [0, 0, 0], sizes = [1, 8, 16], strides = [1, 1, 1]} : vector<2x8x16xf32> to vector<1x8x16xf32>
    %214 = vector.shape_cast %213 : vector<1x8x16xf32> to vector<8x16xf32>
    %215 = vector.extract_strided_slice %212 {offsets = [1, 0, 0], sizes = [1, 8, 16], strides = [1, 1, 1]} : vector<2x8x16xf32> to vector<1x8x16xf32>
    %216 = vector.shape_cast %215 : vector<1x8x16xf32> to vector<8x16xf32>
    %217 = tpu.concatenate %214, %216 in 1 : vector<8x16xf32>, vector<8x16xf32> -> vector<8x32xf32>
    %cst_123 = arith.constant dense<0.000000e+00> : vector<8x32xf32>
    %218 = tpu.matmul %217, %184, %cst_123 {dimension_numbers = #tpu.dot_dimension_numbers<[1], [0], [0], [1], [0, 0, 1, 1], [], []>} : vector<8x32xf32>, vector<32x32xf32>, vector<8x32xf32> -> vector<8x32xf32>
    %219 = arith.addf %218, %176 : vector<8x32xf32>
    %cst_124 = arith.constant dense<0.000000e+00> : vector<8xf32>
    %220 = vector.multi_reduction <add>, %219, %cst_124 [1] : vector<8x32xf32> to vector<8xf32>
    %221 = vector.shape_cast %220 : vector<8xf32> to vector<8x1xf32>
    %cst_125 = arith.constant 3.200000e+01 : f32
    %222 = vector.broadcast %cst_125 : f32 to vector<8x1xf32>
    %223 = arith.divf %221, %222 : vector<8x1xf32>
    %224 = arith.mulf %219, %219 : vector<8x32xf32>
    %cst_126 = arith.constant dense<0.000000e+00> : vector<8xf32>
    %225 = vector.multi_reduction <add>, %224, %cst_126 [1] : vector<8x32xf32> to vector<8xf32>
    %226 = vector.shape_cast %225 : vector<8xf32> to vector<8x1xf32>
    %cst_127 = arith.constant 3.200000e+01 : f32
    %227 = vector.broadcast %cst_127 : f32 to vector<8x1xf32>
    %228 = arith.divf %226, %227 : vector<8x1xf32>
    %229 = arith.mulf %223, %223 : vector<8x1xf32>
    %230 = arith.subf %228, %229 : vector<8x1xf32>
    %231 = vector.broadcast %223 : vector<8x1xf32> to vector<8x32xf32>
    %232 = arith.subf %219, %231 : vector<8x32xf32>
    %cst_128 = arith.constant 9.99999974E-6 : f32
    %233 = vector.broadcast %cst_128 : f32 to vector<8x1xf32>
    %234 = arith.addf %230, %233 : vector<8x1xf32>
    %235 = math.rsqrt %234 : vector<8x1xf32>
    %236 = vector.broadcast %235 : vector<8x1xf32> to vector<8x32xf32>
    %237 = arith.mulf %232, %236 : vector<8x32xf32>
    %c1_129 = arith.constant 1 : index
    %c0_130 = arith.constant 0 : index
    %c0_131 = arith.constant 0 : index
    %c0_132 = arith.constant 0 : index
    %238 = vector.load %arg9[%c1_129, %c0_130, %c0_131, %c0_132] : memref<2x2x32x16xf32, #tpu.memory_space<vmem>>, vector<1x2x32x16xf32>
    %239 = vector.shape_cast %238 : vector<1x2x32x16xf32> to vector<2x32x16xf32>
    %c1_133 = arith.constant 1 : index
    %c0_134 = arith.constant 0 : index
    %c0_135 = arith.constant 0 : index
    %c0_136 = arith.constant 0 : index
    %240 = vector.load %arg10[%c1_133, %c0_134, %c0_135, %c0_136] : memref<2x2x32x16xf32, #tpu.memory_space<vmem>>, vector<1x2x32x16xf32>
    %241 = vector.shape_cast %240 : vector<1x2x32x16xf32> to vector<2x32x16xf32>
    %c1_137 = arith.constant 1 : index
    %c0_138 = arith.constant 0 : index
    %c0_139 = arith.constant 0 : index
    %c0_140 = arith.constant 0 : index
    %242 = vector.load %arg11[%c1_137, %c0_138, %c0_139, %c0_140] : memref<2x2x32x16xf32, #tpu.memory_space<vmem>>, vector<1x2x32x16xf32>
    %243 = vector.shape_cast %242 : vector<1x2x32x16xf32> to vector<2x32x16xf32>
    %c1_141 = arith.constant 1 : index
    %c0_142 = arith.constant 0 : index
    %c0_143 = arith.constant 0 : index
    %244 = vector.load %arg12[%c1_141, %c0_142, %c0_143] : memref<2x32x32xf32, #tpu.memory_space<vmem>>, vector<1x32x32xf32>
    %245 = vector.shape_cast %244 : vector<1x32x32xf32> to vector<32x32xf32>
    %246 = vector.shape_cast %237 : vector<8x32xf32> to vector<1x8x32xf32>
    %247 = vector.shape_cast %246 : vector<1x8x32xf32> to vector<1x8x32xf32>
    %248 = vector.broadcast %247 : vector<1x8x32xf32> to vector<2x8x32xf32>
    %249 = vector.shape_cast %3 : vector<10x32xf32> to vector<1x10x32xf32>
    %250 = vector.shape_cast %249 : vector<1x10x32xf32> to vector<1x10x32xf32>
    %251 = vector.broadcast %250 : vector<1x10x32xf32> to vector<2x10x32xf32>
    %cst_144 = arith.constant dense<0.000000e+00> : vector<2x8x16xf32>
    %252 = tpu.matmul %248, %239, %cst_144 {dimension_numbers = #tpu.dot_dimension_numbers<[2], [1], [1], [2], [0, 0, 0, 1, 1, 2], [0], [0]>} : vector<2x8x32xf32>, vector<2x32x16xf32>, vector<2x8x16xf32> -> vector<2x8x16xf32>
    %cst_145 = arith.constant dense<0.000000e+00> : vector<2x10x16xf32>
    %253 = tpu.matmul %251, %241, %cst_145 {dimension_numbers = #tpu.dot_dimension_numbers<[2], [1], [1], [2], [0, 0, 0, 1, 1, 2], [0], [0]>} : vector<2x10x32xf32>, vector<2x32x16xf32>, vector<2x10x16xf32> -> vector<2x10x16xf32>
    %cst_146 = arith.constant dense<0.000000e+00> : vector<2x10x16xf32>
    %254 = tpu.matmul %251, %243, %cst_146 {dimension_numbers = #tpu.dot_dimension_numbers<[2], [1], [1], [2], [0, 0, 0, 1, 1, 2], [0], [0]>} : vector<2x10x32xf32>, vector<2x32x16xf32>, vector<2x10x16xf32> -> vector<2x10x16xf32>
    %cst_147 = arith.constant dense<0.000000e+00> : vector<2x8x10xf32>
    %255 = tpu.matmul %252, %253, %cst_147 {dimension_numbers = #tpu.dot_dimension_numbers<[2], [2], [1], [1], [0, 0, 0, 1, 1, 1], [0], [0]>} : vector<2x8x16xf32>, vector<2x10x16xf32>, vector<2x8x10xf32> -> vector<2x8x10xf32>
    %256 = vector.shape_cast %7 : vector<8x10xf32> to vector<1x8x10xf32>
    %cst_148 = arith.constant 5.000000e-01 : f32
    %257 = vector.broadcast %cst_148 : f32 to vector<1x8x10xf32>
    %258 = arith.cmpf ogt, %256, %257 : vector<1x8x10xf32>
    %cst_149 = arith.constant -1.000000e+09 : f32
    %259 = vector.shape_cast %258 : vector<1x8x10xi1> to vector<1x8x10xi1>
    %260 = vector.broadcast %259 : vector<1x8x10xi1> to vector<2x8x10xi1>
    %261 = vector.broadcast %cst_149 : f32 to vector<2x8x10xf32>
    %262 = arith.select %260, %261, %255 : vector<2x8x10xi1>, vector<2x8x10xf32>
    %cst_150 = arith.constant dense<0xFF800000> : vector<2x8xf32>
    %263 = vector.multi_reduction <maximumf>, %262, %cst_150 [2] : vector<2x8x10xf32> to vector<2x8xf32>
    %264 = vector.shape_cast %263 : vector<2x8xf32> to vector<2x8x1xf32>
    %265 = vector.broadcast %264 : vector<2x8x1xf32> to vector<2x8x10xf32>
    %266 = arith.subf %262, %265 : vector<2x8x10xf32>
    %267 = math.exp %266 : vector<2x8x10xf32>
    %cst_151 = arith.constant dense<0.000000e+00> : vector<2x8xf32>
    %268 = vector.multi_reduction <add>, %267, %cst_151 [2] : vector<2x8x10xf32> to vector<2x8xf32>
    %269 = vector.shape_cast %268 : vector<2x8xf32> to vector<2x8x1xf32>
    %270 = tpu.reciprocal %269 {approx = true} : vector<2x8x1xf32> -> vector<2x8x1xf32>
    %271 = vector.broadcast %270 : vector<2x8x1xf32> to vector<2x8x10xf32>
    %272 = arith.mulf %267, %271 : vector<2x8x10xf32>
    %cst_152 = arith.constant dense<0.000000e+00> : vector<2x8x16xf32>
    %273 = tpu.matmul %272, %254, %cst_152 {dimension_numbers = #tpu.dot_dimension_numbers<[2], [1], [1], [2], [0, 0, 0, 1, 1, 2], [0], [0]>} : vector<2x8x10xf32>, vector<2x10x16xf32>, vector<2x8x16xf32> -> vector<2x8x16xf32>
    %274 = vector.extract_strided_slice %273 {offsets = [0, 0, 0], sizes = [1, 8, 16], strides = [1, 1, 1]} : vector<2x8x16xf32> to vector<1x8x16xf32>
    %275 = vector.shape_cast %274 : vector<1x8x16xf32> to vector<8x16xf32>
    %276 = vector.extract_strided_slice %273 {offsets = [1, 0, 0], sizes = [1, 8, 16], strides = [1, 1, 1]} : vector<2x8x16xf32> to vector<1x8x16xf32>
    %277 = vector.shape_cast %276 : vector<1x8x16xf32> to vector<8x16xf32>
    %278 = tpu.concatenate %275, %277 in 1 : vector<8x16xf32>, vector<8x16xf32> -> vector<8x32xf32>
    %cst_153 = arith.constant dense<0.000000e+00> : vector<8x32xf32>
    %279 = tpu.matmul %278, %245, %cst_153 {dimension_numbers = #tpu.dot_dimension_numbers<[1], [0], [0], [1], [0, 0, 1, 1], [], []>} : vector<8x32xf32>, vector<32x32xf32>, vector<8x32xf32> -> vector<8x32xf32>
    %280 = arith.addf %279, %237 : vector<8x32xf32>
    %cst_154 = arith.constant dense<0.000000e+00> : vector<8xf32>
    %281 = vector.multi_reduction <add>, %280, %cst_154 [1] : vector<8x32xf32> to vector<8xf32>
    %282 = vector.shape_cast %281 : vector<8xf32> to vector<8x1xf32>
    %cst_155 = arith.constant 3.200000e+01 : f32
    %283 = vector.broadcast %cst_155 : f32 to vector<8x1xf32>
    %284 = arith.divf %282, %283 : vector<8x1xf32>
    %285 = arith.mulf %280, %280 : vector<8x32xf32>
    %cst_156 = arith.constant dense<0.000000e+00> : vector<8xf32>
    %286 = vector.multi_reduction <add>, %285, %cst_156 [1] : vector<8x32xf32> to vector<8xf32>
    %287 = vector.shape_cast %286 : vector<8xf32> to vector<8x1xf32>
    %cst_157 = arith.constant 3.200000e+01 : f32
    %288 = vector.broadcast %cst_157 : f32 to vector<8x1xf32>
    %289 = arith.divf %287, %288 : vector<8x1xf32>
    %290 = arith.mulf %284, %284 : vector<8x1xf32>
    %291 = arith.subf %289, %290 : vector<8x1xf32>
    %292 = vector.broadcast %284 : vector<8x1xf32> to vector<8x32xf32>
    %293 = arith.subf %280, %292 : vector<8x32xf32>
    %cst_158 = arith.constant 9.99999974E-6 : f32
    %294 = vector.broadcast %cst_158 : f32 to vector<8x1xf32>
    %295 = arith.addf %291, %294 : vector<8x1xf32>
    %296 = math.rsqrt %295 : vector<8x1xf32>
    %297 = vector.broadcast %296 : vector<8x1xf32> to vector<8x32xf32>
    %298 = arith.mulf %293, %297 : vector<8x32xf32>
    %299 = vector.extract_strided_slice %211 {offsets = [0, 0, 0], sizes = [1, 8, 8], strides = [1, 1, 1]} : vector<2x8x8xf32> to vector<1x8x8xf32>
    %300 = vector.shape_cast %299 : vector<1x8x8xf32> to vector<8x8xf32>
    %c0_159 = arith.constant 0 : index
    %c2 = arith.constant 2 : index
    %c0_160 = arith.constant 0 : index
    %c0_161 = arith.constant 0 : index
    %301 = vector.load %arg16[%c0_159, %c2, %c0_160, %c0_161] : memref<1x4x8x8xf32, #tpu.memory_space<vmem>>, vector<1x1x8x8xf32>
    %302 = vector.shape_cast %301 : vector<1x1x8x8xf32> to vector<8x8xf32>
    %303 = vector.shape_cast %300 : vector<8x8xf32> to vector<1x1x8x8xf32>
    tpu.vector_store %arg16[%c0_159, %c2, %c0_160, %c0_161], %303 {strides = array<i32>} : memref<1x4x8x8xf32, #tpu.memory_space<vmem>>, vector<1x1x8x8xf32>,
    %304 = vector.extract_strided_slice %272 {offsets = [0, 0, 0], sizes = [1, 8, 10], strides = [1, 1, 1]} : vector<2x8x10xf32> to vector<1x8x10xf32>
    %305 = vector.shape_cast %304 : vector<1x8x10xf32> to vector<8x10xf32>
    %c0_162 = arith.constant 0 : index
    %c2_163 = arith.constant 2 : index
    %c0_164 = arith.constant 0 : index
    %c0_165 = arith.constant 0 : index
    %306 = vector.load %arg17[%c0_162, %c2_163, %c0_164, %c0_165] : memref<1x4x8x10xf32, #tpu.memory_space<vmem>>, vector<1x1x8x10xf32>
    %307 = vector.shape_cast %306 : vector<1x1x8x10xf32> to vector<8x10xf32>
    %308 = vector.shape_cast %305 : vector<8x10xf32> to vector<1x1x8x10xf32>
    tpu.vector_store %arg17[%c0_162, %c2_163, %c0_164, %c0_165], %308 {strides = array<i32>} : memref<1x4x8x10xf32, #tpu.memory_space<vmem>>, vector<1x1x8x10xf32>,
    %309 = vector.extract_strided_slice %211 {offsets = [1, 0, 0], sizes = [1, 8, 8], strides = [1, 1, 1]} : vector<2x8x8xf32> to vector<1x8x8xf32>
    %310 = vector.shape_cast %309 : vector<1x8x8xf32> to vector<8x8xf32>
    %c0_166 = arith.constant 0 : index
    %c3 = arith.constant 3 : index
    %c0_167 = arith.constant 0 : index
    %c0_168 = arith.constant 0 : index
    %311 = vector.load %arg16[%c0_166, %c3, %c0_167, %c0_168] : memref<1x4x8x8xf32, #tpu.memory_space<vmem>>, vector<1x1x8x8xf32>
    %312 = vector.shape_cast %311 : vector<1x1x8x8xf32> to vector<8x8xf32>
    %313 = vector.shape_cast %310 : vector<8x8xf32> to vector<1x1x8x8xf32>
    tpu.vector_store %arg16[%c0_166, %c3, %c0_167, %c0_168], %313 {strides = array<i32>} : memref<1x4x8x8xf32, #tpu.memory_space<vmem>>, vector<1x1x8x8xf32>,
    %314 = vector.extract_strided_slice %272 {offsets = [1, 0, 0], sizes = [1, 8, 10], strides = [1, 1, 1]} : vector<2x8x10xf32> to vector<1x8x10xf32>
    %315 = vector.shape_cast %314 : vector<1x8x10xf32> to vector<8x10xf32>
    %c0_169 = arith.constant 0 : index
    %c3_170 = arith.constant 3 : index
    %c0_171 = arith.constant 0 : index
    %c0_172 = arith.constant 0 : index
    %316 = vector.load %arg17[%c0_169, %c3_170, %c0_171, %c0_172] : memref<1x4x8x10xf32, #tpu.memory_space<vmem>>, vector<1x1x8x10xf32>
    %317 = vector.shape_cast %316 : vector<1x1x8x10xf32> to vector<8x10xf32>
    %318 = vector.shape_cast %315 : vector<8x10xf32> to vector<1x1x8x10xf32>
    tpu.vector_store %arg17[%c0_169, %c3_170, %c0_171, %c0_172], %318 {strides = array<i32>} : memref<1x4x8x10xf32, #tpu.memory_space<vmem>>, vector<1x1x8x10xf32>,
    %c1_173 = arith.constant 1 : index
    %c0_174 = arith.constant 0 : index
    %c0_175 = arith.constant 0 : index
    %319 = vector.load %arg13[%c1_173, %c0_174, %c0_175] : memref<2x32x64xf32, #tpu.memory_space<vmem>>, vector<1x32x64xf32>
    %320 = vector.shape_cast %319 : vector<1x32x64xf32> to vector<32x64xf32>
    %cst_176 = arith.constant dense<0.000000e+00> : vector<8x64xf32>
    %321 = tpu.matmul %298, %320, %cst_176 {dimension_numbers = #tpu.dot_dimension_numbers<[1], [0], [0], [1], [0, 0, 1, 1], [], []>} : vector<8x32xf32>, vector<32x64xf32>, vector<8x64xf32> -> vector<8x64xf32>
    %cst_177 = arith.constant 0.000000e+00 : f32
    %322 = vector.broadcast %cst_177 : f32 to vector<8x64xf32>
    %323 = arith.maximumf %321, %322 : vector<8x64xf32>
    %c1_178 = arith.constant 1 : index
    %c0_179 = arith.constant 0 : index
    %c0_180 = arith.constant 0 : index
    %324 = vector.load %arg14[%c1_178, %c0_179, %c0_180] : memref<2x64x32xf32, #tpu.memory_space<vmem>>, vector<1x64x32xf32>
    %325 = vector.shape_cast %324 : vector<1x64x32xf32> to vector<64x32xf32>
    %cst_181 = arith.constant dense<0.000000e+00> : vector<8x32xf32>
    %326 = tpu.matmul %323, %325, %cst_181 {dimension_numbers = #tpu.dot_dimension_numbers<[1], [0], [0], [1], [0, 0, 1, 1], [], []>} : vector<8x64xf32>, vector<64x32xf32>, vector<8x32xf32> -> vector<8x32xf32>
    %327 = arith.addf %326, %298 : vector<8x32xf32>
    %cst_182 = arith.constant dense<0.000000e+00> : vector<8xf32>
    %328 = vector.multi_reduction <add>, %327, %cst_182 [1] : vector<8x32xf32> to vector<8xf32>
    %329 = vector.shape_cast %328 : vector<8xf32> to vector<8x1xf32>
    %cst_183 = arith.constant 3.200000e+01 : f32
    %330 = vector.broadcast %cst_183 : f32 to vector<8x1xf32>
    %331 = arith.divf %329, %330 : vector<8x1xf32>
    %332 = arith.mulf %327, %327 : vector<8x32xf32>
    %cst_184 = arith.constant dense<0.000000e+00> : vector<8xf32>
    %333 = vector.multi_reduction <add>, %332, %cst_184 [1] : vector<8x32xf32> to vector<8xf32>
    %334 = vector.shape_cast %333 : vector<8xf32> to vector<8x1xf32>
    %cst_185 = arith.constant 3.200000e+01 : f32
    %335 = vector.broadcast %cst_185 : f32 to vector<8x1xf32>
    %336 = arith.divf %334, %335 : vector<8x1xf32>
    %337 = arith.mulf %331, %331 : vector<8x1xf32>
    %338 = arith.subf %336, %337 : vector<8x1xf32>
    %339 = vector.broadcast %331 : vector<8x1xf32> to vector<8x32xf32>
    %340 = arith.subf %327, %339 : vector<8x32xf32>
    %cst_186 = arith.constant 9.99999974E-6 : f32
    %341 = vector.broadcast %cst_186 : f32 to vector<8x1xf32>
    %342 = arith.addf %338, %341 : vector<8x1xf32>
    %343 = math.rsqrt %342 : vector<8x1xf32>
    %344 = vector.broadcast %343 : vector<8x1xf32> to vector<8x32xf32>
    %345 = arith.mulf %340, %344 : vector<8x32xf32>
    %c0_187 = arith.constant 0 : index
    %c0_188 = arith.constant 0 : index
    %c0_189 = arith.constant 0 : index
    %346 = vector.load %arg15[%c0_187, %c0_188, %c0_189] : memref<1x8x32xf32, #tpu.memory_space<vmem>>, vector<1x8x32xf32>
    %347 = vector.shape_cast %346 : vector<1x8x32xf32> to vector<8x32xf32>
    %348 = vector.shape_cast %345 : vector<8x32xf32> to vector<1x8x32xf32>
    tpu.vector_store %arg15[%c0_187, %c0_188, %c0_189], %348 {strides = array<i32>} : memref<1x8x32xf32, #tpu.memory_space<vmem>>, vector<1x8x32xf32>,
    return
  }
  func.func @transform_0(%arg0: i32) -> (i32, i32, i32) {
    %c0_i32 = arith.constant 0 : i32
    %c0_i32_0 = arith.constant 0 : i32
    %c0_i32_1 = arith.constant 0 : i32
    return %arg0, %c0_i32, %c0_i32_0 : i32, i32, i32
  }
  func.func @transform_1(%arg0: i32) -> (i32, i32, i32) {
    %c0_i32 = arith.constant 0 : i32
    %c0_i32_0 = arith.constant 0 : i32
    %c0_i32_1 = arith.constant 0 : i32
    return %arg0, %c0_i32, %c0_i32_0 : i32, i32, i32
  }
  func.func @transform_2(%arg0: i32) -> (i32, i32, i32) {
    %c0_i32 = arith.constant 0 : i32
    %c0_i32_0 = arith.constant 0 : i32
    %c0_i32_1 = arith.constant 0 : i32
    return %arg0, %c0_i32, %c0_i32_0 : i32, i32, i32
  }
  func.func @transform_3(%arg0: i32) -> (i32, i32, i32) {
    %c0_i32 = arith.constant 0 : i32
    %c0_i32_0 = arith.constant 0 : i32
    %c0_i32_1 = arith.constant 0 : i32
    return %arg0, %c0_i32, %c0_i32_0 : i32, i32, i32
  }
  func.func @transform_4(%arg0: i32) -> (i32, i32, i32, i32) {
    %c0_i32 = arith.constant 0 : i32
    %c0_i32_0 = arith.constant 0 : i32
    %c0_i32_1 = arith.constant 0 : i32
    %c0_i32_2 = arith.constant 0 : i32
    %c0_i32_3 = arith.constant 0 : i32
    return %c0_i32, %c0_i32_0, %c0_i32_1, %c0_i32_2 : i32, i32, i32, i32
  }
  func.func @transform_5(%arg0: i32) -> (i32, i32, i32, i32) {
    %c0_i32 = arith.constant 0 : i32
    %c0_i32_0 = arith.constant 0 : i32
    %c0_i32_1 = arith.constant 0 : i32
    %c0_i32_2 = arith.constant 0 : i32
    %c0_i32_3 = arith.constant 0 : i32
    return %c0_i32, %c0_i32_0, %c0_i32_1, %c0_i32_2 : i32, i32, i32, i32
  }
  func.func @transform_6(%arg0: i32) -> (i32, i32, i32, i32) {
    %c0_i32 = arith.constant 0 : i32
    %c0_i32_0 = arith.constant 0 : i32
    %c0_i32_1 = arith.constant 0 : i32
    %c0_i32_2 = arith.constant 0 : i32
    %c0_i32_3 = arith.constant 0 : i32
    return %c0_i32, %c0_i32_0, %c0_i32_1, %c0_i32_2 : i32, i32, i32, i32
  }
  func.func @transform_7(%arg0: i32) -> (i32, i32, i32) {
    %c0_i32 = arith.constant 0 : i32
    %c0_i32_0 = arith.constant 0 : i32
    %c0_i32_1 = arith.constant 0 : i32
    %c0_i32_2 = arith.constant 0 : i32
    return %c0_i32, %c0_i32_0, %c0_i32_1 : i32, i32, i32
  }
  func.func @transform_8(%arg0: i32) -> (i32, i32, i32, i32) {
    %c0_i32 = arith.constant 0 : i32
    %c0_i32_0 = arith.constant 0 : i32
    %c0_i32_1 = arith.constant 0 : i32
    %c0_i32_2 = arith.constant 0 : i32
    %c0_i32_3 = arith.constant 0 : i32
    return %c0_i32, %c0_i32_0, %c0_i32_1, %c0_i32_2 : i32, i32, i32, i32
  }
  func.func @transform_9(%arg0: i32) -> (i32, i32, i32, i32) {
    %c0_i32 = arith.constant 0 : i32
    %c0_i32_0 = arith.constant 0 : i32
    %c0_i32_1 = arith.constant 0 : i32
    %c0_i32_2 = arith.constant 0 : i32
    %c0_i32_3 = arith.constant 0 : i32
    return %c0_i32, %c0_i32_0, %c0_i32_1, %c0_i32_2 : i32, i32, i32, i32
  }
  func.func @transform_10(%arg0: i32) -> (i32, i32, i32, i32) {
    %c0_i32 = arith.constant 0 : i32
    %c0_i32_0 = arith.constant 0 : i32
    %c0_i32_1 = arith.constant 0 : i32
    %c0_i32_2 = arith.constant 0 : i32
    %c0_i32_3 = arith.constant 0 : i32
    return %c0_i32, %c0_i32_0, %c0_i32_1, %c0_i32_2 : i32, i32, i32, i32
  }
  func.func @transform_11(%arg0: i32) -> (i32, i32, i32) {
    %c0_i32 = arith.constant 0 : i32
    %c0_i32_0 = arith.constant 0 : i32
    %c0_i32_1 = arith.constant 0 : i32
    %c0_i32_2 = arith.constant 0 : i32
    return %c0_i32, %c0_i32_0, %c0_i32_1 : i32, i32, i32
  }
  func.func @transform_12(%arg0: i32) -> (i32, i32, i32) {
    %c0_i32 = arith.constant 0 : i32
    %c0_i32_0 = arith.constant 0 : i32
    %c0_i32_1 = arith.constant 0 : i32
    %c0_i32_2 = arith.constant 0 : i32
    return %c0_i32, %c0_i32_0, %c0_i32_1 : i32, i32, i32
  }
  func.func @transform_13(%arg0: i32) -> (i32, i32, i32) {
    %c0_i32 = arith.constant 0 : i32
    %c0_i32_0 = arith.constant 0 : i32
    %c0_i32_1 = arith.constant 0 : i32
    %c0_i32_2 = arith.constant 0 : i32
    return %c0_i32, %c0_i32_0, %c0_i32_1 : i32, i32, i32
  }
  func.func @transform_14(%arg0: i32) -> (i32, i32, i32) {
    %c0_i32 = arith.constant 0 : i32
    %c0_i32_0 = arith.constant 0 : i32
    %c0_i32_1 = arith.constant 0 : i32
    return %arg0, %c0_i32, %c0_i32_0 : i32, i32, i32
  }
  func.func @transform_15(%arg0: i32) -> (i32, i32, i32, i32) {
    %c0_i32 = arith.constant 0 : i32
    %c0_i32_0 = arith.constant 0 : i32
    %c0_i32_1 = arith.constant 0 : i32
    %c0_i32_2 = arith.constant 0 : i32
    return %arg0, %c0_i32, %c0_i32_0, %c0_i32_1 : i32, i32, i32, i32
  }
  func.func @transform_16(%arg0: i32) -> (i32, i32, i32, i32) {
    %c0_i32 = arith.constant 0 : i32
    %c0_i32_0 = arith.constant 0 : i32
    %c0_i32_1 = arith.constant 0 : i32
    %c0_i32_2 = arith.constant 0 : i32
    return %arg0, %c0_i32, %c0_i32_0, %c0_i32_1 : i32, i32, i32, i32
  }
}

</mosaic_0001>

<llo_original>
// kernel: tpu_custom_call.1
$region0: #{tpu_custom_call.1}
  #allocation0 [shape = 'u32[]', space=smem, size = 0x4, offset = 0x4, fixed_abs, tag = 'smem constant byte address 0x4 - core index']
  #allocation1 [shape = 'u32[144,128]{1,0:T(1,128)}', space=vmem, size = 0x12000, scoped, tag = 'internal scratch']
  %s0 = inlined_call_operand.vmem [shape: f32[2,8,32], index: 0, kind: input, shape index: {}]
  %s1 = inlined_call_operand.vmem [shape: f32[2,10,32], index: 1, kind: input, shape index: {}]
  %s2 = inlined_call_operand.vmem [shape: f32[2,8,8], index: 2, kind: input, shape index: {}]
  %s3 = inlined_call_operand.vmem [shape: f32[2,8,10], index: 3, kind: input, shape index: {}]
  %s4 = inlined_call_operand.vmem [shape: f32[2,2,32,16], index: 4, kind: input, shape index: {}]
  %s5 = inlined_call_operand.vmem [shape: f32[2,2,32,16], index: 5, kind: input, shape index: {}]
  %s6 = inlined_call_operand.vmem [shape: f32[2,2,32,16], index: 6, kind: input, shape index: {}]
  %s7 = inlined_call_operand.vmem [shape: f32[2,32,32], index: 7, kind: input, shape index: {}]
  %s8 = inlined_call_operand.vmem [shape: f32[2,2,32,16], index: 8, kind: input, shape index: {}]
  %s9 = inlined_call_operand.vmem [shape: f32[2,2,32,16], index: 9, kind: input, shape index: {}]
  %s10 = inlined_call_operand.vmem [shape: f32[2,2,32,16], index: 10, kind: input, shape index: {}]
  %s11 = inlined_call_operand.vmem [shape: f32[2,32,32], index: 11, kind: input, shape index: {}]
  %s12 = inlined_call_operand.vmem [shape: f32[2,32,64], index: 12, kind: input, shape index: {}]
  %s13 = inlined_call_operand.vmem [shape: f32[2,64,32], index: 13, kind: input, shape index: {}]
  %s14 = inlined_call_operand.hbm [shape: f32[2,8,32], index: 14, kind: output, shape index: {0}]
  %s15 = inlined_call_operand.hbm [shape: f32[2,4,8,8], index: 15, kind: output, shape index: {1}]
  %s16 = inlined_call_operand.hbm [shape: f32[2,4,8,10], index: 16, kind: output, shape index: {2}]
  %17 = xla_tuple %s14, %s15, %s16
  %s18 = sld [smem:[#allocation0]]
  $region105: #{tpu_custom_call.1} parent=0
    _
  %s20 = ssub.s32 1, %s18
  %s21 = scalar_select 0, %s20, %s18
  $region1: #{tpu_custom_call.1} parent=0
    #allocation2 [shape = 'u8[8192]{0}', space=vmem, size = 0x2000, scoped, tag = 'output window, operand 0']
    #allocation3 [shape = 's32[2]{0}', space=sflag, size = 0x8, scoped, tag = 'scoped memory for tpu_custom_call.1']
    #allocation4 [shape = 'u8[32768]{0}', space=vmem, size = 0x8000, scoped, tag = 'output window, operand 1']
    #allocation5 [shape = 's32[2]{0}', space=sflag, size = 0x8, scoped, tag = 'scoped memory for tpu_custom_call.1']
    #allocation6 [shape = 'u8[32768]{0}', space=vmem, size = 0x8000, scoped, tag = 'output window, operand 2']
    %22 = vsyncpa [#allocation3], 0
    %s23 = scalar_lea.sflag [#allocation3], 1
    %24 = vsyncpa %s23, 0
    %25 = vsyncpa [#allocation5], 0
    %s26 = scalar_lea.sflag [#allocation5], 1
    %27 = vsyncpa %s26, 0
    loop: start=0, step=1, limit=4
    $region2: #{tpu_custom_call.1} parent=1 // loop_pre_header
      _
    $region3: #{tpu_custom_call.1} parent=1 // loop_header
      %s29 = sphi 0, %s33
      %p30 = scmp.ge.s32.totalorder %s29, 4
      %s39 = sphi 0, %s41
      %s42 = sphi 0, %s39
      %s43 = sphi 0, %s42
      %s59 = sphi 0, %s43
      %s65 = sphi 0, %s67
      %s68 = sphi 0, %s65
      %s69 = sphi 0, %s68
      %s85 = sphi 0, %s69
      %s91 = sphi 0, %s93
      %s94 = sphi 0, %s91
      %s95 = sphi 0, %s94
      %s111 = sphi 0, %s95
      %s117 = sphi 0, %s119
      %s120 = sphi 0, %s117
      %s121 = sphi 0, %s120
      %s137 = sphi 0, %s121
      %s141 = sphi 0, %s141
      %s143 = sphi 0, %s141
      %s144 = sphi 0, %s143
      %s158 = sphi 0, %s144
      %s162 = sphi 0, %s162
      %s164 = sphi 0, %s162
      %s165 = sphi 0, %s164
      %s179 = sphi 0, %s165
      %s183 = sphi 0, %s183
      %s185 = sphi 0, %s183
      %s186 = sphi 0, %s185
      %s200 = sphi 0, %s186
      %s204 = sphi 0, %s204
      %s206 = sphi 0, %s204
      %s207 = sphi 0, %s206
      %s221 = sphi 0, %s207
      %s225 = sphi 0, %s225
      %s227 = sphi 0, %s225
      %s228 = sphi 0, %s227
      %s242 = sphi 0, %s228
      %s246 = sphi 0, %s246
      %s248 = sphi 0, %s246
      %s249 = sphi 0, %s248
      %s263 = sphi 0, %s249
      %s267 = sphi 0, %s267
      %s269 = sphi 0, %s267
      %s270 = sphi 0, %s269
      %s284 = sphi 0, %s270
      %s288 = sphi 0, %s288
      %s290 = sphi 0, %s288
      %s291 = sphi 0, %s290
      %s305 = sphi 0, %s291
      %s309 = sphi 0, %s309
      %s311 = sphi 0, %s309
      %s312 = sphi 0, %s311
      %s326 = sphi 0, %s312
      %s330 = sphi 0, %s330
      %s332 = sphi 0, %s330
      %s333 = sphi 0, %s332
      %s347 = sphi 0, %s333
      %s353 = sphi 0, %s355
      %s356 = sphi 0, %s353
      %s357 = sphi 0, %s356
      %s373 = sphi 0, %s357
      %s379 = sphi 0, %s381
      %s382 = sphi 0, %s379
      %s383 = sphi 0, %s382
      %s399 = sphi 0, %s383
      %s405 = sphi 0, %s407
      %s408 = sphi 0, %s405
      %s409 = sphi 0, %s408
      %s425 = sphi 0, %s409
    $region4: #{tpu_custom_call.1} parent=1 // loop_header_branch
      %32 = sbr.rel (%p30) target = $region8
    $region5: #{tpu_custom_call.1} parent=1 // loop_body
      %s34 = ssub.s32 %s29, 1
      %s35 = ssub.s32 %s29, 2
      %s36 = sadd.s32 %s29, 1
      %s37 = ssub.s32 %s29, %s36
      %p38 = scmp.eq.s32.totalorder %s37, 0
      %s40 = sadd.s32 %s39, 1
      %s41 = scalar_select %p38, %s39, %s40
      %p44 = pneg %p38
      %p45 = scmp.eq.s32.totalorder %s29, 1
      %p46 = por %p44, %p45
      %p47 = scmp.ne.s32.totalorder %s39, %s42
      %p48 = scmp.eq.s32.totalorder %s29, 0
      %p49 = por %p47, %p48
      %p50 = scmp.ne.s32.totalorder %s39, %s42
      %p51 = scmp.eq.s32.totalorder %s34, 1
      %p52 = por %p50, %p51
      %p53 = scmp.ne.s32.totalorder %s42, %s43
      %p54 = scmp.eq.s32.totalorder %s34, 0
      %p55 = por %p53, %p54
      %p56 = scmp.ne.s32.totalorder %s42, %s43
      %p57 = scmp.eq.s32.totalorder %s35, 1
      %p58 = por %p56, %p57
      %p60 = scmp.ne.s32.totalorder %s43, %s59
      %p61 = scmp.eq.s32.totalorder %s35, 0
      %p62 = por %p60, %p61
      %s63 = ssub.s32 %s29, %s36
      %p64 = scmp.eq.s32.totalorder %s63, 0
      %s66 = sadd.s32 %s65, 1
      %s67 = scalar_select %p64, %s65, %s66
      %p70 = pneg %p64
      %p71 = scmp.eq.s32.totalorder %s29, 1
      %p72 = por %p70, %p71
      %p73 = scmp.ne.s32.totalorder %s65, %s68
      %p74 = scmp.eq.s32.totalorder %s29, 0
      %p75 = por %p73, %p74
      %p76 = scmp.ne.s32.totalorder %s65, %s68
      %p77 = scmp.eq.s32.totalorder %s34, 1
      %p78 = por %p76, %p77
      %p79 = scmp.ne.s32.totalorder %s68, %s69
      %p80 = scmp.eq.s32.totalorder %s34, 0
      %p81 = por %p79, %p80
      %p82 = scmp.ne.s32.totalorder %s68, %s69
      %p83 = scmp.eq.s32.totalorder %s35, 1
      %p84 = por %p82, %p83
      %p86 = scmp.ne.s32.totalorder %s69, %s85
      %p87 = scmp.eq.s32.totalorder %s35, 0
      %p88 = por %p86, %p87
      %s89 = ssub.s32 %s29, %s36
      %p90 = scmp.eq.s32.totalorder %s89, 0
      %s92 = sadd.s32 %s91, 1
      %s93 = scalar_select %p90, %s91, %s92
      %p96 = pneg %p90
      %p97 = scmp.eq.s32.totalorder %s29, 1
      %p98 = por %p96, %p97
      %p99 = scmp.ne.s32.totalorder %s91, %s94
      %p100 = scmp.eq.s32.totalorder %s29, 0
      %p101 = por %p99, %p100
      %p102 = scmp.ne.s32.totalorder %s91, %s94
      %p103 = scmp.eq.s32.totalorder %s34, 1
      %p104 = por %p102, %p103
      %p105 = scmp.ne.s32.totalorder %s94, %s95
      %p106 = scmp.eq.s32.totalorder %s34, 0
      %p107 = por %p105, %p106
      %p108 = scmp.ne.s32.totalorder %s94, %s95
      %p109 = scmp.eq.s32.totalorder %s35, 1
      %p110 = por %p108, %p109
      %p112 = scmp.ne.s32.totalorder %s95, %s111
      %p113 = scmp.eq.s32.totalorder %s35, 0
      %p114 = por %p112, %p113
      %s115 = ssub.s32 %s29, %s36
      %p116 = scmp.eq.s32.totalorder %s115, 0
      %s118 = sadd.s32 %s117, 1
      %s119 = scalar_select %p116, %s117, %s118
      %p122 = pneg %p116
      %p123 = scmp.eq.s32.totalorder %s29, 1
      %p124 = por %p122, %p123
      %p125 = scmp.ne.s32.totalorder %s117, %s120
      %p126 = scmp.eq.s32.totalorder %s29, 0
      %p127 = por %p125, %p126
      %p128 = scmp.ne.s32.totalorder %s117, %s120
      %p129 = scmp.eq.s32.totalorder %s34, 1
      %p130 = por %p128, %p129
      %p131 = scmp.ne.s32.totalorder %s120, %s121
      %p132 = scmp.eq.s32.totalorder %s34, 0
      %p133 = por %p131, %p132
      %p134 = scmp.ne.s32.totalorder %s120, %s121
      %p135 = scmp.eq.s32.totalorder %s35, 1
      %p136 = por %p134, %p135
      %p138 = scmp.ne.s32.totalorder %s121, %s137
      %p139 = scmp.eq.s32.totalorder %s35, 0
      %p140 = por %p138, %p139
      %s142 = sadd.s32 %s141, 1
      %p145 = scmp.eq.s32.totalorder %s29, 1
      %p146 = scmp.ne.s32.totalorder %s141, %s143
      %p147 = scmp.eq.s32.totalorder %s29, 0
      %p148 = por %p146, %p147
      %p149 = scmp.ne.s32.totalorder %s141, %s143
      %p150 = scmp.eq.s32.totalorder %s34, 1
      %p151 = por %p149, %p150
      %p152 = scmp.ne.s32.totalorder %s143, %s144
      %p153 = scmp.eq.s32.totalorder %s34, 0
      %p154 = por %p152, %p153
      %p155 = scmp.ne.s32.totalorder %s143, %s144
      %p156 = scmp.eq.s32.totalorder %s35, 1
      %p157 = por %p155, %p156
      %p159 = scmp.ne.s32.totalorder %s144, %s158
      %p160 = scmp.eq.s32.totalorder %s35, 0
      %p161 = por %p159, %p160
      %s163 = sadd.s32 %s162, 1
      %p166 = scmp.eq.s32.totalorder %s29, 1
      %p167 = scmp.ne.s32.totalorder %s162, %s164
      %p168 = scmp.eq.s32.totalorder %s29, 0
      %p169 = por %p167, %p168
      %p170 = scmp.ne.s32.totalorder %s162, %s164
      %p171 = scmp.eq.s32.totalorder %s34, 1
      %p172 = por %p170, %p171
      %p173 = scmp.ne.s32.totalorder %s164, %s165
      %p174 = scmp.eq.s32.totalorder %s34, 0
      %p175 = por %p173, %p174
      %p176 = scmp.ne.s32.totalorder %s164, %s165
      %p177 = scmp.eq.s32.totalorder %s35, 1
      %p178 = por %p176, %p177
      %p180 = scmp.ne.s32.totalorder %s165, %s179
      %p181 = scmp.eq.s32.totalorder %s35, 0
      %p182 = por %p180, %p181
      %s184 = sadd.s32 %s183, 1
      %p187 = scmp.eq.s32.totalorder %s29, 1
      %p188 = scmp.ne.s32.totalorder %s183, %s185
      %p189 = scmp.eq.s32.totalorder %s29, 0
      %p190 = por %p188, %p189
      %p191 = scmp.ne.s32.totalorder %s183, %s185
      %p192 = scmp.eq.s32.totalorder %s34, 1
      %p193 = por %p191, %p192
      %p194 = scmp.ne.s32.totalorder %s185, %s186
      %p195 = scmp.eq.s32.totalorder %s34, 0
      %p196 = por %p194, %p195
      %p197 = scmp.ne.s32.totalorder %s185, %s186
      %p198 = scmp.eq.s32.totalorder %s35, 1
      %p199 = por %p197, %p198
      %p201 = scmp.ne.s32.totalorder %s186, %s200
      %p202 = scmp.eq.s32.totalorder %s35, 0
      %p203 = por %p201, %p202
      %s205 = sadd.s32 %s204, 1
      %p208 = scmp.eq.s32.totalorder %s29, 1
      %p209 = scmp.ne.s32.totalorder %s204, %s206
      %p210 = scmp.eq.s32.totalorder %s29, 0
      %p211 = por %p209, %p210
      %p212 = scmp.ne.s32.totalorder %s204, %s206
      %p213 = scmp.eq.s32.totalorder %s34, 1
      %p214 = por %p212, %p213
      %p215 = scmp.ne.s32.totalorder %s206, %s207
      %p216 = scmp.eq.s32.totalorder %s34, 0
      %p217 = por %p215, %p216
      %p218 = scmp.ne.s32.totalorder %s206, %s207
      %p219 = scmp.eq.s32.totalorder %s35, 1
      %p220 = por %p218, %p219
      %p222 = scmp.ne.s32.totalorder %s207, %s221
      %p223 = scmp.eq.s32.totalorder %s35, 0
      %p224 = por %p222, %p223
      %s226 = sadd.s32 %s225, 1
      %p229 = scmp.eq.s32.totalorder %s29, 1
      %p230 = scmp.ne.s32.totalorder %s225, %s227
      %p231 = scmp.eq.s32.totalorder %s29, 0
      %p232 = por %p230, %p231
      %p233 = scmp.ne.s32.totalorder %s225, %s227
      %p234 = scmp.eq.s32.totalorder %s34, 1
      %p235 = por %p233, %p234
      %p236 = scmp.ne.s32.totalorder %s227, %s228
      %p237 = scmp.eq.s32.totalorder %s34, 0
      %p238 = por %p236, %p237
      %p239 = scmp.ne.s32.totalorder %s227, %s228
      %p240 = scmp.eq.s32.totalorder %s35, 1
      %p241 = por %p239, %p240
      %p243 = scmp.ne.s32.totalorder %s228, %s242
      %p244 = scmp.eq.s32.totalorder %s35, 0
      %p245 = por %p243, %p244
      %s247 = sadd.s32 %s246, 1
      %p250 = scmp.eq.s32.totalorder %s29, 1
      %p251 = scmp.ne.s32.totalorder %s246, %s248
      %p252 = scmp.eq.s32.totalorder %s29, 0
      %p253 = por %p251, %p252
      %p254 = scmp.ne.s32.totalorder %s246, %s248
      %p255 = scmp.eq.s32.totalorder %s34, 1
      %p256 = por %p254, %p255
      %p257 = scmp.ne.s32.totalorder %s248, %s249
      %p258 = scmp.eq.s32.totalorder %s34, 0
      %p259 = por %p257, %p258
      %p260 = scmp.ne.s32.totalorder %s248, %s249
      %p261 = scmp.eq.s32.totalorder %s35, 1
      %p262 = por %p260, %p261
      %p264 = scmp.ne.s32.totalorder %s249, %s263
      %p265 = scmp.eq.s32.totalorder %s35, 0
      %p266 = por %p264, %p265
      %s268 = sadd.s32 %s267, 1
      %p271 = scmp.eq.s32.totalorder %s29, 1
      %p272 = scmp.ne.s32.totalorder %s267, %s269
      %p273 = scmp.eq.s32.totalorder %s29, 0
      %p274 = por %p272, %p273
      %p275 = scmp.ne.s32.totalorder %s267, %s269
      %p276 = scmp.eq.s32.totalorder %s34, 1
      %p277 = por %p275, %p276
      %p278 = scmp.ne.s32.totalorder %s269, %s270
      %p279 = scmp.eq.s32.totalorder %s34, 0
      %p280 = por %p278, %p279
      %p281 = scmp.ne.s32.totalorder %s269, %s270
      %p282 = scmp.eq.s32.totalorder %s35, 1
      %p283 = por %p281, %p282
      %p285 = scmp.ne.s32.totalorder %s270, %s284
      %p286 = scmp.eq.s32.totalorder %s35, 0
      %p287 = por %p285, %p286
      %s289 = sadd.s32 %s288, 1
      %p292 = scmp.eq.s32.totalorder %s29, 1
      %p293 = scmp.ne.s32.totalorder %s288, %s290
      %p294 = scmp.eq.s32.totalorder %s29, 0
      %p295 = por %p293, %p294
      %p296 = scmp.ne.s32.totalorder %s288, %s290
      %p297 = scmp.eq.s32.totalorder %s34, 1
      %p298 = por %p296, %p297
      %p299 = scmp.ne.s32.totalorder %s290, %s291
      %p300 = scmp.eq.s32.totalorder %s34, 0
      %p301 = por %p299, %p300
      %p302 = scmp.ne.s32.totalorder %s290, %s291
      %p303 = scmp.eq.s32.totalorder %s35, 1
      %p304 = por %p302, %p303
      %p306 = scmp.ne.s32.totalorder %s291, %s305
      %p307 = scmp.eq.s32.totalorder %s35, 0
      %p308 = por %p306, %p307
      %s310 = sadd.s32 %s309, 1
      %p313 = scmp.eq.s32.totalorder %s29, 1
      %p314 = scmp.ne.s32.totalorder %s309, %s311
      %p315 = scmp.eq.s32.totalorder %s29, 0
      %p316 = por %p314, %p315
      %p317 = scmp.ne.s32.totalorder %s309, %s311
      %p318 = scmp.eq.s32.totalorder %s34, 1
      %p319 = por %p317, %p318
      %p320 = scmp.ne.s32.totalorder %s311, %s312
      %p321 = scmp.eq.s32.totalorder %s34, 0
      %p322 = por %p320, %p321
      %p323 = scmp.ne.s32.totalorder %s311, %s312
      %p324 = scmp.eq.s32.totalorder %s35, 1
      %p325 = por %p323, %p324
      %p327 = scmp.ne.s32.totalorder %s312, %s326
      %p328 = scmp.eq.s32.totalorder %s35, 0
      %p329 = por %p327, %p328
      %s331 = sadd.s32 %s330, 1
      %p334 = scmp.eq.s32.totalorder %s29, 1
      %p335 = scmp.ne.s32.totalorder %s330, %s332
      %p336 = scmp.eq.s32.totalorder %s29, 0
      %p337 = por %p335, %p336
      %p338 = scmp.ne.s32.totalorder %s330, %s332
      %p339 = scmp.eq.s32.totalorder %s34, 1
      %p340 = por %p338, %p339
      %p341 = scmp.ne.s32.totalorder %s332, %s333
      %p342 = scmp.eq.s32.totalorder %s34, 0
      %p343 = por %p341, %p342
      %p344 = scmp.ne.s32.totalorder %s332, %s333
      %p345 = scmp.eq.s32.totalorder %s35, 1
      %p346 = por %p344, %p345
      %p348 = scmp.ne.s32.totalorder %s333, %s347
      %p349 = scmp.eq.s32.totalorder %s35, 0
      %p350 = por %p348, %p349
      %s351 = ssub.s32 %s29, %s36
      %p352 = scmp.eq.s32.totalorder %s351, 0
      %s354 = sadd.s32 %s353, 1
      %s355 = scalar_select %p352, %s353, %s354
      %p358 = pneg %p352
      %p359 = scmp.eq.s32.totalorder %s29, 1
      %p360 = por %p358, %p359
      %p361 = scmp.ne.s32.totalorder %s353, %s356
      %p362 = scmp.eq.s32.totalorder %s29, 0
      %p363 = por %p361, %p362
      %p364 = scmp.ne.s32.totalorder %s353, %s356
      %p365 = scmp.eq.s32.totalorder %s34, 1
      %p366 = por %p364, %p365
      %p367 = scmp.ne.s32.totalorder %s356, %s357
      %p368 = scmp.eq.s32.totalorder %s34, 0
      %p369 = por %p367, %p368
      %p370 = scmp.ne.s32.totalorder %s356, %s357
      %p371 = scmp.eq.s32.totalorder %s35, 1
      %p372 = por %p370, %p371
      %p374 = scmp.ne.s32.totalorder %s357, %s373
      %p375 = scmp.eq.s32.totalorder %s35, 0
      %p376 = por %p374, %p375
      %s377 = ssub.s32 %s29, %s36
      %p378 = scmp.eq.s32.totalorder %s377, 0
      %s380 = sadd.s32 %s379, 1
      %s381 = scalar_select %p378, %s379, %s380
      %p384 = pneg %p378
      %p385 = scmp.eq.s32.totalorder %s29, 1
      %p386 = por %p384, %p385
      %p387 = scmp.ne.s32.totalorder %s379, %s382
      %p388 = scmp.eq.s32.totalorder %s29, 0
      %p389 = por %p387, %p388
      %p390 = scmp.ne.s32.totalorder %s379, %s382
      %p391 = scmp.eq.s32.totalorder %s34, 1
      %p392 = por %p390, %p391
      %p393 = scmp.ne.s32.totalorder %s382, %s383
      %p394 = scmp.eq.s32.totalorder %s34, 0
      %p395 = por %p393, %p394
      %p396 = scmp.ne.s32.totalorder %s382, %s383
      %p397 = scmp.eq.s32.totalorder %s35, 1
      %p398 = por %p396, %p397
      %p400 = scmp.ne.s32.totalorder %s383, %s399
      %p401 = scmp.eq.s32.totalorder %s35, 0
      %p402 = por %p400, %p401
      %s403 = ssub.s32 %s29, %s36
      %p404 = scmp.eq.s32.totalorder %s403, 0
      %s406 = sadd.s32 %s405, 1
      %s407 = scalar_select %p404, %s405, %s406
      %p410 = pneg %p404
      %p411 = scmp.eq.s32.totalorder %s29, 1
      %p412 = por %p410, %p411
      %p413 = scmp.ne.s32.totalorder %s405, %s408
      %p414 = scmp.eq.s32.totalorder %s29, 0
      %p415 = por %p413, %p414
      %p416 = scmp.ne.s32.totalorder %s405, %s408
      %p417 = scmp.eq.s32.totalorder %s34, 1
      %p418 = por %p416, %p417
      %p419 = scmp.ne.s32.totalorder %s408, %s409
      %p420 = scmp.eq.s32.totalorder %s34, 0
      %p421 = por %p419, %p420
      %p422 = scmp.ne.s32.totalorder %s408, %s409
      %p423 = scmp.eq.s32.totalorder %s35, 1
      %p424 = por %p422, %p423
      %p426 = scmp.ne.s32.totalorder %s409, %s425
      %p427 = scmp.eq.s32.totalorder %s35, 0
      %p428 = por %p426, %p427
      %p429 = scmp.le.s32.totalorder 1, %s29
      %p430 = scmp.lt.s32.totalorder %s29, 3
      %p431 = pnand %p429, %p430
      %p432 = pneg %p431
      // Predicated region
      $region9: #{tpu_custom_call.1} parent=5 // pred_check
        _
      $region10: #{tpu_custom_call.1} parent=5 // pred_check_branch
        %434 = sbr.rel (%p431) target = $region12
      $region11: #{tpu_custom_call.1} parent=5 // pred_region
        %s435 = ssub.s32 %s29, 1
        // Predicated region
        $region13: #{tpu_custom_call.1} parent=11 // pred_check
          %p436 = pneg %p154
        $region14: #{tpu_custom_call.1} parent=11 // pred_check_branch
          %438 = sbr.rel (%p436) target = $region16
        $region15: #{tpu_custom_call.1} parent=11 // pred_region
          _
        $region16: #{tpu_custom_call.1} parent=11 // pred_fallthru
          _
        // Predicated region
        $region17: #{tpu_custom_call.1} parent=11 // pred_check
          %p439 = pneg %p175
        $region18: #{tpu_custom_call.1} parent=11 // pred_check_branch
          %441 = sbr.rel (%p439) target = $region20
        $region19: #{tpu_custom_call.1} parent=11 // pred_region
          _
        $region20: #{tpu_custom_call.1} parent=11 // pred_fallthru
          _
        // Predicated region
        $region21: #{tpu_custom_call.1} parent=11 // pred_check
          %p442 = pneg %p196
        $region22: #{tpu_custom_call.1} parent=11 // pred_check_branch
          %444 = sbr.rel (%p442) target = $region24
        $region23: #{tpu_custom_call.1} parent=11 // pred_region
          _
        $region24: #{tpu_custom_call.1} parent=11 // pred_fallthru
          _
        // Predicated region
        $region25: #{tpu_custom_call.1} parent=11 // pred_check
          %p445 = pneg %p217
        $region26: #{tpu_custom_call.1} parent=11 // pred_check_branch
          %447 = sbr.rel (%p445) target = $region28
        $region27: #{tpu_custom_call.1} parent=11 // pred_region
          _
        $region28: #{tpu_custom_call.1} parent=11 // pred_fallthru
          _
        // Predicated region
        $region29: #{tpu_custom_call.1} parent=11 // pred_check
          %p448 = pneg %p238
        $region30: #{tpu_custom_call.1} parent=11 // pred_check_branch
          %450 = sbr.rel (%p448) target = $region32
        $region31: #{tpu_custom_call.1} parent=11 // pred_region
          _
        $region32: #{tpu_custom_call.1} parent=11 // pred_fallthru
          _
        // Predicated region
        $region33: #{tpu_custom_call.1} parent=11 // pred_check
          %p451 = pneg %p259
        $region34: #{tpu_custom_call.1} parent=11 // pred_check_branch
          %453 = sbr.rel (%p451) target = $region36
        $region35: #{tpu_custom_call.1} parent=11 // pred_region
          _
        $region36: #{tpu_custom_call.1} parent=11 // pred_fallthru
          _
        // Predicated region
        $region37: #{tpu_custom_call.1} parent=11 // pred_check
          %p454 = pneg %p280
        $region38: #{tpu_custom_call.1} parent=11 // pred_check_branch
          %456 = sbr.rel (%p454) target = $region40
        $region39: #{tpu_custom_call.1} parent=11 // pred_region
          _
        $region40: #{tpu_custom_call.1} parent=11 // pred_fallthru
          _
        // Predicated region
        $region41: #{tpu_custom_call.1} parent=11 // pred_check
          %p457 = pneg %p301
        $region42: #{tpu_custom_call.1} parent=11 // pred_check_branch
          %459 = sbr.rel (%p457) target = $region44
        $region43: #{tpu_custom_call.1} parent=11 // pred_region
          _
        $region44: #{tpu_custom_call.1} parent=11 // pred_fallthru
          _
        // Predicated region
        $region45: #{tpu_custom_call.1} parent=11 // pred_check
          %p460 = pneg %p322
        $region46: #{tpu_custom_call.1} parent=11 // pred_check_branch
          %462 = sbr.rel (%p460) target = $region48
        $region47: #{tpu_custom_call.1} parent=11 // pred_region
          _
        $region48: #{tpu_custom_call.1} parent=11 // pred_fallthru
          _
        // Predicated region
        $region49: #{tpu_custom_call.1} parent=11 // pred_check
          %p463 = pneg %p343
        $region50: #{tpu_custom_call.1} parent=11 // pred_check_branch
          %465 = sbr.rel (%p463) target = $region52
        $region51: #{tpu_custom_call.1} parent=11 // pred_region
          _
        $region52: #{tpu_custom_call.1} parent=11 // pred_fallthru
          _
      $region12: #{tpu_custom_call.1} parent=5 // pred_fallthru
        _
      %p466 = scmp.lt.s32.totalorder %s29, 2
      // Predicated region
      $region53: #{tpu_custom_call.1} parent=5 // pred_check
        %p467 = pneg %p466
      $region54: #{tpu_custom_call.1} parent=5 // pred_check_branch
        %469 = sbr.rel (%p467) target = $region56
      $region55: #{tpu_custom_call.1} parent=5 // pred_region
        // Predicated region
        $region57: #{tpu_custom_call.1} parent=55 // pred_check
          %p470 = pneg %p49
        $region58: #{tpu_custom_call.1} parent=55 // pred_check_branch
          %472 = sbr.rel (%p470) target = $region60
        $region59: #{tpu_custom_call.1} parent=55 // pred_region
          %p473 = scmp.lt.s32.totalorder %s29, 1
          %s474 = scalar_select %p473, %s29, 1
          %s475 = smul.addr %s474, 8
          %s476 = scalar_lea.vmem %s0, %s475
        $region60: #{tpu_custom_call.1} parent=55 // pred_fallthru
          _
        // Predicated region
        $region61: #{tpu_custom_call.1} parent=55 // pred_check
          %p477 = pneg %p75
        $region62: #{tpu_custom_call.1} parent=55 // pred_check_branch
          %479 = sbr.rel (%p477) target = $region64
        $region63: #{tpu_custom_call.1} parent=55 // pred_region
          %p480 = scmp.lt.s32.totalorder %s29, 1
          %s481 = scalar_select %p480, %s29, 1
          %s482 = smul.addr %s481, 2
          %s483 = smul.addr %s482, 8
          %s484 = scalar_lea.vmem %s1, %s483
        $region64: #{tpu_custom_call.1} parent=55 // pred_fallthru
          _
        // Predicated region
        $region65: #{tpu_custom_call.1} parent=55 // pred_check
          %p485 = pneg %p101
        $region66: #{tpu_custom_call.1} parent=55 // pred_check_branch
          %487 = sbr.rel (%p485) target = $region68
        $region67: #{tpu_custom_call.1} parent=55 // pred_region
          %p488 = scmp.lt.s32.totalorder %s29, 1
          %s489 = scalar_select %p488, %s29, 1
          %s490 = smul.addr %s489, 8
          %s491 = scalar_lea.vmem %s2, %s490
        $region68: #{tpu_custom_call.1} parent=55 // pred_fallthru
          _
        // Predicated region
        $region69: #{tpu_custom_call.1} parent=55 // pred_check
          %p492 = pneg %p127
        $region70: #{tpu_custom_call.1} parent=55 // pred_check_branch
          %494 = sbr.rel (%p492) target = $region72
        $region71: #{tpu_custom_call.1} parent=55 // pred_region
          %p495 = scmp.lt.s32.totalorder %s29, 1
          %s496 = scalar_select %p495, %s29, 1
          %s497 = smul.addr %s496, 8
          %s498 = scalar_lea.vmem %s3, %s497
        $region72: #{tpu_custom_call.1} parent=55 // pred_fallthru
          _
      $region56: #{tpu_custom_call.1} parent=5 // pred_fallthru
        _
      %p499 = scmp.le.s32.totalorder 1, %s29
      %p500 = scmp.lt.s32.totalorder %s29, 3
      %p501 = pnand %p499, %p500
      %p502 = pneg %p501
      // Predicated region
      $region73: #{tpu_custom_call.1} parent=5 // pred_check
        _
      $region74: #{tpu_custom_call.1} parent=5 // pred_check_branch
        %504 = sbr.rel (%p501) target = $region76
      $region75: #{tpu_custom_call.1} parent=5 // pred_region
        %s505 = ssub.s32 %s29, 1
        %p506 = scmp.lt.s32.totalorder %s34, 1
        %s507 = scalar_select %p506, %s34, 1
        %s508 = smul.addr %s507, 8
        %s509 = scalar_lea.vmem %s0, %s508
        %p510 = pneg %p55
        %p511 = pneg %p52
        %p512 = scmp.lt.s32.totalorder %s34, 1
        %s513 = scalar_select %p512, %s34, 1
        %s514 = smul.addr %s513, 2
        %s515 = smul.addr %s514, 8
        %s516 = scalar_lea.vmem %s1, %s515
        %p517 = pneg %p81
        %p518 = pneg %p78
        %p519 = scmp.lt.s32.totalorder %s34, 1
        %s520 = scalar_select %p519, %s34, 1
        %s521 = smul.addr %s520, 8
        %s522 = scalar_lea.vmem %s2, %s521
        %p523 = pneg %p107
        %p524 = pneg %p104
        %p525 = scmp.lt.s32.totalorder %s34, 1
        %s526 = scalar_select %p525, %s34, 1
        %s527 = smul.addr %s526, 8
        %s528 = scalar_lea.vmem %s3, %s527
        %p529 = pneg %p133
        %p530 = pneg %p130
        %p531 = pneg %p154
        %p532 = pneg %p151
        %p533 = pneg %p175
        %p534 = pneg %p172
        %p535 = pneg %p196
        %p536 = pneg %p193
        %p537 = pneg %p217
        %p538 = pneg %p214
        %p539 = pneg %p238
        %p540 = pneg %p235
        %p541 = pneg %p259
        %p542 = pneg %p256
        %p543 = pneg %p280
        %p544 = pneg %p277
        %p545 = pneg %p301
        %p546 = pneg %p298
        %p547 = pneg %p322
        %p548 = pneg %p319
        %p549 = pneg %p343
        %p550 = pneg %p340
        %p551 = pneg %p369
        %p552 = pneg %p366
        %s553 = sand.u32 %s356, 1
        %s554 = scalar_lea.sflag [#allocation3], %s553
        %s555 = sand.u32 %s356, 1
        %s556 = smul.addr %s555, 8
        %s557 = scalar_lea.vmem [#allocation2], %s556
        %p558 = pneg %p395
        %p559 = pneg %p392
        %s560 = sand.u32 %s34, 1
        %s561 = scalar_lea.sflag [#allocation5], %s560
        %s562 = sand.u32 %s382, 1
        %s563 = smul.addr %s562, 32
        %s564 = scalar_lea.vmem [#allocation4], %s563
        %p565 = pneg %p421
        %p566 = pneg %p418
        %s567 = sand.u32 %s34, 1
        %s568 = scalar_lea.sflag [#allocation5], %s567
        %s569 = sand.u32 %s408, 1
        %s570 = smul.addr %s569, 32
        %s571 = scalar_lea.vmem [#allocation6], %s570
        %p572 = scmp.lt.s32.totalorder %s34, 1
        %s573 = scalar_select %p572, %s34, 1
        %s574 = smul.addr %s573, 8
        %s575 = scalar_lea.vmem %s0, %s574
        %p576 = scmp.lt.s32.totalorder %s34, 1
        %s577 = scalar_select %p576, %s34, 1
        %s578 = smul.addr %s577, 2
        %s579 = smul.addr %s578, 8
        %s580 = scalar_lea.vmem %s1, %s579
        %p581 = scmp.lt.s32.totalorder %s34, 1
        %s582 = scalar_select %p581, %s34, 1
        %s583 = smul.addr %s582, 8
        %s584 = scalar_lea.vmem %s2, %s583
        %p585 = scmp.lt.s32.totalorder %s34, 1
        %s586 = scalar_select %p585, %s34, 1
        %s587 = smul.addr %s586, 8
        %s588 = scalar_lea.vmem %s3, %s587
        %v589 = vld [vmem:[%s575] sm:$0xff]
        %v590 = vld [vmem:[%s580] sm:$0xff]
        %v591 = vld [vmem:[%s580 + $0x8] sm:$0x3]
        %v592 = vld [vmem:[%s584] sm:$0xff]
        %v593 = vld [vmem:[%s588] sm:$0xff]
        %v594 = vld [vmem:[%s4] sm:$0xff]
        %v595 = vld [vmem:[%s4 + $0x8] sm:$0xff]
        %v596 = vld [vmem:[%s4 + $0x10] sm:$0xff]
        %v597 = vld [vmem:[%s4 + $0x18] sm:$0xff]
        %v598 = vld [vmem:[%s4 + $0x20] sm:$0xff]
        %v599 = vld [vmem:[%s4 + $0x28] sm:$0xff]
        %v600 = vld [vmem:[%s4 + $0x30] sm:$0xff]
        %v601 = vld [vmem:[%s4 + $0x38] sm:$0xff]
        %v602 = vld [vmem:[%s5] sm:$0xff]
        %v603 = vld [vmem:[%s5 + $0x8] sm:$0xff]
        %v604 = vld [vmem:[%s5 + $0x10] sm:$0xff]
        %v605 = vld [vmem:[%s5 + $0x18] sm:$0xff]
        %v606 = vld [vmem:[%s5 + $0x20] sm:$0xff]
        %v607 = vld [vmem:[%s5 + $0x28] sm:$0xff]
        %v608 = vld [vmem:[%s5 + $0x30] sm:$0xff]
        %v609 = vld [vmem:[%s5 + $0x38] sm:$0xff]
        %v610 = vld [vmem:[%s6] sm:$0xff]
        %v611 = vld [vmem:[%s6 + $0x8] sm:$0xff]
        %v612 = vld [vmem:[%s6 + $0x10] sm:$0xff]
        %v613 = vld [vmem:[%s6 + $0x18] sm:$0xff]
        %v614 = vld [vmem:[%s6 + $0x20] sm:$0xff]
        %v615 = vld [vmem:[%s6 + $0x28] sm:$0xff]
        %v616 = vld [vmem:[%s6 + $0x30] sm:$0xff]
        %v617 = vld [vmem:[%s6 + $0x38] sm:$0xff]
        %v618 = vld [vmem:[%s7] sm:$0xff]
        %v619 = vld [vmem:[%s7 + $0x8] sm:$0xff]
        %v620 = vld [vmem:[%s7 + $0x10] sm:$0xff]
        %v621 = vld [vmem:[%s7 + $0x18] sm:$0xff]
        %vm622 = vcmask 261120
        %v624 = vsel %vm622, %v589, 0
        %626 = vmatprep.subr.mxu0 0.0
        %627 = vmatpush1.msra.mxu0 0.0
        %628 = vmatprep.subr.mxu0 0.0
        %629 = vmatpush1.msra.mxu0 0.0
        %630 = vmatprep.subr.mxu0 0.0
        %631 = vmatpush1.msra.mxu0 0.0
        %632 = vmatprep.subr.mxu0 0.0
        %633 = vmatpush1.msra.mxu0 0.0
        %634 = vmatprep.subr.mxu0 0.0
        %635 = vmatpush1.msra.mxu0 0.0
        %636 = vmatprep.subr.mxu0 0.0
        %637 = vmatpush1.msra.mxu0 0.0
        %638 = vmatprep.subr.mxu0 0.0
        %639 = vmatpush1.msra.mxu0 0.0
        %640 = vmatprep.subr.mxu0 0.0
        %641 = vmatpush1.msra.mxu0 0.0
        %642 = vmatprep.subr.mxu0 0.0
        %643 = vmatpush1.msra.mxu0 0.0
        %644 = vmatprep.subr.mxu0 0.0
        %645 = vmatpush1.msra.mxu0 0.0
        %646 = vmatprep.subr.mxu0 0.0
        %647 = vmatpush1.msra.mxu0 0.0
        %648 = vmatprep.subr.mxu0 0.0
        %649 = vmatpush1.msra.mxu0 0.0
        %650 = vmatprep.subr.mxu0 0.0
        %651 = vmatpush1.msra.mxu0 %v597
        %652 = vmatprep.subr.mxu0 0.0
        %653 = vmatpush1.msra.mxu0 %v596
        %654 = vmatprep.subr.mxu0 0.0
        %655 = vmatpush1.msra.mxu0 %v595
        %656 = vmatprep.subr.mxu0 0.0
        %657 = vmatpush1.msra.mxu0 %v594
        %658 = vmatprep.subr.mxu0 0.0
        %659 = vmatpush2.msra.mxu0 0.0
        %660 = vmatprep.subr.mxu0 0.0
        %661 = vmatpush2.msra.mxu0 0.0
        %662 = vmatprep.subr.mxu0 0.0
        %663 = vmatpush2.msra.mxu0 0.0
        %664 = vmatprep.subr.mxu0 0.0
        %665 = vmatpush2.msra.mxu0 0.0
        %666 = vmatprep.subr.mxu0 0.0
        %667 = vmatpush2.msra.mxu0 0.0
        %668 = vmatprep.subr.mxu0 0.0
        %669 = vmatpush2.msra.mxu0 0.0
        %670 = vmatprep.subr.mxu0 0.0
        %671 = vmatpush2.msra.mxu0 0.0
        %672 = vmatprep.subr.mxu0 0.0
        %673 = vmatpush2.msra.mxu0 0.0
        %674 = vmatprep.subr.mxu0 0.0
        %675 = vmatpush2.msra.mxu0 0.0
        %676 = vmatprep.subr.mxu0 0.0
        %677 = vmatpush2.msra.mxu0 0.0
        %678 = vmatprep.subr.mxu0 0.0
        %679 = vmatpush2.msra.mxu0 0.0
        %680 = vmatprep.subr.mxu0 0.0
        %681 = vmatpush2.msra.mxu0 0.0
        %682 = vmatprep.subr.mxu0 0.0
        %683 = vmatpush2.msra.mxu0 0.0
        %684 = vmatprep.subr.mxu0 0.0
        %685 = vmatpush2.msra.mxu0 0.0
        %686 = vmatprep.subr.mxu0 0.0
        %687 = vmatpush2.msra.mxu0 0.0
        %688 = vmatprep.subr.mxu0 0.0
        %689 = vmatpush2.msra.mxu0 0.0
        %690 = vmatprep.mubr.f32.mxu0 0.0
        %691 = vmatmul.mubr.f32.gmra.mxu0 %v624
        %v692 = vpop.f32.mrf.mxu0
        %v693 = vadd.f32 0.0, %v692
        %v694 = vpop.f32.mrf.mxu0
        %695 = vdwg.mxu0
        %696 = vmatprep.subr.mxu0 0.0
        %697 = vmatpush1.msra.mxu0 0.0
        %698 = vmatprep.subr.mxu0 0.0
        %699 = vmatpush1.msra.mxu0 0.0
        %700 = vmatprep.subr.mxu0 0.0
        %701 = vmatpush1.msra.mxu0 0.0
        %702 = vmatprep.subr.mxu0 0.0
        %703 = vmatpush1.msra.mxu0 0.0
        %704 = vmatprep.subr.mxu0 0.0
        %705 = vmatpush1.msra.mxu0 0.0
        %706 = vmatprep.subr.mxu0 0.0
        %707 = vmatpush1.msra.mxu0 0.0
        %708 = vmatprep.subr.mxu0 0.0
        %709 = vmatpush1.msra.mxu0 0.0
        %710 = vmatprep.subr.mxu0 0.0
        %711 = vmatpush1.msra.mxu0 0.0
        %712 = vmatprep.subr.mxu0 0.0
        %713 = vmatpush1.msra.mxu0 0.0
        %714 = vmatprep.subr.mxu0 0.0
        %715 = vmatpush1.msra.mxu0 0.0
        %716 = vmatprep.subr.mxu0 0.0
        %717 = vmatpush1.msra.mxu0 0.0
        %718 = vmatprep.subr.mxu0 0.0
        %719 = vmatpush1.msra.mxu0 0.0
        %720 = vmatprep.subr.mxu0 0.0
        %721 = vmatpush1.msra.mxu0 %v601
        %722 = vmatprep.subr.mxu0 0.0
        %723 = vmatpush1.msra.mxu0 %v600
        %724 = vmatprep.subr.mxu0 0.0
        %725 = vmatpush1.msra.mxu0 %v599
        %726 = vmatprep.subr.mxu0 0.0
        %727 = vmatpush1.msra.mxu0 %v598
        %728 = vmatprep.subr.mxu0 0.0
        %729 = vmatpush2.msra.mxu0 0.0
        %730 = vmatprep.subr.mxu0 0.0
        %731 = vmatpush2.msra.mxu0 0.0
        %732 = vmatprep.subr.mxu0 0.0
        %733 = vmatpush2.msra.mxu0 0.0
        %734 = vmatprep.subr.mxu0 0.0
        %735 = vmatpush2.msra.mxu0 0.0
        %736 = vmatprep.subr.mxu0 0.0
        %737 = vmatpush2.msra.mxu0 0.0
        %738 = vmatprep.subr.mxu0 0.0
        %739 = vmatpush2.msra.mxu0 0.0
        %740 = vmatprep.subr.mxu0 0.0
        %741 = vmatpush2.msra.mxu0 0.0
        %742 = vmatprep.subr.mxu0 0.0
        %743 = vmatpush2.msra.mxu0 0.0
        %744 = vmatprep.subr.mxu0 0.0
        %745 = vmatpush2.msra.mxu0 0.0
        %746 = vmatprep.subr.mxu0 0.0
        %747 = vmatpush2.msra.mxu0 0.0
        %748 = vmatprep.subr.mxu0 0.0
        %749 = vmatpush2.msra.mxu0 0.0
        %750 = vmatprep.subr.mxu0 0.0
        %751 = vmatpush2.msra.mxu0 0.0
        %752 = vmatprep.subr.mxu0 0.0
        %753 = vmatpush2.msra.mxu0 0.0
        %754 = vmatprep.subr.mxu0 0.0
        %755 = vmatpush2.msra.mxu0 0.0
        %756 = vmatprep.subr.mxu0 0.0
        %757 = vmatpush2.msra.mxu0 0.0
        %758 = vmatprep.subr.mxu0 0.0
        %759 = vmatpush2.msra.mxu0 0.0
        %760 = vmatprep.mubr.f32.mxu0 0.0
        %761 = vmatmul.mubr.f32.gmra.mxu0 %v624
        %v762 = vpop.f32.mrf.mxu0
        %v763 = vadd.f32 0.0, %v762
        %v764 = vpop.f32.mrf.mxu0
        %765 = vdwg.mxu0
        %766 = vmatprep.subr.mxu0 0.0
        %767 = vmatpush1.msra.mxu0 0.0
        %768 = vmatprep.subr.mxu0 0.0
        %769 = vmatpush1.msra.mxu0 0.0
        %770 = vmatprep.subr.mxu0 0.0
        %771 = vmatpush1.msra.mxu0 0.0
        %772 = vmatprep.subr.mxu0 0.0
        %773 = vmatpush1.msra.mxu0 0.0
        %774 = vmatprep.subr.mxu0 0.0
        %775 = vmatpush1.msra.mxu0 0.0
        %776 = vmatprep.subr.mxu0 0.0
        %777 = vmatpush1.msra.mxu0 0.0
        %778 = vmatprep.subr.mxu0 0.0
        %779 = vmatpush1.msra.mxu0 0.0
        %780 = vmatprep.subr.mxu0 0.0
        %781 = vmatpush1.msra.mxu0 0.0
        %782 = vmatprep.subr.mxu0 0.0
        %783 = vmatpush1.msra.mxu0 0.0
        %784 = vmatprep.subr.mxu0 0.0
        %785 = vmatpush1.msra.mxu0 0.0
        %786 = vmatprep.subr.mxu0 0.0
        %787 = vmatpush1.msra.mxu0 0.0
        %788 = vmatprep.subr.mxu0 0.0
        %789 = vmatpush1.msra.mxu0 0.0
        %790 = vmatprep.subr.mxu0 0.0
        %791 = vmatpush1.msra.mxu0 %v605
        %792 = vmatprep.subr.mxu0 0.0
        %793 = vmatpush1.msra.mxu0 %v604
        %794 = vmatprep.subr.mxu0 0.0
        %795 = vmatpush1.msra.mxu0 %v603
        %796 = vmatprep.subr.mxu0 0.0
        %797 = vmatpush1.msra.mxu0 %v602
        %798 = vmatprep.subr.mxu0 0.0
        %799 = vmatpush2.msra.mxu0 0.0
        %800 = vmatprep.subr.mxu0 0.0
        %801 = vmatpush2.msra.mxu0 0.0
        %802 = vmatprep.subr.mxu0 0.0
        %803 = vmatpush2.msra.mxu0 0.0
        %804 = vmatprep.subr.mxu0 0.0
        %805 = vmatpush2.msra.mxu0 0.0
        %806 = vmatprep.subr.mxu0 0.0
        %807 = vmatpush2.msra.mxu0 0.0
        %808 = vmatprep.subr.mxu0 0.0
        %809 = vmatpush2.msra.mxu0 0.0
        %810 = vmatprep.subr.mxu0 0.0
        %811 = vmatpush2.msra.mxu0 0.0
        %812 = vmatprep.subr.mxu0 0.0
        %813 = vmatpush2.msra.mxu0 0.0
        %814 = vmatprep.subr.mxu0 0.0
        %815 = vmatpush2.msra.mxu0 0.0
        %816 = vmatprep.subr.mxu0 0.0
        %817 = vmatpush2.msra.mxu0 0.0
        %818 = vmatprep.subr.mxu0 0.0
        %819 = vmatpush2.msra.mxu0 0.0
        %820 = vmatprep.subr.mxu0 0.0
        %821 = vmatpush2.msra.mxu0 0.0
        %822 = vmatprep.subr.mxu0 0.0
        %823 = vmatpush2.msra.mxu0 0.0
        %824 = vmatprep.subr.mxu0 0.0
        %825 = vmatpush2.msra.mxu0 0.0
        %826 = vmatprep.subr.mxu0 0.0
        %827 = vmatpush2.msra.mxu0 0.0
        %828 = vmatprep.subr.mxu0 0.0
        %829 = vmatpush2.msra.mxu0 0.0
        %830 = vmatprep.mubr.f32.mxu0 0.0
        %831 = vmatmul.mubr.f32.gmra.mxu0 %v624
        %v832 = vpop.f32.mrf.mxu0
        %v833 = vadd.f32 0.0, %v832
        %v834 = vpop.f32.mrf.mxu0
        %835 = vdwg.mxu0
        %836 = vmatprep.subr.mxu0 0.0
        %837 = vmatpush1.msra.mxu0 0.0
        %838 = vmatprep.subr.mxu0 0.0
        %839 = vmatpush1.msra.mxu0 0.0
        %840 = vmatprep.subr.mxu0 0.0
        %841 = vmatpush1.msra.mxu0 0.0
        %842 = vmatprep.subr.mxu0 0.0
        %843 = vmatpush1.msra.mxu0 0.0
        %844 = vmatprep.subr.mxu0 0.0
        %845 = vmatpush1.msra.mxu0 0.0
        %846 = vmatprep.subr.mxu0 0.0
        %847 = vmatpush1.msra.mxu0 0.0
        %848 = vmatprep.subr.mxu0 0.0
        %849 = vmatpush1.msra.mxu0 0.0
        %850 = vmatprep.subr.mxu0 0.0
        %851 = vmatpush1.msra.mxu0 0.0
        %852 = vmatprep.subr.mxu0 0.0
        %853 = vmatpush1.msra.mxu0 0.0
        %854 = vmatprep.subr.mxu0 0.0
        %855 = vmatpush1.msra.mxu0 0.0
        %856 = vmatprep.subr.mxu0 0.0
        %857 = vmatpush1.msra.mxu0 0.0
        %858 = vmatprep.subr.mxu0 0.0
        %859 = vmatpush1.msra.mxu0 0.0
        %860 = vmatprep.subr.mxu0 0.0
        %861 = vmatpush1.msra.mxu0 %v609
        %862 = vmatprep.subr.mxu0 0.0
        %863 = vmatpush1.msra.mxu0 %v608
        %864 = vmatprep.subr.mxu0 0.0
        %865 = vmatpush1.msra.mxu0 %v607
        %866 = vmatprep.subr.mxu0 0.0
        %867 = vmatpush1.msra.mxu0 %v606
        %868 = vmatprep.subr.mxu0 0.0
        %869 = vmatpush2.msra.mxu0 0.0
        %870 = vmatprep.subr.mxu0 0.0
        %871 = vmatpush2.msra.mxu0 0.0
        %872 = vmatprep.subr.mxu0 0.0
        %873 = vmatpush2.msra.mxu0 0.0
        %874 = vmatprep.subr.mxu0 0.0
        %875 = vmatpush2.msra.mxu0 0.0
        %876 = vmatprep.subr.mxu0 0.0
        %877 = vmatpush2.msra.mxu0 0.0
        %878 = vmatprep.subr.mxu0 0.0
        %879 = vmatpush2.msra.mxu0 0.0
        %880 = vmatprep.subr.mxu0 0.0
        %881 = vmatpush2.msra.mxu0 0.0
        %882 = vmatprep.subr.mxu0 0.0
        %883 = vmatpush2.msra.mxu0 0.0
        %884 = vmatprep.subr.mxu0 0.0
        %885 = vmatpush2.msra.mxu0 0.0
        %886 = vmatprep.subr.mxu0 0.0
        %887 = vmatpush2.msra.mxu0 0.0
        %888 = vmatprep.subr.mxu0 0.0
        %889 = vmatpush2.msra.mxu0 0.0
        %890 = vmatprep.subr.mxu0 0.0
        %891 = vmatpush2.msra.mxu0 0.0
        %892 = vmatprep.subr.mxu0 0.0
        %893 = vmatpush2.msra.mxu0 0.0
        %894 = vmatprep.subr.mxu0 0.0
        %895 = vmatpush2.msra.mxu0 0.0
        %896 = vmatprep.subr.mxu0 0.0
        %897 = vmatpush2.msra.mxu0 0.0
        %898 = vmatprep.subr.mxu0 0.0
        %899 = vmatpush2.msra.mxu0 0.0
        %900 = vmatprep.mubr.f32.mxu0 0.0
        %901 = vmatmul.mubr.f32.gmra.mxu0 %v624
        %v902 = vpop.f32.mrf.mxu0
        %v903 = vadd.f32 0.0, %v902
        %v904 = vpop.f32.mrf.mxu0
        %905 = vdwg.mxu0
        %906 = vmatprep.subr.mxu0 0.0
        %907 = vmatpush1.msra.mxu0 0.0
        %908 = vmatprep.subr.mxu0 0.0
        %909 = vmatpush1.msra.mxu0 0.0
        %910 = vmatprep.subr.mxu0 0.0
        %911 = vmatpush1.msra.mxu0 0.0
        %912 = vmatprep.subr.mxu0 0.0
        %913 = vmatpush1.msra.mxu0 0.0
        %914 = vmatprep.subr.mxu0 0.0
        %915 = vmatpush1.msra.mxu0 0.0
        %916 = vmatprep.subr.mxu0 0.0
        %917 = vmatpush1.msra.mxu0 0.0
        %918 = vmatprep.subr.mxu0 0.0
        %919 = vmatpush1.msra.mxu0 0.0
        %920 = vmatprep.subr.mxu0 0.0
        %921 = vmatpush1.msra.mxu0 0.0
        %922 = vmatprep.subr.mxu0 0.0
        %923 = vmatpush1.msra.mxu0 0.0
        %924 = vmatprep.subr.mxu0 0.0
        %925 = vmatpush1.msra.mxu0 0.0
        %926 = vmatprep.subr.mxu0 0.0
        %927 = vmatpush1.msra.mxu0 0.0
        %928 = vmatprep.subr.mxu0 0.0
        %929 = vmatpush1.msra.mxu0 0.0
        %930 = vmatprep.subr.mxu0 0.0
        %931 = vmatpush1.msra.mxu0 %v613
        %932 = vmatprep.subr.mxu0 0.0
        %933 = vmatpush1.msra.mxu0 %v612
        %934 = vmatprep.subr.mxu0 0.0
        %935 = vmatpush1.msra.mxu0 %v611
        %936 = vmatprep.subr.mxu0 0.0
        %937 = vmatpush1.msra.mxu0 %v610
        %938 = vmatprep.subr.mxu0 0.0
        %939 = vmatpush2.msra.mxu0 0.0
        %940 = vmatprep.subr.mxu0 0.0
        %941 = vmatpush2.msra.mxu0 0.0
        %942 = vmatprep.subr.mxu0 0.0
        %943 = vmatpush2.msra.mxu0 0.0
        %944 = vmatprep.subr.mxu0 0.0
        %945 = vmatpush2.msra.mxu0 0.0
        %946 = vmatprep.subr.mxu0 0.0
        %947 = vmatpush2.msra.mxu0 0.0
        %948 = vmatprep.subr.mxu0 0.0
        %949 = vmatpush2.msra.mxu0 0.0
        %950 = vmatprep.subr.mxu0 0.0
        %951 = vmatpush2.msra.mxu0 0.0
        %952 = vmatprep.subr.mxu0 0.0
        %953 = vmatpush2.msra.mxu0 0.0
        %954 = vmatprep.subr.mxu0 0.0
        %955 = vmatpush2.msra.mxu0 0.0
        %956 = vmatprep.subr.mxu0 0.0
        %957 = vmatpush2.msra.mxu0 0.0
        %958 = vmatprep.subr.mxu0 0.0
        %959 = vmatpush2.msra.mxu0 0.0
        %960 = vmatprep.subr.mxu0 0.0
        %961 = vmatpush2.msra.mxu0 0.0
        %962 = vmatprep.subr.mxu0 0.0
        %963 = vmatpush2.msra.mxu0 0.0
        %964 = vmatprep.subr.mxu0 0.0
        %965 = vmatpush2.msra.mxu0 0.0
        %966 = vmatprep.subr.mxu0 0.0
        %967 = vmatpush2.msra.mxu0 0.0
        %968 = vmatprep.subr.mxu0 0.0
        %969 = vmatpush2.msra.mxu0 0.0
        %970 = vmatprep.mubr.f32.mxu0 0.0
        %971 = vmatmul.mubr.f32.gmra.mxu0 %v624
        %v972 = vpop.f32.mrf.mxu0
        %v973 = vadd.f32 0.0, %v972
        %v974 = vpop.f32.mrf.mxu0
        %975 = vdwg.mxu0
        %976 = vmatprep.subr.mxu0 0.0
        %977 = vmatpush1.msra.mxu0 0.0
        %978 = vmatprep.subr.mxu0 0.0
        %979 = vmatpush1.msra.mxu0 0.0
        %980 = vmatprep.subr.mxu0 0.0
        %981 = vmatpush1.msra.mxu0 0.0
        %982 = vmatprep.subr.mxu0 0.0
        %983 = vmatpush1.msra.mxu0 0.0
        %984 = vmatprep.subr.mxu0 0.0
        %985 = vmatpush1.msra.mxu0 0.0
        %986 = vmatprep.subr.mxu0 0.0
        %987 = vmatpush1.msra.mxu0 0.0
        %988 = vmatprep.subr.mxu0 0.0
        %989 = vmatpush1.msra.mxu0 0.0
        %990 = vmatprep.subr.mxu0 0.0
        %991 = vmatpush1.msra.mxu0 0.0
        %992 = vmatprep.subr.mxu0 0.0
        %993 = vmatpush1.msra.mxu0 0.0
        %994 = vmatprep.subr.mxu0 0.0
        %995 = vmatpush1.msra.mxu0 0.0
        %996 = vmatprep.subr.mxu0 0.0
        %997 = vmatpush1.msra.mxu0 0.0
        %998 = vmatprep.subr.mxu0 0.0
        %999 = vmatpush1.msra.mxu0 0.0
        %1000 = vmatprep.subr.mxu0 0.0
        %1001 = vmatpush1.msra.mxu0 %v617
        %1002 = vmatprep.subr.mxu0 0.0
        %1003 = vmatpush1.msra.mxu0 %v616
        %1004 = vmatprep.subr.mxu0 0.0
        %1005 = vmatpush1.msra.mxu0 %v615
        %1006 = vmatprep.subr.mxu0 0.0
        %1007 = vmatpush1.msra.mxu0 %v614
        %1008 = vmatprep.subr.mxu0 0.0
        %1009 = vmatpush2.msra.mxu0 0.0
        %1010 = vmatprep.subr.mxu0 0.0
        %1011 = vmatpush2.msra.mxu0 0.0
        %1012 = vmatprep.subr.mxu0 0.0
        %1013 = vmatpush2.msra.mxu0 0.0
        %1014 = vmatprep.subr.mxu0 0.0
        %1015 = vmatpush2.msra.mxu0 0.0
        %1016 = vmatprep.subr.mxu0 0.0
        %1017 = vmatpush2.msra.mxu0 0.0
        %1018 = vmatprep.subr.mxu0 0.0
        %1019 = vmatpush2.msra.mxu0 0.0
        %1020 = vmatprep.subr.mxu0 0.0
        %1021 = vmatpush2.msra.mxu0 0.0
        %1022 = vmatprep.subr.mxu0 0.0
        %1023 = vmatpush2.msra.mxu0 0.0
        %1024 = vmatprep.subr.mxu0 0.0
        %1025 = vmatpush2.msra.mxu0 0.0
        %1026 = vmatprep.subr.mxu0 0.0
        %1027 = vmatpush2.msra.mxu0 0.0
        %1028 = vmatprep.subr.mxu0 0.0
        %1029 = vmatpush2.msra.mxu0 0.0
        %1030 = vmatprep.subr.mxu0 0.0
        %1031 = vmatpush2.msra.mxu0 0.0
        %1032 = vmatprep.subr.mxu0 0.0
        %1033 = vmatpush2.msra.mxu0 0.0
        %1034 = vmatprep.subr.mxu0 0.0
        %1035 = vmatpush2.msra.mxu0 0.0
        %1036 = vmatprep.subr.mxu0 0.0
        %1037 = vmatpush2.msra.mxu0 0.0
        %1038 = vmatprep.subr.mxu0 0.0
        %1039 = vmatpush2.msra.mxu0 0.0
        %1040 = vmatprep.mubr.f32.mxu0 0.0
        %1041 = vmatmul.mubr.f32.gmra.mxu0 %v624
        %v1042 = vpop.f32.mrf.mxu0
        %v1043 = vadd.f32 0.0, %v1042
        %v1044 = vpop.f32.mrf.mxu0
        %1045 = vdwg.mxu0
        %vm1046 = vcmask 130048
        %v1048 = vsel %vm1046, %v693, 0
        %v1051 = vsel %vm1046, %v833, 0
        %1053 = vmatprep.subr.mxu0 0.0
        %1054 = vmatpush1.xpose.msra.mxu0 0.0
        %1055 = vmatprep.subr.mxu0 0.0
        %1056 = vmatpush1.xpose.msra.mxu0 0.0
        %1057 = vmatprep.subr.mxu0 0.0
        %1058 = vmatpush1.xpose.msra.mxu0 0.0
        %1059 = vmatprep.subr.mxu0 0.0
        %1060 = vmatpush1.xpose.msra.mxu0 0.0
        %1061 = vmatprep.subr.mxu0 0.0
        %1062 = vmatpush1.xpose.msra.mxu0 0.0
        %1063 = vmatprep.subr.mxu0 0.0
        %1064 = vmatpush1.xpose.msra.mxu0 0.0
        %1065 = vmatprep.subr.mxu0 0.0
        %1066 = vmatpush1.xpose.msra.mxu0 0.0
        %1067 = vmatprep.subr.mxu0 0.0
        %1068 = vmatpush1.xpose.msra.mxu0 0.0
        %1069 = vmatprep.subr.mxu0 0.0
        %1070 = vmatpush1.xpose.msra.mxu0 0.0
        %1071 = vmatprep.subr.mxu0 0.0
        %1072 = vmatpush1.xpose.msra.mxu0 0.0
        %1073 = vmatprep.subr.mxu0 0.0
        %1074 = vmatpush1.xpose.msra.mxu0 0.0
        %1075 = vmatprep.subr.mxu0 0.0
        %1076 = vmatpush1.xpose.msra.mxu0 0.0
        %1077 = vmatprep.subr.mxu0 0.0
        %1078 = vmatpush1.xpose.msra.mxu0 0.0
        %1079 = vmatprep.subr.mxu0 0.0
        %1080 = vmatpush1.xpose.msra.mxu0 0.0
        %1081 = vmatprep.subr.mxu0 0.0
        %1082 = vmatpush1.xpose.msra.mxu0 0.0
        %1083 = vmatprep.subr.mxu0 0.0
        %1084 = vmatpush1.xpose.msra.mxu0 %v1051
        %1085 = vmatprep.subr.mxu0 0.0
        %1086 = vmatpush2.xpose.msra.mxu0 0.0
        %1087 = vmatprep.subr.mxu0 0.0
        %1088 = vmatpush2.xpose.msra.mxu0 0.0
        %1089 = vmatprep.subr.mxu0 0.0
        %1090 = vmatpush2.xpose.msra.mxu0 0.0
        %1091 = vmatprep.subr.mxu0 0.0
        %1092 = vmatpush2.xpose.msra.mxu0 0.0
        %1093 = vmatprep.subr.mxu0 0.0
        %1094 = vmatpush2.xpose.msra.mxu0 0.0
        %1095 = vmatprep.subr.mxu0 0.0
        %1096 = vmatpush2.xpose.msra.mxu0 0.0
        %1097 = vmatprep.subr.mxu0 0.0
        %1098 = vmatpush2.xpose.msra.mxu0 0.0
        %1099 = vmatprep.subr.mxu0 0.0
        %1100 = vmatpush2.xpose.msra.mxu0 0.0
        %1101 = vmatprep.subr.mxu0 0.0
        %1102 = vmatpush2.xpose.msra.mxu0 0.0
        %1103 = vmatprep.subr.mxu0 0.0
        %1104 = vmatpush2.xpose.msra.mxu0 0.0
        %1105 = vmatprep.subr.mxu0 0.0
        %1106 = vmatpush2.xpose.msra.mxu0 0.0
        %1107 = vmatprep.subr.mxu0 0.0
        %1108 = vmatpush2.xpose.msra.mxu0 0.0
        %1109 = vmatprep.subr.mxu0 0.0
        %1110 = vmatpush2.xpose.msra.mxu0 0.0
        %1111 = vmatprep.subr.mxu0 0.0
        %1112 = vmatpush2.xpose.msra.mxu0 0.0
        %1113 = vmatprep.subr.mxu0 0.0
        %1114 = vmatpush2.xpose.msra.mxu0 0.0
        %1115 = vmatprep.subr.mxu0 0.0
        %1116 = vmatpush2.xpose.msra.mxu0 0.0
        %1117 = vmatprep.mubr.f32.mxu0 0.0
        %1118 = vmatmul.mubr.f32.gmra.mxu0 %v1048
        %v1119 = vpop.f32.mrf.mxu0
        %v1120 = vadd.f32 0.0, %v1119
        %v1121 = vpop.f32.mrf.mxu0
        %1122 = vdwg.mxu0
        %v1124 = vsel %vm1046, %v763, 0
        %v1127 = vsel %vm1046, %v903, 0
        %1129 = vmatprep.subr.mxu0 0.0
        %1130 = vmatpush1.xpose.msra.mxu0 0.0
        %1131 = vmatprep.subr.mxu0 0.0
        %1132 = vmatpush1.xpose.msra.mxu0 0.0
        %1133 = vmatprep.subr.mxu0 0.0
        %1134 = vmatpush1.xpose.msra.mxu0 0.0
        %1135 = vmatprep.subr.mxu0 0.0
        %1136 = vmatpush1.xpose.msra.mxu0 0.0
        %1137 = vmatprep.subr.mxu0 0.0
        %1138 = vmatpush1.xpose.msra.mxu0 0.0
        %1139 = vmatprep.subr.mxu0 0.0
        %1140 = vmatpush1.xpose.msra.mxu0 0.0
        %1141 = vmatprep.subr.mxu0 0.0
        %1142 = vmatpush1.xpose.msra.mxu0 0.0
        %1143 = vmatprep.subr.mxu0 0.0
        %1144 = vmatpush1.xpose.msra.mxu0 0.0
        %1145 = vmatprep.subr.mxu0 0.0
        %1146 = vmatpush1.xpose.msra.mxu0 0.0
        %1147 = vmatprep.subr.mxu0 0.0
        %1148 = vmatpush1.xpose.msra.mxu0 0.0
        %1149 = vmatprep.subr.mxu0 0.0
        %1150 = vmatpush1.xpose.msra.mxu0 0.0
        %1151 = vmatprep.subr.mxu0 0.0
        %1152 = vmatpush1.xpose.msra.mxu0 0.0
        %1153 = vmatprep.subr.mxu0 0.0
        %1154 = vmatpush1.xpose.msra.mxu0 0.0
        %1155 = vmatprep.subr.mxu0 0.0
        %1156 = vmatpush1.xpose.msra.mxu0 0.0
        %1157 = vmatprep.subr.mxu0 0.0
        %1158 = vmatpush1.xpose.msra.mxu0 0.0
        %1159 = vmatprep.subr.mxu0 0.0
        %1160 = vmatpush1.xpose.msra.mxu0 %v1127
        %1161 = vmatprep.subr.mxu0 0.0
        %1162 = vmatpush2.xpose.msra.mxu0 0.0
        %1163 = vmatprep.subr.mxu0 0.0
        %1164 = vmatpush2.xpose.msra.mxu0 0.0
        %1165 = vmatprep.subr.mxu0 0.0
        %1166 = vmatpush2.xpose.msra.mxu0 0.0
        %1167 = vmatprep.subr.mxu0 0.0
        %1168 = vmatpush2.xpose.msra.mxu0 0.0
        %1169 = vmatprep.subr.mxu0 0.0
        %1170 = vmatpush2.xpose.msra.mxu0 0.0
        %1171 = vmatprep.subr.mxu0 0.0
        %1172 = vmatpush2.xpose.msra.mxu0 0.0
        %1173 = vmatprep.subr.mxu0 0.0
        %1174 = vmatpush2.xpose.msra.mxu0 0.0
        %1175 = vmatprep.subr.mxu0 0.0
        %1176 = vmatpush2.xpose.msra.mxu0 0.0
        %1177 = vmatprep.subr.mxu0 0.0
        %1178 = vmatpush2.xpose.msra.mxu0 0.0
        %1179 = vmatprep.subr.mxu0 0.0
        %1180 = vmatpush2.xpose.msra.mxu0 0.0
        %1181 = vmatprep.subr.mxu0 0.0
        %1182 = vmatpush2.xpose.msra.mxu0 0.0
        %1183 = vmatprep.subr.mxu0 0.0
        %1184 = vmatpush2.xpose.msra.mxu0 0.0
        %1185 = vmatprep.subr.mxu0 0.0
        %1186 = vmatpush2.xpose.msra.mxu0 0.0
        %1187 = vmatprep.subr.mxu0 0.0
        %1188 = vmatpush2.xpose.msra.mxu0 0.0
        %1189 = vmatprep.subr.mxu0 0.0
        %1190 = vmatpush2.xpose.msra.mxu0 0.0
        %1191 = vmatprep.subr.mxu0 0.0
        %1192 = vmatpush2.xpose.msra.mxu0 0.0
        %1193 = vmatprep.mubr.f32.mxu0 0.0
        %1194 = vmatmul.mubr.f32.gmra.mxu0 %v1124
        %v1195 = vpop.f32.mrf.mxu0
        %v1196 = vadd.f32 0.0, %v1195
        %v1197 = vpop.f32.mrf.mxu0
        %1198 = vdwg.mxu0
        %vm1199 = vcmp.gt.f32.partialorder %v592, 0.5
        %v1200 = vsel %vm1199, 1, 0
        %vm1201 = vcmp.eq.s32.totalorder %v1200, 1
        %v1202 = vsel %vm1201, -1e+09, %v1120
        %v1203 = vsel %vm1201, -1e+09, %v1196
        %vm1204 = vcmask 64512
        %v1205 = vsel %vm1204, %v1202, -inf
        %1206 = vmax.xlane.f32.xlu0 %v1205
        %v1207 = vpop.xlane.xlu0 %1206
        %v1208 = vsel %vm1204, %v1203, -inf
        %1209 = vmax.xlane.f32.xlu0 %v1208
        %v1210 = vpop.xlane.xlu0 %1209
        %v1211 = vsub.f32 %v1202, %v1207
        %v1212 = vsub.f32 %v1203, %v1210
        %v1213 = vmul.f32 %v1211, 1.442695
        %v1214 = vpow.pop %v1213
        %v1215 = vmul.f32 %v1212, 1.442695
        %v1216 = vpow.pop %v1215
        %v1217 = vsel %vm1204, %v1214, 0.0
        %1218 = vadd.xlane.f32.xlu0 %v1217
        %v1219 = vpop.xlane.xlu0 %1218
        %v1220 = vsel %vm1204, %v1216, 0.0
        %1221 = vadd.xlane.f32.xlu0 %v1220
        %v1222 = vpop.xlane.xlu0 %1221
        %v1223 = vrcp.pop %v1219
        %v1224 = vrcp.pop %v1222
        %v1225 = vmul.f32 %v1214, %v1223
        %v1226 = vmul.f32 %v1216, %v1224
        %v1228 = vsel %vm1204, %v1225, 0
        %1230 = vmatprep.subr.mxu0 0.0
        %1231 = vmatpush1.msra.mxu0 0.0
        %1232 = vmatprep.subr.mxu0 0.0
        %1233 = vmatpush1.msra.mxu0 0.0
        %1234 = vmatprep.subr.mxu0 0.0
        %1235 = vmatpush1.msra.mxu0 0.0
        %1236 = vmatprep.subr.mxu0 0.0
        %1237 = vmatpush1.msra.mxu0 0.0
        %1238 = vmatprep.subr.mxu0 0.0
        %1239 = vmatpush1.msra.mxu0 0.0
        %1240 = vmatprep.subr.mxu0 0.0
        %1241 = vmatpush1.msra.mxu0 0.0
        %1242 = vmatprep.subr.mxu0 0.0
        %1243 = vmatpush1.msra.mxu0 0.0
        %1244 = vmatprep.subr.mxu0 0.0
        %1245 = vmatpush1.msra.mxu0 0.0
        %1246 = vmatprep.subr.mxu0 0.0
        %1247 = vmatpush1.msra.mxu0 0.0
        %1248 = vmatprep.subr.mxu0 0.0
        %1249 = vmatpush1.msra.mxu0 0.0
        %1250 = vmatprep.subr.mxu0 0.0
        %1251 = vmatpush1.msra.mxu0 0.0
        %1252 = vmatprep.subr.mxu0 0.0
        %1253 = vmatpush1.msra.mxu0 0.0
        %1254 = vmatprep.subr.mxu0 0.0
        %1255 = vmatpush1.msra.mxu0 0.0
        %1256 = vmatprep.subr.mxu0 0.0
        %1257 = vmatpush1.msra.mxu0 0.0
        %1258 = vmatprep.subr.mxu0 0.0
        %1259 = vmatpush1.msra.mxu0 0.0
        %1260 = vmatprep.subr.mxu0 0.0
        %1261 = vmatpush1.msra.mxu0 %v973
        %1262 = vmatprep.subr.mxu0 0.0
        %1263 = vmatpush2.msra.mxu0 0.0
        %1264 = vmatprep.subr.mxu0 0.0
        %1265 = vmatpush2.msra.mxu0 0.0
        %1266 = vmatprep.subr.mxu0 0.0
        %1267 = vmatpush2.msra.mxu0 0.0
        %1268 = vmatprep.subr.mxu0 0.0
        %1269 = vmatpush2.msra.mxu0 0.0
        %1270 = vmatprep.subr.mxu0 0.0
        %1271 = vmatpush2.msra.mxu0 0.0
        %1272 = vmatprep.subr.mxu0 0.0
        %1273 = vmatpush2.msra.mxu0 0.0
        %1274 = vmatprep.subr.mxu0 0.0
        %1275 = vmatpush2.msra.mxu0 0.0
        %1276 = vmatprep.subr.mxu0 0.0
        %1277 = vmatpush2.msra.mxu0 0.0
        %1278 = vmatprep.subr.mxu0 0.0
        %1279 = vmatpush2.msra.mxu0 0.0
        %1280 = vmatprep.subr.mxu0 0.0
        %1281 = vmatpush2.msra.mxu0 0.0
        %1282 = vmatprep.subr.mxu0 0.0
        %1283 = vmatpush2.msra.mxu0 0.0
        %1284 = vmatprep.subr.mxu0 0.0
        %1285 = vmatpush2.msra.mxu0 0.0
        %1286 = vmatprep.subr.mxu0 0.0
        %1287 = vmatpush2.msra.mxu0 0.0
        %1288 = vmatprep.subr.mxu0 0.0
        %1289 = vmatpush2.msra.mxu0 0.0
        %1290 = vmatprep.subr.mxu0 0.0
        %1291 = vmatpush2.msra.mxu0 0.0
        %1292 = vmatprep.subr.mxu0 0.0
        %1293 = vmatpush2.msra.mxu0 0.0
        %1294 = vmatprep.mubr.f32.mxu0 0.0
        %1295 = vmatmul.mubr.f32.gmra.mxu0 %v1228
        %v1296 = vpop.f32.mrf.mxu0
        %v1297 = vadd.f32 0.0, %v1296
        %v1298 = vpop.f32.mrf.mxu0
        %1299 = vdwg.mxu0
        %v1301 = vsel %vm1204, %v1226, 0
        %1303 = vmatprep.subr.mxu0 0.0
        %1304 = vmatpush1.msra.mxu0 0.0
        %1305 = vmatprep.subr.mxu0 0.0
        %1306 = vmatpush1.msra.mxu0 0.0
        %1307 = vmatprep.subr.mxu0 0.0
        %1308 = vmatpush1.msra.mxu0 0.0
        %1309 = vmatprep.subr.mxu0 0.0
        %1310 = vmatpush1.msra.mxu0 0.0
        %1311 = vmatprep.subr.mxu0 0.0
        %1312 = vmatpush1.msra.mxu0 0.0
        %1313 = vmatprep.subr.mxu0 0.0
        %1314 = vmatpush1.msra.mxu0 0.0
        %1315 = vmatprep.subr.mxu0 0.0
        %1316 = vmatpush1.msra.mxu0 0.0
        %1317 = vmatprep.subr.mxu0 0.0
        %1318 = vmatpush1.msra.mxu0 0.0
        %1319 = vmatprep.subr.mxu0 0.0
        %1320 = vmatpush1.msra.mxu0 0.0
        %1321 = vmatprep.subr.mxu0 0.0
        %1322 = vmatpush1.msra.mxu0 0.0
        %1323 = vmatprep.subr.mxu0 0.0
        %1324 = vmatpush1.msra.mxu0 0.0
        %1325 = vmatprep.subr.mxu0 0.0
        %1326 = vmatpush1.msra.mxu0 0.0
        %1327 = vmatprep.subr.mxu0 0.0
        %1328 = vmatpush1.msra.mxu0 0.0
        %1329 = vmatprep.subr.mxu0 0.0
        %1330 = vmatpush1.msra.mxu0 0.0
        %1331 = vmatprep.subr.mxu0 0.0
        %1332 = vmatpush1.msra.mxu0 0.0
        %1333 = vmatprep.subr.mxu0 0.0
        %1334 = vmatpush1.msra.mxu0 %v1043
        %1335 = vmatprep.subr.mxu0 0.0
        %1336 = vmatpush2.msra.mxu0 0.0
        %1337 = vmatprep.subr.mxu0 0.0
        %1338 = vmatpush2.msra.mxu0 0.0
        %1339 = vmatprep.subr.mxu0 0.0
        %1340 = vmatpush2.msra.mxu0 0.0
        %1341 = vmatprep.subr.mxu0 0.0
        %1342 = vmatpush2.msra.mxu0 0.0
        %1343 = vmatprep.subr.mxu0 0.0
        %1344 = vmatpush2.msra.mxu0 0.0
        %1345 = vmatprep.subr.mxu0 0.0
        %1346 = vmatpush2.msra.mxu0 0.0
        %1347 = vmatprep.subr.mxu0 0.0
        %1348 = vmatpush2.msra.mxu0 0.0
        %1349 = vmatprep.subr.mxu0 0.0
        %1350 = vmatpush2.msra.mxu0 0.0
        %1351 = vmatprep.subr.mxu0 0.0
        %1352 = vmatpush2.msra.mxu0 0.0
        %1353 = vmatprep.subr.mxu0 0.0
        %1354 = vmatpush2.msra.mxu0 0.0
        %1355 = vmatprep.subr.mxu0 0.0
        %1356 = vmatpush2.msra.mxu0 0.0
        %1357 = vmatprep.subr.mxu0 0.0
        %1358 = vmatpush2.msra.mxu0 0.0
        %1359 = vmatprep.subr.mxu0 0.0
        %1360 = vmatpush2.msra.mxu0 0.0
        %1361 = vmatprep.subr.mxu0 0.0
        %1362 = vmatpush2.msra.mxu0 0.0
        %1363 = vmatprep.subr.mxu0 0.0
        %1364 = vmatpush2.msra.mxu0 0.0
        %1365 = vmatprep.subr.mxu0 0.0
        %1366 = vmatpush2.msra.mxu0 0.0
        %1367 = vmatprep.mubr.f32.mxu0 0.0
        %1368 = vmatmul.mubr.f32.gmra.mxu0 %v1301
        %v1369 = vpop.f32.mrf.mxu0
        %v1370 = vadd.f32 0.0, %v1369
        %v1371 = vpop.f32.mrf.mxu0
        %1372 = vdwg.mxu0
        %1374 = vrot.lane.b32.xlu0 %v1370, 16
        %v1375 = vpop.permute.xlu0 %1374
        %v1377 = vsel %vm1046, %v1297, %v1375
        %v1379 = vsel %vm622, %v1377, 0
        %1381 = vmatprep.subr.mxu0 0.0
        %1382 = vmatpush1.msra.mxu0 0.0
        %1383 = vmatprep.subr.mxu0 0.0
        %1384 = vmatpush1.msra.mxu0 0.0
        %1385 = vmatprep.subr.mxu0 0.0
        %1386 = vmatpush1.msra.mxu0 0.0
        %1387 = vmatprep.subr.mxu0 0.0
        %1388 = vmatpush1.msra.mxu0 0.0
        %1389 = vmatprep.subr.mxu0 0.0
        %1390 = vmatpush1.msra.mxu0 0.0
        %1391 = vmatprep.subr.mxu0 0.0
        %1392 = vmatpush1.msra.mxu0 0.0
        %1393 = vmatprep.subr.mxu0 0.0
        %1394 = vmatpush1.msra.mxu0 0.0
        %1395 = vmatprep.subr.mxu0 0.0
        %1396 = vmatpush1.msra.mxu0 0.0
        %1397 = vmatprep.subr.mxu0 0.0
        %1398 = vmatpush1.msra.mxu0 0.0
        %1399 = vmatprep.subr.mxu0 0.0
        %1400 = vmatpush1.msra.mxu0 0.0
        %1401 = vmatprep.subr.mxu0 0.0
        %1402 = vmatpush1.msra.mxu0 0.0
        %1403 = vmatprep.subr.mxu0 0.0
        %1404 = vmatpush1.msra.mxu0 0.0
        %1405 = vmatprep.subr.mxu0 0.0
        %1406 = vmatpush1.msra.mxu0 %v621
        %1407 = vmatprep.subr.mxu0 0.0
        %1408 = vmatpush1.msra.mxu0 %v620
        %1409 = vmatprep.subr.mxu0 0.0
        %1410 = vmatpush1.msra.mxu0 %v619
        %1411 = vmatprep.subr.mxu0 0.0
        %1412 = vmatpush1.msra.mxu0 %v618
        %1413 = vmatprep.subr.mxu0 0.0
        %1414 = vmatpush2.msra.mxu0 0.0
        %1415 = vmatprep.subr.mxu0 0.0
        %1416 = vmatpush2.msra.mxu0 0.0
        %1417 = vmatprep.subr.mxu0 0.0
        %1418 = vmatpush2.msra.mxu0 0.0
        %1419 = vmatprep.subr.mxu0 0.0
        %1420 = vmatpush2.msra.mxu0 0.0
        %1421 = vmatprep.subr.mxu0 0.0
        %1422 = vmatpush2.msra.mxu0 0.0
        %1423 = vmatprep.subr.mxu0 0.0
        %1424 = vmatpush2.msra.mxu0 0.0
        %1425 = vmatprep.subr.mxu0 0.0
        %1426 = vmatpush2.msra.mxu0 0.0
        %1427 = vmatprep.subr.mxu0 0.0
        %1428 = vmatpush2.msra.mxu0 0.0
        %1429 = vmatprep.subr.mxu0 0.0
        %1430 = vmatpush2.msra.mxu0 0.0
        %1431 = vmatprep.subr.mxu0 0.0
        %1432 = vmatpush2.msra.mxu0 0.0
        %1433 = vmatprep.subr.mxu0 0.0
        %1434 = vmatpush2.msra.mxu0 0.0
        %1435 = vmatprep.subr.mxu0 0.0
        %1436 = vmatpush2.msra.mxu0 0.0
        %1437 = vmatprep.subr.mxu0 0.0
        %1438 = vmatpush2.msra.mxu0 0.0
        %1439 = vmatprep.subr.mxu0 0.0
        %1440 = vmatpush2.msra.mxu0 0.0
        %1441 = vmatprep.subr.mxu0 0.0
        %1442 = vmatpush2.msra.mxu0 0.0
        %1443 = vmatprep.subr.mxu0 0.0
        %1444 = vmatpush2.msra.mxu0 0.0
        %1445 = vmatprep.mubr.f32.mxu0 0.0
        %1446 = vmatmul.mubr.f32.gmra.mxu0 %v1379
        %v1447 = vpop.f32.mrf.mxu0
        %v1448 = vadd.f32 %v589, %v1447
        %v1449 = vpop.f32.mrf.mxu0
        %1450 = vdwg.mxu0
        %v1451 = vsel %vm622, %v1448, 0.0
        %1452 = vadd.xlane.f32.xlu0 %v1451
        %v1453 = vpop.xlane.xlu0 %1452
        %v1454 = vrcp.pop 32.0
        %v1455 = vmul.f32 %v1453, %v1454
        %v1456 = vmul.f32 %v1448, %v1448
        %v1457 = vsel %vm622, %v1456, 0.0
        %1458 = vadd.xlane.f32.xlu0 %v1457
        %v1459 = vpop.xlane.xlu0 %1458
        %v1460 = vmul.f32 %v1459, %v1454
        %v1461 = vmul.f32 %v1455, %v1455
        %v1462 = vsub.f32 %v1460, %v1461
        %v1463 = vsub.f32 %v1448, %v1455
        %v1464 = vadd.f32 %v1462, 1e-05
        %v1465 = vrsqrt.pop %v1464
        %v1466 = vmul.f32 %v1463, %v1465
        %v1467 = vld [vmem:[%s8] sm:$0xff]
        %v1468 = vld [vmem:[%s8 + $0x8] sm:$0xff]
        %v1469 = vld [vmem:[%s8 + $0x10] sm:$0xff]
        %v1470 = vld [vmem:[%s8 + $0x18] sm:$0xff]
        %v1471 = vld [vmem:[%s8 + $0x20] sm:$0xff]
        %v1472 = vld [vmem:[%s8 + $0x28] sm:$0xff]
        %v1473 = vld [vmem:[%s8 + $0x30] sm:$0xff]
        %v1474 = vld [vmem:[%s8 + $0x38] sm:$0xff]
        %v1475 = vld [vmem:[%s9] sm:$0xff]
        %v1476 = vld [vmem:[%s9 + $0x8] sm:$0xff]
        %v1477 = vld [vmem:[%s9 + $0x10] sm:$0xff]
        %v1478 = vld [vmem:[%s9 + $0x18] sm:$0xff]
        %v1479 = vld [vmem:[%s9 + $0x20] sm:$0xff]
        %v1480 = vld [vmem:[%s9 + $0x28] sm:$0xff]
        %v1481 = vld [vmem:[%s9 + $0x30] sm:$0xff]
        %v1482 = vld [vmem:[%s9 + $0x38] sm:$0xff]
        %v1483 = vld [vmem:[%s10] sm:$0xff]
        %v1484 = vld [vmem:[%s10 + $0x8] sm:$0xff]
        %v1485 = vld [vmem:[%s10 + $0x10] sm:$0xff]
        %v1486 = vld [vmem:[%s10 + $0x18] sm:$0xff]
        %v1487 = vld [vmem:[%s10 + $0x20] sm:$0xff]
        %v1488 = vld [vmem:[%s10 + $0x28] sm:$0xff]
        %v1489 = vld [vmem:[%s10 + $0x30] sm:$0xff]
        %v1490 = vld [vmem:[%s10 + $0x38] sm:$0xff]
        %v1491 = vld [vmem:[%s11] sm:$0xff]
        %v1492 = vld [vmem:[%s11 + $0x8] sm:$0xff]
        %v1493 = vld [vmem:[%s11 + $0x10] sm:$0xff]
        %v1494 = vld [vmem:[%s11 + $0x18] sm:$0xff]
        %v1496 = vsel %vm622, %v1466, 0
        %1498 = vmatprep.subr.mxu0 0.0
        %1499 = vmatpush1.msra.mxu0 0.0
        %1500 = vmatprep.subr.mxu0 0.0
        %1501 = vmatpush1.msra.mxu0 0.0
        %1502 = vmatprep.subr.mxu0 0.0
        %1503 = vmatpush1.msra.mxu0 0.0
        %1504 = vmatprep.subr.mxu0 0.0
        %1505 = vmatpush1.msra.mxu0 0.0
        %1506 = vmatprep.subr.mxu0 0.0
        %1507 = vmatpush1.msra.mxu0 0.0
        %1508 = vmatprep.subr.mxu0 0.0
        %1509 = vmatpush1.msra.mxu0 0.0
        %1510 = vmatprep.subr.mxu0 0.0
        %1511 = vmatpush1.msra.mxu0 0.0
        %1512 = vmatprep.subr.mxu0 0.0
        %1513 = vmatpush1.msra.mxu0 0.0
        %1514 = vmatprep.subr.mxu0 0.0
        %1515 = vmatpush1.msra.mxu0 0.0
        %1516 = vmatprep.subr.mxu0 0.0
        %1517 = vmatpush1.msra.mxu0 0.0
        %1518 = vmatprep.subr.mxu0 0.0
        %1519 = vmatpush1.msra.mxu0 0.0
        %1520 = vmatprep.subr.mxu0 0.0
        %1521 = vmatpush1.msra.mxu0 0.0
        %1522 = vmatprep.subr.mxu0 0.0
        %1523 = vmatpush1.msra.mxu0 %v1470
        %1524 = vmatprep.subr.mxu0 0.0
        %1525 = vmatpush1.msra.mxu0 %v1469
        %1526 = vmatprep.subr.mxu0 0.0
        %1527 = vmatpush1.msra.mxu0 %v1468
        %1528 = vmatprep.subr.mxu0 0.0
        %1529 = vmatpush1.msra.mxu0 %v1467
        %1530 = vmatprep.subr.mxu0 0.0
        %1531 = vmatpush2.msra.mxu0 0.0
        %1532 = vmatprep.subr.mxu0 0.0
        %1533 = vmatpush2.msra.mxu0 0.0
        %1534 = vmatprep.subr.mxu0 0.0
        %1535 = vmatpush2.msra.mxu0 0.0
        %1536 = vmatprep.subr.mxu0 0.0
        %1537 = vmatpush2.msra.mxu0 0.0
        %1538 = vmatprep.subr.mxu0 0.0
        %1539 = vmatpush2.msra.mxu0 0.0
        %1540 = vmatprep.subr.mxu0 0.0
        %1541 = vmatpush2.msra.mxu0 0.0
        %1542 = vmatprep.subr.mxu0 0.0
        %1543 = vmatpush2.msra.mxu0 0.0
        %1544 = vmatprep.subr.mxu0 0.0
        %1545 = vmatpush2.msra.mxu0 0.0
        %1546 = vmatprep.subr.mxu0 0.0
        %1547 = vmatpush2.msra.mxu0 0.0
        %1548 = vmatprep.subr.mxu0 0.0
        %1549 = vmatpush2.msra.mxu0 0.0
        %1550 = vmatprep.subr.mxu0 0.0
        %1551 = vmatpush2.msra.mxu0 0.0
        %1552 = vmatprep.subr.mxu0 0.0
        %1553 = vmatpush2.msra.mxu0 0.0
        %1554 = vmatprep.subr.mxu0 0.0
        %1555 = vmatpush2.msra.mxu0 0.0
        %1556 = vmatprep.subr.mxu0 0.0
        %1557 = vmatpush2.msra.mxu0 0.0
        %1558 = vmatprep.subr.mxu0 0.0
        %1559 = vmatpush2.msra.mxu0 0.0
        %1560 = vmatprep.subr.mxu0 0.0
        %1561 = vmatpush2.msra.mxu0 0.0
        %1562 = vmatprep.mubr.f32.mxu0 0.0
        %1563 = vmatmul.mubr.f32.gmra.mxu0 %v1496
        %v1564 = vpop.f32.mrf.mxu0
        %v1565 = vadd.f32 0.0, %v1564
        %v1566 = vpop.f32.mrf.mxu0
        %1567 = vdwg.mxu0
        %1568 = vmatprep.subr.mxu0 0.0
        %1569 = vmatpush1.msra.mxu0 0.0
        %1570 = vmatprep.subr.mxu0 0.0
        %1571 = vmatpush1.msra.mxu0 0.0
        %1572 = vmatprep.subr.mxu0 0.0
        %1573 = vmatpush1.msra.mxu0 0.0
        %1574 = vmatprep.subr.mxu0 0.0
        %1575 = vmatpush1.msra.mxu0 0.0
        %1576 = vmatprep.subr.mxu0 0.0
        %1577 = vmatpush1.msra.mxu0 0.0
        %1578 = vmatprep.subr.mxu0 0.0
        %1579 = vmatpush1.msra.mxu0 0.0
        %1580 = vmatprep.subr.mxu0 0.0
        %1581 = vmatpush1.msra.mxu0 0.0
        %1582 = vmatprep.subr.mxu0 0.0
        %1583 = vmatpush1.msra.mxu0 0.0
        %1584 = vmatprep.subr.mxu0 0.0
        %1585 = vmatpush1.msra.mxu0 0.0
        %1586 = vmatprep.subr.mxu0 0.0
        %1587 = vmatpush1.msra.mxu0 0.0
        %1588 = vmatprep.subr.mxu0 0.0
        %1589 = vmatpush1.msra.mxu0 0.0
        %1590 = vmatprep.subr.mxu0 0.0
        %1591 = vmatpush1.msra.mxu0 0.0
        %1592 = vmatprep.subr.mxu0 0.0
        %1593 = vmatpush1.msra.mxu0 %v1474
        %1594 = vmatprep.subr.mxu0 0.0
        %1595 = vmatpush1.msra.mxu0 %v1473
        %1596 = vmatprep.subr.mxu0 0.0
        %1597 = vmatpush1.msra.mxu0 %v1472
        %1598 = vmatprep.subr.mxu0 0.0
        %1599 = vmatpush1.msra.mxu0 %v1471
        %1600 = vmatprep.subr.mxu0 0.0
        %1601 = vmatpush2.msra.mxu0 0.0
        %1602 = vmatprep.subr.mxu0 0.0
        %1603 = vmatpush2.msra.mxu0 0.0
        %1604 = vmatprep.subr.mxu0 0.0
        %1605 = vmatpush2.msra.mxu0 0.0
        %1606 = vmatprep.subr.mxu0 0.0
        %1607 = vmatpush2.msra.mxu0 0.0
        %1608 = vmatprep.subr.mxu0 0.0
        %1609 = vmatpush2.msra.mxu0 0.0
        %1610 = vmatprep.subr.mxu0 0.0
        %1611 = vmatpush2.msra.mxu0 0.0
        %1612 = vmatprep.subr.mxu0 0.0
        %1613 = vmatpush2.msra.mxu0 0.0
        %1614 = vmatprep.subr.mxu0 0.0
        %1615 = vmatpush2.msra.mxu0 0.0
        %1616 = vmatprep.subr.mxu0 0.0
        %1617 = vmatpush2.msra.mxu0 0.0
        %1618 = vmatprep.subr.mxu0 0.0
        %1619 = vmatpush2.msra.mxu0 0.0
        %1620 = vmatprep.subr.mxu0 0.0
        %1621 = vmatpush2.msra.mxu0 0.0
        %1622 = vmatprep.subr.mxu0 0.0
        %1623 = vmatpush2.msra.mxu0 0.0
        %1624 = vmatprep.subr.mxu0 0.0
        %1625 = vmatpush2.msra.mxu0 0.0
        %1626 = vmatprep.subr.mxu0 0.0
        %1627 = vmatpush2.msra.mxu0 0.0
        %1628 = vmatprep.subr.mxu0 0.0
        %1629 = vmatpush2.msra.mxu0 0.0
        %1630 = vmatprep.subr.mxu0 0.0
        %1631 = vmatpush2.msra.mxu0 0.0
        %1632 = vmatprep.mubr.f32.mxu0 0.0
        %1633 = vmatmul.mubr.f32.gmra.mxu0 %v1496
        %v1634 = vpop.f32.mrf.mxu0
        %v1635 = vadd.f32 0.0, %v1634
        %v1636 = vpop.f32.mrf.mxu0
        %1637 = vdwg.mxu0
        %v1639 = vsel %vm622, %v590, 0
        %v1642 = vsel %vm622, %v591, 0
        %1644 = vmatprep.subr.mxu0 0.0
        %1645 = vmatpush1.msra.mxu0 0.0
        %1646 = vmatprep.subr.mxu0 0.0
        %1647 = vmatpush1.msra.mxu0 0.0
        %1648 = vmatprep.subr.mxu0 0.0
        %1649 = vmatpush1.msra.mxu0 0.0
        %1650 = vmatprep.subr.mxu0 0.0
        %1651 = vmatpush1.msra.mxu0 0.0
        %1652 = vmatprep.subr.mxu0 0.0
        %1653 = vmatpush1.msra.mxu0 0.0
        %1654 = vmatprep.subr.mxu0 0.0
        %1655 = vmatpush1.msra.mxu0 0.0
        %1656 = vmatprep.subr.mxu0 0.0
        %1657 = vmatpush1.msra.mxu0 0.0
        %1658 = vmatprep.subr.mxu0 0.0
        %1659 = vmatpush1.msra.mxu0 0.0
        %1660 = vmatprep.subr.mxu0 0.0
        %1661 = vmatpush1.msra.mxu0 0.0
        %1662 = vmatprep.subr.mxu0 0.0
        %1663 = vmatpush1.msra.mxu0 0.0
        %1664 = vmatprep.subr.mxu0 0.0
        %1665 = vmatpush1.msra.mxu0 0.0
        %1666 = vmatprep.subr.mxu0 0.0
        %1667 = vmatpush1.msra.mxu0 0.0
        %1668 = vmatprep.subr.mxu0 0.0
        %1669 = vmatpush1.msra.mxu0 %v1478
        %1670 = vmatprep.subr.mxu0 0.0
        %1671 = vmatpush1.msra.mxu0 %v1477
        %1672 = vmatprep.subr.mxu0 0.0
        %1673 = vmatpush1.msra.mxu0 %v1476
        %1674 = vmatprep.subr.mxu0 0.0
        %1675 = vmatpush1.msra.mxu0 %v1475
        %1676 = vmatprep.subr.mxu0 0.0
        %1677 = vmatpush2.msra.mxu0 0.0
        %1678 = vmatprep.subr.mxu0 0.0
        %1679 = vmatpush2.msra.mxu0 0.0
        %1680 = vmatprep.subr.mxu0 0.0
        %1681 = vmatpush2.msra.mxu0 0.0
        %1682 = vmatprep.subr.mxu0 0.0
        %1683 = vmatpush2.msra.mxu0 0.0
        %1684 = vmatprep.subr.mxu0 0.0
        %1685 = vmatpush2.msra.mxu0 0.0
        %1686 = vmatprep.subr.mxu0 0.0
        %1687 = vmatpush2.msra.mxu0 0.0
        %1688 = vmatprep.subr.mxu0 0.0
        %1689 = vmatpush2.msra.mxu0 0.0
        %1690 = vmatprep.subr.mxu0 0.0
        %1691 = vmatpush2.msra.mxu0 0.0
        %1692 = vmatprep.subr.mxu0 0.0
        %1693 = vmatpush2.msra.mxu0 0.0
        %1694 = vmatprep.subr.mxu0 0.0
        %1695 = vmatpush2.msra.mxu0 0.0
        %1696 = vmatprep.subr.mxu0 0.0
        %1697 = vmatpush2.msra.mxu0 0.0
        %1698 = vmatprep.subr.mxu0 0.0
        %1699 = vmatpush2.msra.mxu0 0.0
        %1700 = vmatprep.subr.mxu0 0.0
        %1701 = vmatpush2.msra.mxu0 0.0
        %1702 = vmatprep.subr.mxu0 0.0
        %1703 = vmatpush2.msra.mxu0 0.0
        %1704 = vmatprep.subr.mxu0 0.0
        %1705 = vmatpush2.msra.mxu0 0.0
        %1706 = vmatprep.subr.mxu0 0.0
        %1707 = vmatpush2.msra.mxu0 0.0
        %1708 = vmatprep.mubr.f32.mxu0 0.0
        %1709 = vmatmul.mubr.f32.gmra.mxu0 %v1639
        %v1710 = vpop.f32.mrf.mxu0
        %v1711 = vadd.f32 0.0, %v1710
        %v1712 = vpop.f32.mrf.mxu0
        %1713 = vmatprep.mubr.f32.mxu0 0.0
        %1714 = vmatmul.mubr.f32.gmra.mxu0 %v1642
        %v1715 = vpop.f32.mrf.mxu0
        %v1716 = vadd.f32 0.0, %v1715
        %v1717 = vpop.f32.mrf.mxu0
        %1718 = vdwg.mxu0
        %1719 = vmatprep.subr.mxu0 0.0
        %1720 = vmatpush1.msra.mxu0 0.0
        %1721 = vmatprep.subr.mxu0 0.0
        %1722 = vmatpush1.msra.mxu0 0.0
        %1723 = vmatprep.subr.mxu0 0.0
        %1724 = vmatpush1.msra.mxu0 0.0
        %1725 = vmatprep.subr.mxu0 0.0
        %1726 = vmatpush1.msra.mxu0 0.0
        %1727 = vmatprep.subr.mxu0 0.0
        %1728 = vmatpush1.msra.mxu0 0.0
        %1729 = vmatprep.subr.mxu0 0.0
        %1730 = vmatpush1.msra.mxu0 0.0
        %1731 = vmatprep.subr.mxu0 0.0
        %1732 = vmatpush1.msra.mxu0 0.0
        %1733 = vmatprep.subr.mxu0 0.0
        %1734 = vmatpush1.msra.mxu0 0.0
        %1735 = vmatprep.subr.mxu0 0.0
        %1736 = vmatpush1.msra.mxu0 0.0
        %1737 = vmatprep.subr.mxu0 0.0
        %1738 = vmatpush1.msra.mxu0 0.0
        %1739 = vmatprep.subr.mxu0 0.0
        %1740 = vmatpush1.msra.mxu0 0.0
        %1741 = vmatprep.subr.mxu0 0.0
        %1742 = vmatpush1.msra.mxu0 0.0
        %1743 = vmatprep.subr.mxu0 0.0
        %1744 = vmatpush1.msra.mxu0 %v1482
        %1745 = vmatprep.subr.mxu0 0.0
        %1746 = vmatpush1.msra.mxu0 %v1481
        %1747 = vmatprep.subr.mxu0 0.0
        %1748 = vmatpush1.msra.mxu0 %v1480
        %1749 = vmatprep.subr.mxu0 0.0
        %1750 = vmatpush1.msra.mxu0 %v1479
        %1751 = vmatprep.subr.mxu0 0.0
        %1752 = vmatpush2.msra.mxu0 0.0
        %1753 = vmatprep.subr.mxu0 0.0
        %1754 = vmatpush2.msra.mxu0 0.0
        %1755 = vmatprep.subr.mxu0 0.0
        %1756 = vmatpush2.msra.mxu0 0.0
        %1757 = vmatprep.subr.mxu0 0.0
        %1758 = vmatpush2.msra.mxu0 0.0
        %1759 = vmatprep.subr.mxu0 0.0
        %1760 = vmatpush2.msra.mxu0 0.0
        %1761 = vmatprep.subr.mxu0 0.0
        %1762 = vmatpush2.msra.mxu0 0.0
        %1763 = vmatprep.subr.mxu0 0.0
        %1764 = vmatpush2.msra.mxu0 0.0
        %1765 = vmatprep.subr.mxu0 0.0
        %1766 = vmatpush2.msra.mxu0 0.0
        %1767 = vmatprep.subr.mxu0 0.0
        %1768 = vmatpush2.msra.mxu0 0.0
        %1769 = vmatprep.subr.mxu0 0.0
        %1770 = vmatpush2.msra.mxu0 0.0
        %1771 = vmatprep.subr.mxu0 0.0
        %1772 = vmatpush2.msra.mxu0 0.0
        %1773 = vmatprep.subr.mxu0 0.0
        %1774 = vmatpush2.msra.mxu0 0.0
        %1775 = vmatprep.subr.mxu0 0.0
        %1776 = vmatpush2.msra.mxu0 0.0
        %1777 = vmatprep.subr.mxu0 0.0
        %1778 = vmatpush2.msra.mxu0 0.0
        %1779 = vmatprep.subr.mxu0 0.0
        %1780 = vmatpush2.msra.mxu0 0.0
        %1781 = vmatprep.subr.mxu0 0.0
        %1782 = vmatpush2.msra.mxu0 0.0
        %1783 = vmatprep.mubr.f32.mxu0 0.0
        %1784 = vmatmul.mubr.f32.gmra.mxu0 %v1639
        %v1785 = vpop.f32.mrf.mxu0
        %v1786 = vadd.f32 0.0, %v1785
        %v1787 = vpop.f32.mrf.mxu0
        %1788 = vmatprep.mubr.f32.mxu0 0.0
        %1789 = vmatmul.mubr.f32.gmra.mxu0 %v1642
        %v1790 = vpop.f32.mrf.mxu0
        %v1791 = vadd.f32 0.0, %v1790
        %v1792 = vpop.f32.mrf.mxu0
        %1793 = vdwg.mxu0
        %1794 = vmatprep.subr.mxu0 0.0
        %1795 = vmatpush1.msra.mxu0 0.0
        %1796 = vmatprep.subr.mxu0 0.0
        %1797 = vmatpush1.msra.mxu0 0.0
        %1798 = vmatprep.subr.mxu0 0.0
        %1799 = vmatpush1.msra.mxu0 0.0
        %1800 = vmatprep.subr.mxu0 0.0
        %1801 = vmatpush1.msra.mxu0 0.0
        %1802 = vmatprep.subr.mxu0 0.0
        %1803 = vmatpush1.msra.mxu0 0.0
        %1804 = vmatprep.subr.mxu0 0.0
        %1805 = vmatpush1.msra.mxu0 0.0
        %1806 = vmatprep.subr.mxu0 0.0
        %1807 = vmatpush1.msra.mxu0 0.0
        %1808 = vmatprep.subr.mxu0 0.0
        %1809 = vmatpush1.msra.mxu0 0.0
        %1810 = vmatprep.subr.mxu0 0.0
        %1811 = vmatpush1.msra.mxu0 0.0
        %1812 = vmatprep.subr.mxu0 0.0
        %1813 = vmatpush1.msra.mxu0 0.0
        %1814 = vmatprep.subr.mxu0 0.0
        %1815 = vmatpush1.msra.mxu0 0.0
        %1816 = vmatprep.subr.mxu0 0.0
        %1817 = vmatpush1.msra.mxu0 0.0
        %1818 = vmatprep.subr.mxu0 0.0
        %1819 = vmatpush1.msra.mxu0 %v1486
        %1820 = vmatprep.subr.mxu0 0.0
        %1821 = vmatpush1.msra.mxu0 %v1485
        %1822 = vmatprep.subr.mxu0 0.0
        %1823 = vmatpush1.msra.mxu0 %v1484
        %1824 = vmatprep.subr.mxu0 0.0
        %1825 = vmatpush1.msra.mxu0 %v1483
        %1826 = vmatprep.subr.mxu0 0.0
        %1827 = vmatpush2.msra.mxu0 0.0
        %1828 = vmatprep.subr.mxu0 0.0
        %1829 = vmatpush2.msra.mxu0 0.0
        %1830 = vmatprep.subr.mxu0 0.0
        %1831 = vmatpush2.msra.mxu0 0.0
        %1832 = vmatprep.subr.mxu0 0.0
        %1833 = vmatpush2.msra.mxu0 0.0
        %1834 = vmatprep.subr.mxu0 0.0
        %1835 = vmatpush2.msra.mxu0 0.0
        %1836 = vmatprep.subr.mxu0 0.0
        %1837 = vmatpush2.msra.mxu0 0.0
        %1838 = vmatprep.subr.mxu0 0.0
        %1839 = vmatpush2.msra.mxu0 0.0
        %1840 = vmatprep.subr.mxu0 0.0
        %1841 = vmatpush2.msra.mxu0 0.0
        %1842 = vmatprep.subr.mxu0 0.0
        %1843 = vmatpush2.msra.mxu0 0.0
        %1844 = vmatprep.subr.mxu0 0.0
        %1845 = vmatpush2.msra.mxu0 0.0
        %1846 = vmatprep.subr.mxu0 0.0
        %1847 = vmatpush2.msra.mxu0 0.0
        %1848 = vmatprep.subr.mxu0 0.0
        %1849 = vmatpush2.msra.mxu0 0.0
        %1850 = vmatprep.subr.mxu0 0.0
        %1851 = vmatpush2.msra.mxu0 0.0
        %1852 = vmatprep.subr.mxu0 0.0
        %1853 = vmatpush2.msra.mxu0 0.0
        %1854 = vmatprep.subr.mxu0 0.0
        %1855 = vmatpush2.msra.mxu0 0.0
        %1856 = vmatprep.subr.mxu0 0.0
        %1857 = vmatpush2.msra.mxu0 0.0
        %1858 = vmatprep.mubr.f32.mxu0 0.0
        %1859 = vmatmul.mubr.f32.gmra.mxu0 %v1639
        %v1860 = vpop.f32.mrf.mxu0
        %v1861 = vadd.f32 0.0, %v1860
        %v1862 = vpop.f32.mrf.mxu0
        %1863 = vmatprep.mubr.f32.mxu0 0.0
        %1864 = vmatmul.mubr.f32.gmra.mxu0 %v1642
        %v1865 = vpop.f32.mrf.mxu0
        %v1866 = vadd.f32 0.0, %v1865
        %v1867 = vpop.f32.mrf.mxu0
        %1868 = vdwg.mxu0
        %1869 = vmatprep.subr.mxu0 0.0
        %1870 = vmatpush1.msra.mxu0 0.0
        %1871 = vmatprep.subr.mxu0 0.0
        %1872 = vmatpush1.msra.mxu0 0.0
        %1873 = vmatprep.subr.mxu0 0.0
        %1874 = vmatpush1.msra.mxu0 0.0
        %1875 = vmatprep.subr.mxu0 0.0
        %1876 = vmatpush1.msra.mxu0 0.0
        %1877 = vmatprep.subr.mxu0 0.0
        %1878 = vmatpush1.msra.mxu0 0.0
        %1879 = vmatprep.subr.mxu0 0.0
        %1880 = vmatpush1.msra.mxu0 0.0
        %1881 = vmatprep.subr.mxu0 0.0
        %1882 = vmatpush1.msra.mxu0 0.0
        %1883 = vmatprep.subr.mxu0 0.0
        %1884 = vmatpush1.msra.mxu0 0.0
        %1885 = vmatprep.subr.mxu0 0.0
        %1886 = vmatpush1.msra.mxu0 0.0
        %1887 = vmatprep.subr.mxu0 0.0
        %1888 = vmatpush1.msra.mxu0 0.0
        %1889 = vmatprep.subr.mxu0 0.0
        %1890 = vmatpush1.msra.mxu0 0.0
        %1891 = vmatprep.subr.mxu0 0.0
        %1892 = vmatpush1.msra.mxu0 0.0
        %1893 = vmatprep.subr.mxu0 0.0
        %1894 = vmatpush1.msra.mxu0 %v1490
        %1895 = vmatprep.subr.mxu0 0.0
        %1896 = vmatpush1.msra.mxu0 %v1489
        %1897 = vmatprep.subr.mxu0 0.0
        %1898 = vmatpush1.msra.mxu0 %v1488
        %1899 = vmatprep.subr.mxu0 0.0
        %1900 = vmatpush1.msra.mxu0 %v1487
        %1901 = vmatprep.subr.mxu0 0.0
        %1902 = vmatpush2.msra.mxu0 0.0
        %1903 = vmatprep.subr.mxu0 0.0
        %1904 = vmatpush2.msra.mxu0 0.0
        %1905 = vmatprep.subr.mxu0 0.0
        %1906 = vmatpush2.msra.mxu0 0.0
        %1907 = vmatprep.subr.mxu0 0.0
        %1908 = vmatpush2.msra.mxu0 0.0
        %1909 = vmatprep.subr.mxu0 0.0
        %1910 = vmatpush2.msra.mxu0 0.0
        %1911 = vmatprep.subr.mxu0 0.0
        %1912 = vmatpush2.msra.mxu0 0.0
        %1913 = vmatprep.subr.mxu0 0.0
        %1914 = vmatpush2.msra.mxu0 0.0
        %1915 = vmatprep.subr.mxu0 0.0
        %1916 = vmatpush2.msra.mxu0 0.0
        %1917 = vmatprep.subr.mxu0 0.0
        %1918 = vmatpush2.msra.mxu0 0.0
        %1919 = vmatprep.subr.mxu0 0.0
        %1920 = vmatpush2.msra.mxu0 0.0
        %1921 = vmatprep.subr.mxu0 0.0
        %1922 = vmatpush2.msra.mxu0 0.0
        %1923 = vmatprep.subr.mxu0 0.0
        %1924 = vmatpush2.msra.mxu0 0.0
        %1925 = vmatprep.subr.mxu0 0.0
        %1926 = vmatpush2.msra.mxu0 0.0
        %1927 = vmatprep.subr.mxu0 0.0
        %1928 = vmatpush2.msra.mxu0 0.0
        %1929 = vmatprep.subr.mxu0 0.0
        %1930 = vmatpush2.msra.mxu0 0.0
        %1931 = vmatprep.subr.mxu0 0.0
        %1932 = vmatpush2.msra.mxu0 0.0
        %1933 = vmatprep.mubr.f32.mxu0 0.0
        %1934 = vmatmul.mubr.f32.gmra.mxu0 %v1639
        %v1935 = vpop.f32.mrf.mxu0
        %v1936 = vadd.f32 0.0, %v1935
        %v1937 = vpop.f32.mrf.mxu0
        %1938 = vmatprep.mubr.f32.mxu0 0.0
        %1939 = vmatmul.mubr.f32.gmra.mxu0 %v1642
        %v1940 = vpop.f32.mrf.mxu0
        %v1941 = vadd.f32 0.0, %v1940
        %v1942 = vpop.f32.mrf.mxu0
        %1943 = vdwg.mxu0
        %v1945 = vsel %vm1046, %v1565, 0
        %v1948 = vsel %vm1046, %v1711, 0
        %v1951 = vsel %vm1046, %v1716, 0
        %1953 = vmatprep.subr.mxu0 0.0
        %1954 = vmatpush1.xpose.msra.mxu0 0.0
        %1955 = vmatprep.subr.mxu0 0.0
        %1956 = vmatpush1.xpose.msra.mxu0 0.0
        %1957 = vmatprep.subr.mxu0 0.0
        %1958 = vmatpush1.xpose.msra.mxu0 0.0
        %1959 = vmatprep.subr.mxu0 0.0
        %1960 = vmatpush1.xpose.msra.mxu0 0.0
        %1961 = vmatprep.subr.mxu0 0.0
        %1962 = vmatpush1.xpose.msra.mxu0 0.0
        %1963 = vmatprep.subr.mxu0 0.0
        %1964 = vmatpush1.xpose.msra.mxu0 0.0
        %1965 = vmatprep.subr.mxu0 0.0
        %1966 = vmatpush1.xpose.msra.mxu0 0.0
        %1967 = vmatprep.subr.mxu0 0.0
        %1968 = vmatpush1.xpose.msra.mxu0 0.0
        %1969 = vmatprep.subr.mxu0 0.0
        %1970 = vmatpush1.xpose.msra.mxu0 0.0
        %1971 = vmatprep.subr.mxu0 0.0
        %1972 = vmatpush1.xpose.msra.mxu0 0.0
        %1973 = vmatprep.subr.mxu0 0.0
        %1974 = vmatpush1.xpose.msra.mxu0 0.0
        %1975 = vmatprep.subr.mxu0 0.0
        %1976 = vmatpush1.xpose.msra.mxu0 0.0
        %1977 = vmatprep.subr.mxu0 0.0
        %1978 = vmatpush1.xpose.msra.mxu0 0.0
        %1979 = vmatprep.subr.mxu0 0.0
        %1980 = vmatpush1.xpose.msra.mxu0 0.0
        %1981 = vmatprep.subr.mxu0 0.0
        %1982 = vmatpush1.xpose.msra.mxu0 %v1951
        %1983 = vmatprep.subr.mxu0 0.0
        %1984 = vmatpush1.xpose.msra.mxu0 %v1948
        %1985 = vmatprep.subr.mxu0 0.0
        %1986 = vmatpush2.xpose.msra.mxu0 0.0
        %1987 = vmatprep.subr.mxu0 0.0
        %1988 = vmatpush2.xpose.msra.mxu0 0.0
        %1989 = vmatprep.subr.mxu0 0.0
        %1990 = vmatpush2.xpose.msra.mxu0 0.0
        %1991 = vmatprep.subr.mxu0 0.0
        %1992 = vmatpush2.xpose.msra.mxu0 0.0
        %1993 = vmatprep.subr.mxu0 0.0
        %1994 = vmatpush2.xpose.msra.mxu0 0.0
        %1995 = vmatprep.subr.mxu0 0.0
        %1996 = vmatpush2.xpose.msra.mxu0 0.0
        %1997 = vmatprep.subr.mxu0 0.0
        %1998 = vmatpush2.xpose.msra.mxu0 0.0
        %1999 = vmatprep.subr.mxu0 0.0
        %2000 = vmatpush2.xpose.msra.mxu0 0.0
        %2001 = vmatprep.subr.mxu0 0.0
        %2002 = vmatpush2.xpose.msra.mxu0 0.0
        %2003 = vmatprep.subr.mxu0 0.0
        %2004 = vmatpush2.xpose.msra.mxu0 0.0
        %2005 = vmatprep.subr.mxu0 0.0
        %2006 = vmatpush2.xpose.msra.mxu0 0.0
        %2007 = vmatprep.subr.mxu0 0.0
        %2008 = vmatpush2.xpose.msra.mxu0 0.0
        %2009 = vmatprep.subr.mxu0 0.0
        %2010 = vmatpush2.xpose.msra.mxu0 0.0
        %2011 = vmatprep.subr.mxu0 0.0
        %2012 = vmatpush2.xpose.msra.mxu0 0.0
        %2013 = vmatprep.subr.mxu0 0.0
        %2014 = vmatpush2.xpose.msra.mxu0 0.0
        %2015 = vmatprep.subr.mxu0 0.0
        %2016 = vmatpush2.xpose.msra.mxu0 0.0
        %2017 = vmatprep.mubr.f32.mxu0 0.0
        %2018 = vmatmul.mubr.f32.gmra.mxu0 %v1945
        %v2019 = vpop.f32.mrf.mxu0
        %v2020 = vadd.f32 0.0, %v2019
        %v2021 = vpop.f32.mrf.mxu0
        %2022 = vdwg.mxu0
        %v2024 = vsel %vm1046, %v1635, 0
        %v2027 = vsel %vm1046, %v1786, 0
        %v2030 = vsel %vm1046, %v1791, 0
        %2032 = vmatprep.subr.mxu0 0.0
        %2033 = vmatpush1.xpose.msra.mxu0 0.0
        %2034 = vmatprep.subr.mxu0 0.0
        %2035 = vmatpush1.xpose.msra.mxu0 0.0
        %2036 = vmatprep.subr.mxu0 0.0
        %2037 = vmatpush1.xpose.msra.mxu0 0.0
        %2038 = vmatprep.subr.mxu0 0.0
        %2039 = vmatpush1.xpose.msra.mxu0 0.0
        %2040 = vmatprep.subr.mxu0 0.0
        %2041 = vmatpush1.xpose.msra.mxu0 0.0
        %2042 = vmatprep.subr.mxu0 0.0
        %2043 = vmatpush1.xpose.msra.mxu0 0.0
        %2044 = vmatprep.subr.mxu0 0.0
        %2045 = vmatpush1.xpose.msra.mxu0 0.0
        %2046 = vmatprep.subr.mxu0 0.0
        %2047 = vmatpush1.xpose.msra.mxu0 0.0
        %2048 = vmatprep.subr.mxu0 0.0
        %2049 = vmatpush1.xpose.msra.mxu0 0.0
        %2050 = vmatprep.subr.mxu0 0.0
        %2051 = vmatpush1.xpose.msra.mxu0 0.0
        %2052 = vmatprep.subr.mxu0 0.0
        %2053 = vmatpush1.xpose.msra.mxu0 0.0
        %2054 = vmatprep.subr.mxu0 0.0
        %2055 = vmatpush1.xpose.msra.mxu0 0.0
        %2056 = vmatprep.subr.mxu0 0.0
        %2057 = vmatpush1.xpose.msra.mxu0 0.0
        %2058 = vmatprep.subr.mxu0 0.0
        %2059 = vmatpush1.xpose.msra.mxu0 0.0
        %2060 = vmatprep.subr.mxu0 0.0
        %2061 = vmatpush1.xpose.msra.mxu0 %v2030
        %2062 = vmatprep.subr.mxu0 0.0
        %2063 = vmatpush1.xpose.msra.mxu0 %v2027
        %2064 = vmatprep.subr.mxu0 0.0
        %2065 = vmatpush2.xpose.msra.mxu0 0.0
        %2066 = vmatprep.subr.mxu0 0.0
        %2067 = vmatpush2.xpose.msra.mxu0 0.0
        %2068 = vmatprep.subr.mxu0 0.0
        %2069 = vmatpush2.xpose.msra.mxu0 0.0
        %2070 = vmatprep.subr.mxu0 0.0
        %2071 = vmatpush2.xpose.msra.mxu0 0.0
        %2072 = vmatprep.subr.mxu0 0.0
        %2073 = vmatpush2.xpose.msra.mxu0 0.0
        %2074 = vmatprep.subr.mxu0 0.0
        %2075 = vmatpush2.xpose.msra.mxu0 0.0
        %2076 = vmatprep.subr.mxu0 0.0
        %2077 = vmatpush2.xpose.msra.mxu0 0.0
        %2078 = vmatprep.subr.mxu0 0.0
        %2079 = vmatpush2.xpose.msra.mxu0 0.0
        %2080 = vmatprep.subr.mxu0 0.0
        %2081 = vmatpush2.xpose.msra.mxu0 0.0
        %2082 = vmatprep.subr.mxu0 0.0
        %2083 = vmatpush2.xpose.msra.mxu0 0.0
        %2084 = vmatprep.subr.mxu0 0.0
        %2085 = vmatpush2.xpose.msra.mxu0 0.0
        %2086 = vmatprep.subr.mxu0 0.0
        %2087 = vmatpush2.xpose.msra.mxu0 0.0
        %2088 = vmatprep.subr.mxu0 0.0
        %2089 = vmatpush2.xpose.msra.mxu0 0.0
        %2090 = vmatprep.subr.mxu0 0.0
        %2091 = vmatpush2.xpose.msra.mxu0 0.0
        %2092 = vmatprep.subr.mxu0 0.0
        %2093 = vmatpush2.xpose.msra.mxu0 0.0
        %2094 = vmatprep.subr.mxu0 0.0
        %2095 = vmatpush2.xpose.msra.mxu0 0.0
        %2096 = vmatprep.mubr.f32.mxu0 0.0
        %2097 = vmatmul.mubr.f32.gmra.mxu0 %v2024
        %v2098 = vpop.f32.mrf.mxu0
        %v2099 = vadd.f32 0.0, %v2098
        %v2100 = vpop.f32.mrf.mxu0
        %2101 = vdwg.mxu0
        %vm2102 = vcmp.gt.f32.partialorder %v593, 0.5
        %v2103 = vsel %vm2102, 1, 0
        %vm2104 = vcmp.eq.s32.totalorder %v2103, 1
        %v2105 = vsel %vm2104, -1e+09, %v2020
        %v2106 = vsel %vm2104, -1e+09, %v2099
        %vm2107 = vcmask 80896
        %v2108 = vsel %vm2107, %v2105, -inf
        %2109 = vmax.xlane.f32.xlu0 %v2108
        %v2110 = vpop.xlane.xlu0 %2109
        %v2111 = vsel %vm2107, %v2106, -inf
        %2112 = vmax.xlane.f32.xlu0 %v2111
        %v2113 = vpop.xlane.xlu0 %2112
        %v2114 = vsub.f32 %v2105, %v2110
        %v2115 = vsub.f32 %v2106, %v2113
        %v2116 = vmul.f32 %v2114, 1.442695
        %v2117 = vpow.pop %v2116
        %v2118 = vmul.f32 %v2115, 1.442695
        %v2119 = vpow.pop %v2118
        %v2120 = vsel %vm2107, %v2117, 0.0
        %2121 = vadd.xlane.f32.xlu0 %v2120
        %v2122 = vpop.xlane.xlu0 %2121
        %v2123 = vsel %vm2107, %v2119, 0.0
        %2124 = vadd.xlane.f32.xlu0 %v2123
        %v2125 = vpop.xlane.xlu0 %2124
        %v2126 = vrcp.pop %v2122
        %v2127 = vrcp.pop %v2125
        %v2128 = vmul.f32 %v2117, %v2126
        %v2129 = vmul.f32 %v2119, %v2127
        %v2131 = vsel %vm2107, %v2128, 0
        %vm2133 = vcmask 1041408
        %v2135 = vsel %vm2133, %v1866, 0
        %2137 = vmatprep.subr.mxu0 0.0
        %2138 = vmatpush1.msra.mxu0 0.0
        %2139 = vmatprep.subr.mxu0 0.0
        %2140 = vmatpush1.msra.mxu0 0.0
        %2141 = vmatprep.subr.mxu0 0.0
        %2142 = vmatpush1.msra.mxu0 0.0
        %2143 = vmatprep.subr.mxu0 0.0
        %2144 = vmatpush1.msra.mxu0 0.0
        %2145 = vmatprep.subr.mxu0 0.0
        %2146 = vmatpush1.msra.mxu0 0.0
        %2147 = vmatprep.subr.mxu0 0.0
        %2148 = vmatpush1.msra.mxu0 0.0
        %2149 = vmatprep.subr.mxu0 0.0
        %2150 = vmatpush1.msra.mxu0 0.0
        %2151 = vmatprep.subr.mxu0 0.0
        %2152 = vmatpush1.msra.mxu0 0.0
        %2153 = vmatprep.subr.mxu0 0.0
        %2154 = vmatpush1.msra.mxu0 0.0
        %2155 = vmatprep.subr.mxu0 0.0
        %2156 = vmatpush1.msra.mxu0 0.0
        %2157 = vmatprep.subr.mxu0 0.0
        %2158 = vmatpush1.msra.mxu0 0.0
        %2159 = vmatprep.subr.mxu0 0.0
        %2160 = vmatpush1.msra.mxu0 0.0
        %2161 = vmatprep.subr.mxu0 0.0
        %2162 = vmatpush1.msra.mxu0 0.0
        %2163 = vmatprep.subr.mxu0 0.0
        %2164 = vmatpush1.msra.mxu0 0.0
        %2165 = vmatprep.subr.mxu0 0.0
        %2166 = vmatpush1.msra.mxu0 %v2135
        %2167 = vmatprep.subr.mxu0 0.0
        %2168 = vmatpush1.msra.mxu0 %v1861
        %2169 = vmatprep.subr.mxu0 0.0
        %2170 = vmatpush2.msra.mxu0 0.0
        %2171 = vmatprep.subr.mxu0 0.0
        %2172 = vmatpush2.msra.mxu0 0.0
        %2173 = vmatprep.subr.mxu0 0.0
        %2174 = vmatpush2.msra.mxu0 0.0
        %2175 = vmatprep.subr.mxu0 0.0
        %2176 = vmatpush2.msra.mxu0 0.0
        %2177 = vmatprep.subr.mxu0 0.0
        %2178 = vmatpush2.msra.mxu0 0.0
        %2179 = vmatprep.subr.mxu0 0.0
        %2180 = vmatpush2.msra.mxu0 0.0
        %2181 = vmatprep.subr.mxu0 0.0
        %2182 = vmatpush2.msra.mxu0 0.0
        %2183 = vmatprep.subr.mxu0 0.0
        %2184 = vmatpush2.msra.mxu0 0.0
        %2185 = vmatprep.subr.mxu0 0.0
        %2186 = vmatpush2.msra.mxu0 0.0
        %2187 = vmatprep.subr.mxu0 0.0
        %2188 = vmatpush2.msra.mxu0 0.0
        %2189 = vmatprep.subr.mxu0 0.0
        %2190 = vmatpush2.msra.mxu0 0.0
        %2191 = vmatprep.subr.mxu0 0.0
        %2192 = vmatpush2.msra.mxu0 0.0
        %2193 = vmatprep.subr.mxu0 0.0
        %2194 = vmatpush2.msra.mxu0 0.0
        %2195 = vmatprep.subr.mxu0 0.0
        %2196 = vmatpush2.msra.mxu0 0.0
        %2197 = vmatprep.subr.mxu0 0.0
        %2198 = vmatpush2.msra.mxu0 0.0
        %2199 = vmatprep.subr.mxu0 0.0
        %2200 = vmatpush2.msra.mxu0 0.0
        %2201 = vmatprep.mubr.f32.mxu0 0.0
        %2202 = vmatmul.mubr.f32.gmra.mxu0 %v2131
        %v2203 = vpop.f32.mrf.mxu0
        %v2204 = vadd.f32 0.0, %v2203
        %v2205 = vpop.f32.mrf.mxu0
        %2206 = vdwg.mxu0
        %v2208 = vsel %vm2107, %v2129, 0
        %v2211 = vsel %vm2133, %v1941, 0
        %2213 = vmatprep.subr.mxu0 0.0
        %2214 = vmatpush1.msra.mxu0 0.0
        %2215 = vmatprep.subr.mxu0 0.0
        %2216 = vmatpush1.msra.mxu0 0.0
        %2217 = vmatprep.subr.mxu0 0.0
        %2218 = vmatpush1.msra.mxu0 0.0
        %2219 = vmatprep.subr.mxu0 0.0
        %2220 = vmatpush1.msra.mxu0 0.0
        %2221 = vmatprep.subr.mxu0 0.0
        %2222 = vmatpush1.msra.mxu0 0.0
        %2223 = vmatprep.subr.mxu0 0.0
        %2224 = vmatpush1.msra.mxu0 0.0
        %2225 = vmatprep.subr.mxu0 0.0
        %2226 = vmatpush1.msra.mxu0 0.0
        %2227 = vmatprep.subr.mxu0 0.0
        %2228 = vmatpush1.msra.mxu0 0.0
        %2229 = vmatprep.subr.mxu0 0.0
        %2230 = vmatpush1.msra.mxu0 0.0
        %2231 = vmatprep.subr.mxu0 0.0
        %2232 = vmatpush1.msra.mxu0 0.0
        %2233 = vmatprep.subr.mxu0 0.0
        %2234 = vmatpush1.msra.mxu0 0.0
        %2235 = vmatprep.subr.mxu0 0.0
        %2236 = vmatpush1.msra.mxu0 0.0
        %2237 = vmatprep.subr.mxu0 0.0
        %2238 = vmatpush1.msra.mxu0 0.0
        %2239 = vmatprep.subr.mxu0 0.0
        %2240 = vmatpush1.msra.mxu0 0.0
        %2241 = vmatprep.subr.mxu0 0.0
        %2242 = vmatpush1.msra.mxu0 %v2211
        %2243 = vmatprep.subr.mxu0 0.0
        %2244 = vmatpush1.msra.mxu0 %v1936
        %2245 = vmatprep.subr.mxu0 0.0
        %2246 = vmatpush2.msra.mxu0 0.0
        %2247 = vmatprep.subr.mxu0 0.0
        %2248 = vmatpush2.msra.mxu0 0.0
        %2249 = vmatprep.subr.mxu0 0.0
        %2250 = vmatpush2.msra.mxu0 0.0
        %2251 = vmatprep.subr.mxu0 0.0
        %2252 = vmatpush2.msra.mxu0 0.0
        %2253 = vmatprep.subr.mxu0 0.0
        %2254 = vmatpush2.msra.mxu0 0.0
        %2255 = vmatprep.subr.mxu0 0.0
        %2256 = vmatpush2.msra.mxu0 0.0
        %2257 = vmatprep.subr.mxu0 0.0
        %2258 = vmatpush2.msra.mxu0 0.0
        %2259 = vmatprep.subr.mxu0 0.0
        %2260 = vmatpush2.msra.mxu0 0.0
        %2261 = vmatprep.subr.mxu0 0.0
        %2262 = vmatpush2.msra.mxu0 0.0
        %2263 = vmatprep.subr.mxu0 0.0
        %2264 = vmatpush2.msra.mxu0 0.0
        %2265 = vmatprep.subr.mxu0 0.0
        %2266 = vmatpush2.msra.mxu0 0.0
        %2267 = vmatprep.subr.mxu0 0.0
        %2268 = vmatpush2.msra.mxu0 0.0
        %2269 = vmatprep.subr.mxu0 0.0
        %2270 = vmatpush2.msra.mxu0 0.0
        %2271 = vmatprep.subr.mxu0 0.0
        %2272 = vmatpush2.msra.mxu0 0.0
        %2273 = vmatprep.subr.mxu0 0.0
        %2274 = vmatpush2.msra.mxu0 0.0
        %2275 = vmatprep.subr.mxu0 0.0
        %2276 = vmatpush2.msra.mxu0 0.0
        %2277 = vmatprep.mubr.f32.mxu0 0.0
        %2278 = vmatmul.mubr.f32.gmra.mxu0 %v2208
        %v2279 = vpop.f32.mrf.mxu0
        %v2280 = vadd.f32 0.0, %v2279
        %v2281 = vpop.f32.mrf.mxu0
        %2282 = vdwg.mxu0
        %2284 = vrot.lane.b32.xlu0 %v2280, 16
        %v2285 = vpop.permute.xlu0 %2284
        %v2287 = vsel %vm1046, %v2204, %v2285
        %v2289 = vsel %vm622, %v2287, 0
        %2291 = vmatprep.subr.mxu0 0.0
        %2292 = vmatpush1.msra.mxu0 0.0
        %2293 = vmatprep.subr.mxu0 0.0
        %2294 = vmatpush1.msra.mxu0 0.0
        %2295 = vmatprep.subr.mxu0 0.0
        %2296 = vmatpush1.msra.mxu0 0.0
        %2297 = vmatprep.subr.mxu0 0.0
        %2298 = vmatpush1.msra.mxu0 0.0
        %2299 = vmatprep.subr.mxu0 0.0
        %2300 = vmatpush1.msra.mxu0 0.0
        %2301 = vmatprep.subr.mxu0 0.0
        %2302 = vmatpush1.msra.mxu0 0.0
        %2303 = vmatprep.subr.mxu0 0.0
        %2304 = vmatpush1.msra.mxu0 0.0
        %2305 = vmatprep.subr.mxu0 0.0
        %2306 = vmatpush1.msra.mxu0 0.0
        %2307 = vmatprep.subr.mxu0 0.0
        %2308 = vmatpush1.msra.mxu0 0.0
        %2309 = vmatprep.subr.mxu0 0.0
        %2310 = vmatpush1.msra.mxu0 0.0
        %2311 = vmatprep.subr.mxu0 0.0
        %2312 = vmatpush1.msra.mxu0 0.0
        %2313 = vmatprep.subr.mxu0 0.0
        %2314 = vmatpush1.msra.mxu0 0.0
        %2315 = vmatprep.subr.mxu0 0.0
        %2316 = vmatpush1.msra.mxu0 %v1494
        %2317 = vmatprep.subr.mxu0 0.0
        %2318 = vmatpush1.msra.mxu0 %v1493
        %2319 = vmatprep.subr.mxu0 0.0
        %2320 = vmatpush1.msra.mxu0 %v1492
        %2321 = vmatprep.subr.mxu0 0.0
        %2322 = vmatpush1.msra.mxu0 %v1491
        %2323 = vmatprep.subr.mxu0 0.0
        %2324 = vmatpush2.msra.mxu0 0.0
        %2325 = vmatprep.subr.mxu0 0.0
        %2326 = vmatpush2.msra.mxu0 0.0
        %2327 = vmatprep.subr.mxu0 0.0
        %2328 = vmatpush2.msra.mxu0 0.0
        %2329 = vmatprep.subr.mxu0 0.0
        %2330 = vmatpush2.msra.mxu0 0.0
        %2331 = vmatprep.subr.mxu0 0.0
        %2332 = vmatpush2.msra.mxu0 0.0
        %2333 = vmatprep.subr.mxu0 0.0
        %2334 = vmatpush2.msra.mxu0 0.0
        %2335 = vmatprep.subr.mxu0 0.0
        %2336 = vmatpush2.msra.mxu0 0.0
        %2337 = vmatprep.subr.mxu0 0.0
        %2338 = vmatpush2.msra.mxu0 0.0
        %2339 = vmatprep.subr.mxu0 0.0
        %2340 = vmatpush2.msra.mxu0 0.0
        %2341 = vmatprep.subr.mxu0 0.0
        %2342 = vmatpush2.msra.mxu0 0.0
        %2343 = vmatprep.subr.mxu0 0.0
        %2344 = vmatpush2.msra.mxu0 0.0
        %2345 = vmatprep.subr.mxu0 0.0
        %2346 = vmatpush2.msra.mxu0 0.0
        %2347 = vmatprep.subr.mxu0 0.0
        %2348 = vmatpush2.msra.mxu0 0.0
        %2349 = vmatprep.subr.mxu0 0.0
        %2350 = vmatpush2.msra.mxu0 0.0
        %2351 = vmatprep.subr.mxu0 0.0
        %2352 = vmatpush2.msra.mxu0 0.0
        %2353 = vmatprep.subr.mxu0 0.0
        %2354 = vmatpush2.msra.mxu0 0.0
        %2355 = vmatprep.mubr.f32.mxu0 0.0
        %2356 = vmatmul.mubr.f32.gmra.mxu0 %v2289
        %v2357 = vpop.f32.mrf.mxu0
        %v2358 = vadd.f32 %v1466, %v2357
        %v2359 = vpop.f32.mrf.mxu0
        %2360 = vdwg.mxu0
        %v2361 = vsel %vm622, %v2358, 0.0
        %2362 = vadd.xlane.f32.xlu0 %v2361
        %v2363 = vpop.xlane.xlu0 %2362
        %v2364 = vmul.f32 %v2363, %v1454
        %v2365 = vmul.f32 %v2358, %v2358
        %v2366 = vsel %vm622, %v2365, 0.0
        %2367 = vadd.xlane.f32.xlu0 %v2366
        %v2368 = vpop.xlane.xlu0 %2367
        %v2369 = vmul.f32 %v2368, %v1454
        %v2370 = vmul.f32 %v2364, %v2364
        %v2371 = vsub.f32 %v2369, %v2370
        %v2372 = vsub.f32 %v2358, %v2364
        %v2373 = vadd.f32 %v2371, 1e-05
        %v2374 = vrsqrt.pop %v2373
        %v2375 = vmul.f32 %v2372, %v2374
        %2376 = vst.msk [vmem:[%s564] sm:$0xff] %vm1204, %v1225
        %2377 = vst.msk [vmem:[%s571] sm:$0xff] %vm2107, %v2128
        %s2378 = scalar_lea.vmem %s564, 8 [#allocation4]
        %2379 = vst.msk [vmem:[%s2378] sm:$0xff] %vm1204, %v1226
        %s2380 = scalar_lea.vmem %s571, 8 [#allocation6]
        %2381 = vst.msk [vmem:[%s2380] sm:$0xff] %vm2107, %v2129
        %v2382 = vld [vmem:[%s12] sm:$0xff]
        %v2383 = vld [vmem:[%s12 + $0x8] sm:$0xff]
        %v2384 = vld [vmem:[%s12 + $0x10] sm:$0xff]
        %v2385 = vld [vmem:[%s12 + $0x18] sm:$0xff]
        %v2387 = vsel %vm622, %v2375, 0
        %2389 = vmatprep.subr.mxu0 0.0
        %2390 = vmatpush1.msra.mxu0 0.0
        %2391 = vmatprep.subr.mxu0 0.0
        %2392 = vmatpush1.msra.mxu0 0.0
        %2393 = vmatprep.subr.mxu0 0.0
        %2394 = vmatpush1.msra.mxu0 0.0
        %2395 = vmatprep.subr.mxu0 0.0
        %2396 = vmatpush1.msra.mxu0 0.0
        %2397 = vmatprep.subr.mxu0 0.0
        %2398 = vmatpush1.msra.mxu0 0.0
        %2399 = vmatprep.subr.mxu0 0.0
        %2400 = vmatpush1.msra.mxu0 0.0
        %2401 = vmatprep.subr.mxu0 0.0
        %2402 = vmatpush1.msra.mxu0 0.0
        %2403 = vmatprep.subr.mxu0 0.0
        %2404 = vmatpush1.msra.mxu0 0.0
        %2405 = vmatprep.subr.mxu0 0.0
        %2406 = vmatpush1.msra.mxu0 0.0
        %2407 = vmatprep.subr.mxu0 0.0
        %2408 = vmatpush1.msra.mxu0 0.0
        %2409 = vmatprep.subr.mxu0 0.0
        %2410 = vmatpush1.msra.mxu0 0.0
        %2411 = vmatprep.subr.mxu0 0.0
        %2412 = vmatpush1.msra.mxu0 0.0
        %2413 = vmatprep.subr.mxu0 0.0
        %2414 = vmatpush1.msra.mxu0 %v2385
        %2415 = vmatprep.subr.mxu0 0.0
        %2416 = vmatpush1.msra.mxu0 %v2384
        %2417 = vmatprep.subr.mxu0 0.0
        %2418 = vmatpush1.msra.mxu0 %v2383
        %2419 = vmatprep.subr.mxu0 0.0
        %2420 = vmatpush1.msra.mxu0 %v2382
        %2421 = vmatprep.subr.mxu0 0.0
        %2422 = vmatpush2.msra.mxu0 0.0
        %2423 = vmatprep.subr.mxu0 0.0
        %2424 = vmatpush2.msra.mxu0 0.0
        %2425 = vmatprep.subr.mxu0 0.0
        %2426 = vmatpush2.msra.mxu0 0.0
        %2427 = vmatprep.subr.mxu0 0.0
        %2428 = vmatpush2.msra.mxu0 0.0
        %2429 = vmatprep.subr.mxu0 0.0
        %2430 = vmatpush2.msra.mxu0 0.0
        %2431 = vmatprep.subr.mxu0 0.0
        %2432 = vmatpush2.msra.mxu0 0.0
        %2433 = vmatprep.subr.mxu0 0.0
        %2434 = vmatpush2.msra.mxu0 0.0
        %2435 = vmatprep.subr.mxu0 0.0
        %2436 = vmatpush2.msra.mxu0 0.0
        %2437 = vmatprep.subr.mxu0 0.0
        %2438 = vmatpush2.msra.mxu0 0.0
        %2439 = vmatprep.subr.mxu0 0.0
        %2440 = vmatpush2.msra.mxu0 0.0
        %2441 = vmatprep.subr.mxu0 0.0
        %2442 = vmatpush2.msra.mxu0 0.0
        %2443 = vmatprep.subr.mxu0 0.0
        %2444 = vmatpush2.msra.mxu0 0.0
        %2445 = vmatprep.subr.mxu0 0.0
        %2446 = vmatpush2.msra.mxu0 0.0
        %2447 = vmatprep.subr.mxu0 0.0
        %2448 = vmatpush2.msra.mxu0 0.0
        %2449 = vmatprep.subr.mxu0 0.0
        %2450 = vmatpush2.msra.mxu0 0.0
        %2451 = vmatprep.subr.mxu0 0.0
        %2452 = vmatpush2.msra.mxu0 0.0
        %2453 = vmatprep.mubr.f32.mxu0 0.0
        %2454 = vmatmul.mubr.f32.gmra.mxu0 %v2387
        %v2455 = vpop.f32.mrf.mxu0
        %v2456 = vadd.f32 0.0, %v2455
        %v2457 = vpop.f32.mrf.mxu0
        %2458 = vdwg.mxu0
        %v2459 = vmax.f32 %v2456, 0.0
        %v2460 = vld [vmem:[%s13] sm:$0xff]
        %v2461 = vld [vmem:[%s13 + $0x8] sm:$0xff]
        %v2462 = vld [vmem:[%s13 + $0x10] sm:$0xff]
        %v2463 = vld [vmem:[%s13 + $0x18] sm:$0xff]
        %v2464 = vld [vmem:[%s13 + $0x20] sm:$0xff]
        %v2465 = vld [vmem:[%s13 + $0x28] sm:$0xff]
        %v2466 = vld [vmem:[%s13 + $0x30] sm:$0xff]
        %v2467 = vld [vmem:[%s13 + $0x38] sm:$0xff]
        %vm2468 = vcmask 523264
        %v2470 = vsel %vm2468, %v2459, 0
        %2472 = vmatprep.subr.mxu0 0.0
        %2473 = vmatpush1.msra.mxu0 0.0
        %2474 = vmatprep.subr.mxu0 0.0
        %2475 = vmatpush1.msra.mxu0 0.0
        %2476 = vmatprep.subr.mxu0 0.0
        %2477 = vmatpush1.msra.mxu0 0.0
        %2478 = vmatprep.subr.mxu0 0.0
        %2479 = vmatpush1.msra.mxu0 0.0
        %2480 = vmatprep.subr.mxu0 0.0
        %2481 = vmatpush1.msra.mxu0 0.0
        %2482 = vmatprep.subr.mxu0 0.0
        %2483 = vmatpush1.msra.mxu0 0.0
        %2484 = vmatprep.subr.mxu0 0.0
        %2485 = vmatpush1.msra.mxu0 0.0
        %2486 = vmatprep.subr.mxu0 0.0
        %2487 = vmatpush1.msra.mxu0 0.0
        %2488 = vmatprep.subr.mxu0 0.0
        %2489 = vmatpush1.msra.mxu0 %v2467
        %2490 = vmatprep.subr.mxu0 0.0
        %2491 = vmatpush1.msra.mxu0 %v2466
        %2492 = vmatprep.subr.mxu0 0.0
        %2493 = vmatpush1.msra.mxu0 %v2465
        %2494 = vmatprep.subr.mxu0 0.0
        %2495 = vmatpush1.msra.mxu0 %v2464
        %2496 = vmatprep.subr.mxu0 0.0
        %2497 = vmatpush1.msra.mxu0 %v2463
        %2498 = vmatprep.subr.mxu0 0.0
        %2499 = vmatpush1.msra.mxu0 %v2462
        %2500 = vmatprep.subr.mxu0 0.0
        %2501 = vmatpush1.msra.mxu0 %v2461
        %2502 = vmatprep.subr.mxu0 0.0
        %2503 = vmatpush1.msra.mxu0 %v2460
        %2504 = vmatprep.subr.mxu0 0.0
        %2505 = vmatpush2.msra.mxu0 0.0
        %2506 = vmatprep.subr.mxu0 0.0
        %2507 = vmatpush2.msra.mxu0 0.0
        %2508 = vmatprep.subr.mxu0 0.0
        %2509 = vmatpush2.msra.mxu0 0.0
        %2510 = vmatprep.subr.mxu0 0.0
        %2511 = vmatpush2.msra.mxu0 0.0
        %2512 = vmatprep.subr.mxu0 0.0
        %2513 = vmatpush2.msra.mxu0 0.0
        %2514 = vmatprep.subr.mxu0 0.0
        %2515 = vmatpush2.msra.mxu0 0.0
        %2516 = vmatprep.subr.mxu0 0.0
        %2517 = vmatpush2.msra.mxu0 0.0
        %2518 = vmatprep.subr.mxu0 0.0
        %2519 = vmatpush2.msra.mxu0 0.0
        %2520 = vmatprep.subr.mxu0 0.0
        %2521 = vmatpush2.msra.mxu0 0.0
        %2522 = vmatprep.subr.mxu0 0.0
        %2523 = vmatpush2.msra.mxu0 0.0
        %2524 = vmatprep.subr.mxu0 0.0
        %2525 = vmatpush2.msra.mxu0 0.0
        %2526 = vmatprep.subr.mxu0 0.0
        %2527 = vmatpush2.msra.mxu0 0.0
        %2528 = vmatprep.subr.mxu0 0.0
        %2529 = vmatpush2.msra.mxu0 0.0
        %2530 = vmatprep.subr.mxu0 0.0
        %2531 = vmatpush2.msra.mxu0 0.0
        %2532 = vmatprep.subr.mxu0 0.0
        %2533 = vmatpush2.msra.mxu0 0.0
        %2534 = vmatprep.subr.mxu0 0.0
        %2535 = vmatpush2.msra.mxu0 0.0
        %2536 = vmatprep.mubr.f32.mxu0 0.0
        %2537 = vmatmul.mubr.f32.gmra.mxu0 %v2470
        %v2538 = vpop.f32.mrf.mxu0
        %v2539 = vadd.f32 %v2375, %v2538
        %v2540 = vpop.f32.mrf.mxu0
        %2541 = vdwg.mxu0
        %v2542 = vsel %vm622, %v2539, 0.0
        %2543 = vadd.xlane.f32.xlu0 %v2542
        %v2544 = vpop.xlane.xlu0 %2543
        %v2545 = vmul.f32 %v2544, %v1454
        %v2546 = vmul.f32 %v2539, %v2539
        %v2547 = vsel %vm622, %v2546, 0.0
        %2548 = vadd.xlane.f32.xlu0 %v2547
        %v2549 = vpop.xlane.xlu0 %2548
        %v2550 = vmul.f32 %v2549, %v1454
        %v2551 = vmul.f32 %v2545, %v2545
        %v2552 = vsub.f32 %v2550, %v2551
        %v2553 = vsub.f32 %v2539, %v2545
        %v2554 = vadd.f32 %v2552, 1e-05
        %v2555 = vrsqrt.pop %v2554
        %v2556 = vmul.f32 %v2553, %v2555
        %s2557 = scalar_lea.vmem %s4, 64
        %v2558 = vld [vmem:[%s2557] sm:$0xff]
        %v2559 = vld [vmem:[%s2557 + $0x8] sm:$0xff]
        %v2560 = vld [vmem:[%s2557 + $0x10] sm:$0xff]
        %v2561 = vld [vmem:[%s2557 + $0x18] sm:$0xff]
        %v2562 = vld [vmem:[%s2557 + $0x20] sm:$0xff]
        %v2563 = vld [vmem:[%s2557 + $0x28] sm:$0xff]
        %v2564 = vld [vmem:[%s2557 + $0x30] sm:$0xff]
        %v2565 = vld [vmem:[%s2557 + $0x38] sm:$0xff]
        %s2566 = scalar_lea.vmem %s5, 64
        %v2567 = vld [vmem:[%s2566] sm:$0xff]
        %v2568 = vld [vmem:[%s2566 + $0x8] sm:$0xff]
        %v2569 = vld [vmem:[%s2566 + $0x10] sm:$0xff]
        %v2570 = vld [vmem:[%s2566 + $0x18] sm:$0xff]
        %v2571 = vld [vmem:[%s2566 + $0x20] sm:$0xff]
        %v2572 = vld [vmem:[%s2566 + $0x28] sm:$0xff]
        %v2573 = vld [vmem:[%s2566 + $0x30] sm:$0xff]
        %v2574 = vld [vmem:[%s2566 + $0x38] sm:$0xff]
        %s2575 = scalar_lea.vmem %s6, 64
        %v2576 = vld [vmem:[%s2575] sm:$0xff]
        %v2577 = vld [vmem:[%s2575 + $0x8] sm:$0xff]
        %v2578 = vld [vmem:[%s2575 + $0x10] sm:$0xff]
        %v2579 = vld [vmem:[%s2575 + $0x18] sm:$0xff]
        %v2580 = vld [vmem:[%s2575 + $0x20] sm:$0xff]
        %v2581 = vld [vmem:[%s2575 + $0x28] sm:$0xff]
        %v2582 = vld [vmem:[%s2575 + $0x30] sm:$0xff]
        %v2583 = vld [vmem:[%s2575 + $0x38] sm:$0xff]
        %s2584 = scalar_lea.vmem %s7, 32
        %v2585 = vld [vmem:[%s2584] sm:$0xff]
        %v2586 = vld [vmem:[%s2584 + $0x8] sm:$0xff]
        %v2587 = vld [vmem:[%s2584 + $0x10] sm:$0xff]
        %v2588 = vld [vmem:[%s2584 + $0x18] sm:$0xff]
        %v2590 = vsel %vm622, %v2556, 0
        %2592 = vmatprep.subr.mxu0 0.0
        %2593 = vmatpush1.msra.mxu0 0.0
        %2594 = vmatprep.subr.mxu0 0.0
        %2595 = vmatpush1.msra.mxu0 0.0
        %2596 = vmatprep.subr.mxu0 0.0
        %2597 = vmatpush1.msra.mxu0 0.0
        %2598 = vmatprep.subr.mxu0 0.0
        %2599 = vmatpush1.msra.mxu0 0.0
        %2600 = vmatprep.subr.mxu0 0.0
        %2601 = vmatpush1.msra.mxu0 0.0
        %2602 = vmatprep.subr.mxu0 0.0
        %2603 = vmatpush1.msra.mxu0 0.0
        %2604 = vmatprep.subr.mxu0 0.0
        %2605 = vmatpush1.msra.mxu0 0.0
        %2606 = vmatprep.subr.mxu0 0.0
        %2607 = vmatpush1.msra.mxu0 0.0
        %2608 = vmatprep.subr.mxu0 0.0
        %2609 = vmatpush1.msra.mxu0 0.0
        %2610 = vmatprep.subr.mxu0 0.0
        %2611 = vmatpush1.msra.mxu0 0.0
        %2612 = vmatprep.subr.mxu0 0.0
        %2613 = vmatpush1.msra.mxu0 0.0
        %2614 = vmatprep.subr.mxu0 0.0
        %2615 = vmatpush1.msra.mxu0 0.0
        %2616 = vmatprep.subr.mxu0 0.0
        %2617 = vmatpush1.msra.mxu0 %v2561
        %2618 = vmatprep.subr.mxu0 0.0
        %2619 = vmatpush1.msra.mxu0 %v2560
        %2620 = vmatprep.subr.mxu0 0.0
        %2621 = vmatpush1.msra.mxu0 %v2559
        %2622 = vmatprep.subr.mxu0 0.0
        %2623 = vmatpush1.msra.mxu0 %v2558
        %2624 = vmatprep.subr.mxu0 0.0
        %2625 = vmatpush2.msra.mxu0 0.0
        %2626 = vmatprep.subr.mxu0 0.0
        %2627 = vmatpush2.msra.mxu0 0.0
        %2628 = vmatprep.subr.mxu0 0.0
        %2629 = vmatpush2.msra.mxu0 0.0
        %2630 = vmatprep.subr.mxu0 0.0
        %2631 = vmatpush2.msra.mxu0 0.0
        %2632 = vmatprep.subr.mxu0 0.0
        %2633 = vmatpush2.msra.mxu0 0.0
        %2634 = vmatprep.subr.mxu0 0.0
        %2635 = vmatpush2.msra.mxu0 0.0
        %2636 = vmatprep.subr.mxu0 0.0
        %2637 = vmatpush2.msra.mxu0 0.0
        %2638 = vmatprep.subr.mxu0 0.0
        %2639 = vmatpush2.msra.mxu0 0.0
        %2640 = vmatprep.subr.mxu0 0.0
        %2641 = vmatpush2.msra.mxu0 0.0
        %2642 = vmatprep.subr.mxu0 0.0
        %2643 = vmatpush2.msra.mxu0 0.0
        %2644 = vmatprep.subr.mxu0 0.0
        %2645 = vmatpush2.msra.mxu0 0.0
        %2646 = vmatprep.subr.mxu0 0.0
        %2647 = vmatpush2.msra.mxu0 0.0
        %2648 = vmatprep.subr.mxu0 0.0
        %2649 = vmatpush2.msra.mxu0 0.0
        %2650 = vmatprep.subr.mxu0 0.0
        %2651 = vmatpush2.msra.mxu0 0.0
        %2652 = vmatprep.subr.mxu0 0.0
        %2653 = vmatpush2.msra.mxu0 0.0
        %2654 = vmatprep.subr.mxu0 0.0
        %2655 = vmatpush2.msra.mxu0 0.0
        %2656 = vmatprep.mubr.f32.mxu0 0.0
        %2657 = vmatmul.mubr.f32.gmra.mxu0 %v2590
        %v2658 = vpop.f32.mrf.mxu0
        %v2659 = vadd.f32 0.0, %v2658
        %v2660 = vpop.f32.mrf.mxu0
        %2661 = vdwg.mxu0
        %2662 = vmatprep.subr.mxu0 0.0
        %2663 = vmatpush1.msra.mxu0 0.0
        %2664 = vmatprep.subr.mxu0 0.0
        %2665 = vmatpush1.msra.mxu0 0.0
        %2666 = vmatprep.subr.mxu0 0.0
        %2667 = vmatpush1.msra.mxu0 0.0
        %2668 = vmatprep.subr.mxu0 0.0
        %2669 = vmatpush1.msra.mxu0 0.0
        %2670 = vmatprep.subr.mxu0 0.0
        %2671 = vmatpush1.msra.mxu0 0.0
        %2672 = vmatprep.subr.mxu0 0.0
        %2673 = vmatpush1.msra.mxu0 0.0
        %2674 = vmatprep.subr.mxu0 0.0
        %2675 = vmatpush1.msra.mxu0 0.0
        %2676 = vmatprep.subr.mxu0 0.0
        %2677 = vmatpush1.msra.mxu0 0.0
        %2678 = vmatprep.subr.mxu0 0.0
        %2679 = vmatpush1.msra.mxu0 0.0
        %2680 = vmatprep.subr.mxu0 0.0
        %2681 = vmatpush1.msra.mxu0 0.0
        %2682 = vmatprep.subr.mxu0 0.0
        %2683 = vmatpush1.msra.mxu0 0.0
        %2684 = vmatprep.subr.mxu0 0.0
        %2685 = vmatpush1.msra.mxu0 0.0
        %2686 = vmatprep.subr.mxu0 0.0
        %2687 = vmatpush1.msra.mxu0 %v2565
        %2688 = vmatprep.subr.mxu0 0.0
        %2689 = vmatpush1.msra.mxu0 %v2564
        %2690 = vmatprep.subr.mxu0 0.0
        %2691 = vmatpush1.msra.mxu0 %v2563
        %2692 = vmatprep.subr.mxu0 0.0
        %2693 = vmatpush1.msra.mxu0 %v2562
        %2694 = vmatprep.subr.mxu0 0.0
        %2695 = vmatpush2.msra.mxu0 0.0
        %2696 = vmatprep.subr.mxu0 0.0
        %2697 = vmatpush2.msra.mxu0 0.0
        %2698 = vmatprep.subr.mxu0 0.0
        %2699 = vmatpush2.msra.mxu0 0.0
        %2700 = vmatprep.subr.mxu0 0.0
        %2701 = vmatpush2.msra.mxu0 0.0
        %2702 = vmatprep.subr.mxu0 0.0
        %2703 = vmatpush2.msra.mxu0 0.0
        %2704 = vmatprep.subr.mxu0 0.0
        %2705 = vmatpush2.msra.mxu0 0.0
        %2706 = vmatprep.subr.mxu0 0.0
        %2707 = vmatpush2.msra.mxu0 0.0
        %2708 = vmatprep.subr.mxu0 0.0
        %2709 = vmatpush2.msra.mxu0 0.0
        %2710 = vmatprep.subr.mxu0 0.0
        %2711 = vmatpush2.msra.mxu0 0.0
        %2712 = vmatprep.subr.mxu0 0.0
        %2713 = vmatpush2.msra.mxu0 0.0
        %2714 = vmatprep.subr.mxu0 0.0
        %2715 = vmatpush2.msra.mxu0 0.0
        %2716 = vmatprep.subr.mxu0 0.0
        %2717 = vmatpush2.msra.mxu0 0.0
        %2718 = vmatprep.subr.mxu0 0.0
        %2719 = vmatpush2.msra.mxu0 0.0
        %2720 = vmatprep.subr.mxu0 0.0
        %2721 = vmatpush2.msra.mxu0 0.0
        %2722 = vmatprep.subr.mxu0 0.0
        %2723 = vmatpush2.msra.mxu0 0.0
        %2724 = vmatprep.subr.mxu0 0.0
        %2725 = vmatpush2.msra.mxu0 0.0
        %2726 = vmatprep.mubr.f32.mxu0 0.0
        %2727 = vmatmul.mubr.f32.gmra.mxu0 %v2590
        %v2728 = vpop.f32.mrf.mxu0
        %v2729 = vadd.f32 0.0, %v2728
        %v2730 = vpop.f32.mrf.mxu0
        %2731 = vdwg.mxu0
        %2732 = vmatprep.subr.mxu0 0.0
        %2733 = vmatpush1.msra.mxu0 0.0
        %2734 = vmatprep.subr.mxu0 0.0
        %2735 = vmatpush1.msra.mxu0 0.0
        %2736 = vmatprep.subr.mxu0 0.0
        %2737 = vmatpush1.msra.mxu0 0.0
        %2738 = vmatprep.subr.mxu0 0.0
        %2739 = vmatpush1.msra.mxu0 0.0
        %2740 = vmatprep.subr.mxu0 0.0
        %2741 = vmatpush1.msra.mxu0 0.0
        %2742 = vmatprep.subr.mxu0 0.0
        %2743 = vmatpush1.msra.mxu0 0.0
        %2744 = vmatprep.subr.mxu0 0.0
        %2745 = vmatpush1.msra.mxu0 0.0
        %2746 = vmatprep.subr.mxu0 0.0
        %2747 = vmatpush1.msra.mxu0 0.0
        %2748 = vmatprep.subr.mxu0 0.0
        %2749 = vmatpush1.msra.mxu0 0.0
        %2750 = vmatprep.subr.mxu0 0.0
        %2751 = vmatpush1.msra.mxu0 0.0
        %2752 = vmatprep.subr.mxu0 0.0
        %2753 = vmatpush1.msra.mxu0 0.0
        %2754 = vmatprep.subr.mxu0 0.0
        %2755 = vmatpush1.msra.mxu0 0.0
        %2756 = vmatprep.subr.mxu0 0.0
        %2757 = vmatpush1.msra.mxu0 %v2570
        %2758 = vmatprep.subr.mxu0 0.0
        %2759 = vmatpush1.msra.mxu0 %v2569
        %2760 = vmatprep.subr.mxu0 0.0
        %2761 = vmatpush1.msra.mxu0 %v2568
        %2762 = vmatprep.subr.mxu0 0.0
        %2763 = vmatpush1.msra.mxu0 %v2567
        %2764 = vmatprep.subr.mxu0 0.0
        %2765 = vmatpush2.msra.mxu0 0.0
        %2766 = vmatprep.subr.mxu0 0.0
        %2767 = vmatpush2.msra.mxu0 0.0
        %2768 = vmatprep.subr.mxu0 0.0
        %2769 = vmatpush2.msra.mxu0 0.0
        %2770 = vmatprep.subr.mxu0 0.0
        %2771 = vmatpush2.msra.mxu0 0.0
        %2772 = vmatprep.subr.mxu0 0.0
        %2773 = vmatpush2.msra.mxu0 0.0
        %2774 = vmatprep.subr.mxu0 0.0
        %2775 = vmatpush2.msra.mxu0 0.0
        %2776 = vmatprep.subr.mxu0 0.0
        %2777 = vmatpush2.msra.mxu0 0.0
        %2778 = vmatprep.subr.mxu0 0.0
        %2779 = vmatpush2.msra.mxu0 0.0
        %2780 = vmatprep.subr.mxu0 0.0
        %2781 = vmatpush2.msra.mxu0 0.0
        %2782 = vmatprep.subr.mxu0 0.0
        %2783 = vmatpush2.msra.mxu0 0.0
        %2784 = vmatprep.subr.mxu0 0.0
        %2785 = vmatpush2.msra.mxu0 0.0
        %2786 = vmatprep.subr.mxu0 0.0
        %2787 = vmatpush2.msra.mxu0 0.0
        %2788 = vmatprep.subr.mxu0 0.0
        %2789 = vmatpush2.msra.mxu0 0.0
        %2790 = vmatprep.subr.mxu0 0.0
        %2791 = vmatpush2.msra.mxu0 0.0
        %2792 = vmatprep.subr.mxu0 0.0
        %2793 = vmatpush2.msra.mxu0 0.0
        %2794 = vmatprep.subr.mxu0 0.0
        %2795 = vmatpush2.msra.mxu0 0.0
        %2796 = vmatprep.mubr.f32.mxu0 0.0
        %2797 = vmatmul.mubr.f32.gmra.mxu0 %v2590
        %v2798 = vpop.f32.mrf.mxu0
        %v2799 = vadd.f32 0.0, %v2798
        %v2800 = vpop.f32.mrf.mxu0
        %2801 = vdwg.mxu0
        %2802 = vmatprep.subr.mxu0 0.0
        %2803 = vmatpush1.msra.mxu0 0.0
        %2804 = vmatprep.subr.mxu0 0.0
        %2805 = vmatpush1.msra.mxu0 0.0
        %2806 = vmatprep.subr.mxu0 0.0
        %2807 = vmatpush1.msra.mxu0 0.0
        %2808 = vmatprep.subr.mxu0 0.0
        %2809 = vmatpush1.msra.mxu0 0.0
        %2810 = vmatprep.subr.mxu0 0.0
        %2811 = vmatpush1.msra.mxu0 0.0
        %2812 = vmatprep.subr.mxu0 0.0
        %2813 = vmatpush1.msra.mxu0 0.0
        %2814 = vmatprep.subr.mxu0 0.0
        %2815 = vmatpush1.msra.mxu0 0.0
        %2816 = vmatprep.subr.mxu0 0.0
        %2817 = vmatpush1.msra.mxu0 0.0
        %2818 = vmatprep.subr.mxu0 0.0
        %2819 = vmatpush1.msra.mxu0 0.0
        %2820 = vmatprep.subr.mxu0 0.0
        %2821 = vmatpush1.msra.mxu0 0.0
        %2822 = vmatprep.subr.mxu0 0.0
        %2823 = vmatpush1.msra.mxu0 0.0
        %2824 = vmatprep.subr.mxu0 0.0
        %2825 = vmatpush1.msra.mxu0 0.0
        %2826 = vmatprep.subr.mxu0 0.0
        %2827 = vmatpush1.msra.mxu0 %v2574
        %2828 = vmatprep.subr.mxu0 0.0
        %2829 = vmatpush1.msra.mxu0 %v2573
        %2830 = vmatprep.subr.mxu0 0.0
        %2831 = vmatpush1.msra.mxu0 %v2572
        %2832 = vmatprep.subr.mxu0 0.0
        %2833 = vmatpush1.msra.mxu0 %v2571
        %2834 = vmatprep.subr.mxu0 0.0
        %2835 = vmatpush2.msra.mxu0 0.0
        %2836 = vmatprep.subr.mxu0 0.0
        %2837 = vmatpush2.msra.mxu0 0.0
        %2838 = vmatprep.subr.mxu0 0.0
        %2839 = vmatpush2.msra.mxu0 0.0
        %2840 = vmatprep.subr.mxu0 0.0
        %2841 = vmatpush2.msra.mxu0 0.0
        %2842 = vmatprep.subr.mxu0 0.0
        %2843 = vmatpush2.msra.mxu0 0.0
        %2844 = vmatprep.subr.mxu0 0.0
        %2845 = vmatpush2.msra.mxu0 0.0
        %2846 = vmatprep.subr.mxu0 0.0
        %2847 = vmatpush2.msra.mxu0 0.0
        %2848 = vmatprep.subr.mxu0 0.0
        %2849 = vmatpush2.msra.mxu0 0.0
        %2850 = vmatprep.subr.mxu0 0.0
        %2851 = vmatpush2.msra.mxu0 0.0
        %2852 = vmatprep.subr.mxu0 0.0
        %2853 = vmatpush2.msra.mxu0 0.0
        %2854 = vmatprep.subr.mxu0 0.0
        %2855 = vmatpush2.msra.mxu0 0.0
        %2856 = vmatprep.subr.mxu0 0.0
        %2857 = vmatpush2.msra.mxu0 0.0
        %2858 = vmatprep.subr.mxu0 0.0
        %2859 = vmatpush2.msra.mxu0 0.0
        %2860 = vmatprep.subr.mxu0 0.0
        %2861 = vmatpush2.msra.mxu0 0.0
        %2862 = vmatprep.subr.mxu0 0.0
        %2863 = vmatpush2.msra.mxu0 0.0
        %2864 = vmatprep.subr.mxu0 0.0
        %2865 = vmatpush2.msra.mxu0 0.0
        %2866 = vmatprep.mubr.f32.mxu0 0.0
        %2867 = vmatmul.mubr.f32.gmra.mxu0 %v2590
        %v2868 = vpop.f32.mrf.mxu0
        %v2869 = vadd.f32 0.0, %v2868
        %v2870 = vpop.f32.mrf.mxu0
        %2871 = vdwg.mxu0
        %2872 = vmatprep.subr.mxu0 0.0
        %2873 = vmatpush1.msra.mxu0 0.0
        %2874 = vmatprep.subr.mxu0 0.0
        %2875 = vmatpush1.msra.mxu0 0.0
        %2876 = vmatprep.subr.mxu0 0.0
        %2877 = vmatpush1.msra.mxu0 0.0
        %2878 = vmatprep.subr.mxu0 0.0
        %2879 = vmatpush1.msra.mxu0 0.0
        %2880 = vmatprep.subr.mxu0 0.0
        %2881 = vmatpush1.msra.mxu0 0.0
        %2882 = vmatprep.subr.mxu0 0.0
        %2883 = vmatpush1.msra.mxu0 0.0
        %2884 = vmatprep.subr.mxu0 0.0
        %2885 = vmatpush1.msra.mxu0 0.0
        %2886 = vmatprep.subr.mxu0 0.0
        %2887 = vmatpush1.msra.mxu0 0.0
        %2888 = vmatprep.subr.mxu0 0.0
        %2889 = vmatpush1.msra.mxu0 0.0
        %2890 = vmatprep.subr.mxu0 0.0
        %2891 = vmatpush1.msra.mxu0 0.0
        %2892 = vmatprep.subr.mxu0 0.0
        %2893 = vmatpush1.msra.mxu0 0.0
        %2894 = vmatprep.subr.mxu0 0.0
        %2895 = vmatpush1.msra.mxu0 0.0
        %2896 = vmatprep.subr.mxu0 0.0
        %2897 = vmatpush1.msra.mxu0 %v2579
        %2898 = vmatprep.subr.mxu0 0.0
        %2899 = vmatpush1.msra.mxu0 %v2578
        %2900 = vmatprep.subr.mxu0 0.0
        %2901 = vmatpush1.msra.mxu0 %v2577
        %2902 = vmatprep.subr.mxu0 0.0
        %2903 = vmatpush1.msra.mxu0 %v2576
        %2904 = vmatprep.subr.mxu0 0.0
        %2905 = vmatpush2.msra.mxu0 0.0
        %2906 = vmatprep.subr.mxu0 0.0
        %2907 = vmatpush2.msra.mxu0 0.0
        %2908 = vmatprep.subr.mxu0 0.0
        %2909 = vmatpush2.msra.mxu0 0.0
        %2910 = vmatprep.subr.mxu0 0.0
        %2911 = vmatpush2.msra.mxu0 0.0
        %2912 = vmatprep.subr.mxu0 0.0
        %2913 = vmatpush2.msra.mxu0 0.0
        %2914 = vmatprep.subr.mxu0 0.0
        %2915 = vmatpush2.msra.mxu0 0.0
        %2916 = vmatprep.subr.mxu0 0.0
        %2917 = vmatpush2.msra.mxu0 0.0
        %2918 = vmatprep.subr.mxu0 0.0
        %2919 = vmatpush2.msra.mxu0 0.0
        %2920 = vmatprep.subr.mxu0 0.0
        %2921 = vmatpush2.msra.mxu0 0.0
        %2922 = vmatprep.subr.mxu0 0.0
        %2923 = vmatpush2.msra.mxu0 0.0
        %2924 = vmatprep.subr.mxu0 0.0
        %2925 = vmatpush2.msra.mxu0 0.0
        %2926 = vmatprep.subr.mxu0 0.0
        %2927 = vmatpush2.msra.mxu0 0.0
        %2928 = vmatprep.subr.mxu0 0.0
        %2929 = vmatpush2.msra.mxu0 0.0
        %2930 = vmatprep.subr.mxu0 0.0
        %2931 = vmatpush2.msra.mxu0 0.0
        %2932 = vmatprep.subr.mxu0 0.0
        %2933 = vmatpush2.msra.mxu0 0.0
        %2934 = vmatprep.subr.mxu0 0.0
        %2935 = vmatpush2.msra.mxu0 0.0
        %2936 = vmatprep.mubr.f32.mxu0 0.0
        %2937 = vmatmul.mubr.f32.gmra.mxu0 %v2590
        %v2938 = vpop.f32.mrf.mxu0
        %v2939 = vadd.f32 0.0, %v2938
        %v2940 = vpop.f32.mrf.mxu0
        %2941 = vdwg.mxu0
        %2942 = vmatprep.subr.mxu0 0.0
        %2943 = vmatpush1.msra.mxu0 0.0
        %2944 = vmatprep.subr.mxu0 0.0
        %2945 = vmatpush1.msra.mxu0 0.0
        %2946 = vmatprep.subr.mxu0 0.0
        %2947 = vmatpush1.msra.mxu0 0.0
        %2948 = vmatprep.subr.mxu0 0.0
        %2949 = vmatpush1.msra.mxu0 0.0
        %2950 = vmatprep.subr.mxu0 0.0
        %2951 = vmatpush1.msra.mxu0 0.0
        %2952 = vmatprep.subr.mxu0 0.0
        %2953 = vmatpush1.msra.mxu0 0.0
        %2954 = vmatprep.subr.mxu0 0.0
        %2955 = vmatpush1.msra.mxu0 0.0
        %2956 = vmatprep.subr.mxu0 0.0
        %2957 = vmatpush1.msra.mxu0 0.0
        %2958 = vmatprep.subr.mxu0 0.0
        %2959 = vmatpush1.msra.mxu0 0.0
        %2960 = vmatprep.subr.mxu0 0.0
        %2961 = vmatpush1.msra.mxu0 0.0
        %2962 = vmatprep.subr.mxu0 0.0
        %2963 = vmatpush1.msra.mxu0 0.0
        %2964 = vmatprep.subr.mxu0 0.0
        %2965 = vmatpush1.msra.mxu0 0.0
        %2966 = vmatprep.subr.mxu0 0.0
        %2967 = vmatpush1.msra.mxu0 %v2583
        %2968 = vmatprep.subr.mxu0 0.0
        %2969 = vmatpush1.msra.mxu0 %v2582
        %2970 = vmatprep.subr.mxu0 0.0
        %2971 = vmatpush1.msra.mxu0 %v2581
        %2972 = vmatprep.subr.mxu0 0.0
        %2973 = vmatpush1.msra.mxu0 %v2580
        %2974 = vmatprep.subr.mxu0 0.0
        %2975 = vmatpush2.msra.mxu0 0.0
        %2976 = vmatprep.subr.mxu0 0.0
        %2977 = vmatpush2.msra.mxu0 0.0
        %2978 = vmatprep.subr.mxu0 0.0
        %2979 = vmatpush2.msra.mxu0 0.0
        %2980 = vmatprep.subr.mxu0 0.0
        %2981 = vmatpush2.msra.mxu0 0.0
        %2982 = vmatprep.subr.mxu0 0.0
        %2983 = vmatpush2.msra.mxu0 0.0
        %2984 = vmatprep.subr.mxu0 0.0
        %2985 = vmatpush2.msra.mxu0 0.0
        %2986 = vmatprep.subr.mxu0 0.0
        %2987 = vmatpush2.msra.mxu0 0.0
        %2988 = vmatprep.subr.mxu0 0.0
        %2989 = vmatpush2.msra.mxu0 0.0
        %2990 = vmatprep.subr.mxu0 0.0
        %2991 = vmatpush2.msra.mxu0 0.0
        %2992 = vmatprep.subr.mxu0 0.0
        %2993 = vmatpush2.msra.mxu0 0.0
        %2994 = vmatprep.subr.mxu0 0.0
        %2995 = vmatpush2.msra.mxu0 0.0
        %2996 = vmatprep.subr.mxu0 0.0
        %2997 = vmatpush2.msra.mxu0 0.0
        %2998 = vmatprep.subr.mxu0 0.0
        %2999 = vmatpush2.msra.mxu0 0.0
        %3000 = vmatprep.subr.mxu0 0.0
        %3001 = vmatpush2.msra.mxu0 0.0
        %3002 = vmatprep.subr.mxu0 0.0
        %3003 = vmatpush2.msra.mxu0 0.0
        %3004 = vmatprep.subr.mxu0 0.0
        %3005 = vmatpush2.msra.mxu0 0.0
        %3006 = vmatprep.mubr.f32.mxu0 0.0
        %3007 = vmatmul.mubr.f32.gmra.mxu0 %v2590
        %v3008 = vpop.f32.mrf.mxu0
        %v3009 = vadd.f32 0.0, %v3008
        %v3010 = vpop.f32.mrf.mxu0
        %3011 = vdwg.mxu0
        %v3013 = vsel %vm1046, %v2659, 0
        %v3016 = vsel %vm1046, %v2799, 0
        %3018 = vmatprep.subr.mxu0 0.0
        %3019 = vmatpush1.xpose.msra.mxu0 0.0
        %3020 = vmatprep.subr.mxu0 0.0
        %3021 = vmatpush1.xpose.msra.mxu0 0.0
        %3022 = vmatprep.subr.mxu0 0.0
        %3023 = vmatpush1.xpose.msra.mxu0 0.0
        %3024 = vmatprep.subr.mxu0 0.0
        %3025 = vmatpush1.xpose.msra.mxu0 0.0
        %3026 = vmatprep.subr.mxu0 0.0
        %3027 = vmatpush1.xpose.msra.mxu0 0.0
        %3028 = vmatprep.subr.mxu0 0.0
        %3029 = vmatpush1.xpose.msra.mxu0 0.0
        %3030 = vmatprep.subr.mxu0 0.0
        %3031 = vmatpush1.xpose.msra.mxu0 0.0
        %3032 = vmatprep.subr.mxu0 0.0
        %3033 = vmatpush1.xpose.msra.mxu0 0.0
        %3034 = vmatprep.subr.mxu0 0.0
        %3035 = vmatpush1.xpose.msra.mxu0 0.0
        %3036 = vmatprep.subr.mxu0 0.0
        %3037 = vmatpush1.xpose.msra.mxu0 0.0
        %3038 = vmatprep.subr.mxu0 0.0
        %3039 = vmatpush1.xpose.msra.mxu0 0.0
        %3040 = vmatprep.subr.mxu0 0.0
        %3041 = vmatpush1.xpose.msra.mxu0 0.0
        %3042 = vmatprep.subr.mxu0 0.0
        %3043 = vmatpush1.xpose.msra.mxu0 0.0
        %3044 = vmatprep.subr.mxu0 0.0
        %3045 = vmatpush1.xpose.msra.mxu0 0.0
        %3046 = vmatprep.subr.mxu0 0.0
        %3047 = vmatpush1.xpose.msra.mxu0 0.0
        %3048 = vmatprep.subr.mxu0 0.0
        %3049 = vmatpush1.xpose.msra.mxu0 %v3016
        %3050 = vmatprep.subr.mxu0 0.0
        %3051 = vmatpush2.xpose.msra.mxu0 0.0
        %3052 = vmatprep.subr.mxu0 0.0
        %3053 = vmatpush2.xpose.msra.mxu0 0.0
        %3054 = vmatprep.subr.mxu0 0.0
        %3055 = vmatpush2.xpose.msra.mxu0 0.0
        %3056 = vmatprep.subr.mxu0 0.0
        %3057 = vmatpush2.xpose.msra.mxu0 0.0
        %3058 = vmatprep.subr.mxu0 0.0
        %3059 = vmatpush2.xpose.msra.mxu0 0.0
        %3060 = vmatprep.subr.mxu0 0.0
        %3061 = vmatpush2.xpose.msra.mxu0 0.0
        %3062 = vmatprep.subr.mxu0 0.0
        %3063 = vmatpush2.xpose.msra.mxu0 0.0
        %3064 = vmatprep.subr.mxu0 0.0
        %3065 = vmatpush2.xpose.msra.mxu0 0.0
        %3066 = vmatprep.subr.mxu0 0.0
        %3067 = vmatpush2.xpose.msra.mxu0 0.0
        %3068 = vmatprep.subr.mxu0 0.0
        %3069 = vmatpush2.xpose.msra.mxu0 0.0
        %3070 = vmatprep.subr.mxu0 0.0
        %3071 = vmatpush2.xpose.msra.mxu0 0.0
        %3072 = vmatprep.subr.mxu0 0.0
        %3073 = vmatpush2.xpose.msra.mxu0 0.0
        %3074 = vmatprep.subr.mxu0 0.0
        %3075 = vmatpush2.xpose.msra.mxu0 0.0
        %3076 = vmatprep.subr.mxu0 0.0
        %3077 = vmatpush2.xpose.msra.mxu0 0.0
        %3078 = vmatprep.subr.mxu0 0.0
        %3079 = vmatpush2.xpose.msra.mxu0 0.0
        %3080 = vmatprep.subr.mxu0 0.0
        %3081 = vmatpush2.xpose.msra.mxu0 0.0
        %3082 = vmatprep.mubr.f32.mxu0 0.0
        %3083 = vmatmul.mubr.f32.gmra.mxu0 %v3013
        %v3084 = vpop.f32.mrf.mxu0
        %v3085 = vadd.f32 0.0, %v3084
        %v3086 = vpop.f32.mrf.mxu0
        %3087 = vdwg.mxu0
        %v3089 = vsel %vm1046, %v2729, 0
        %v3092 = vsel %vm1046, %v2869, 0
        %3094 = vmatprep.subr.mxu0 0.0
        %3095 = vmatpush1.xpose.msra.mxu0 0.0
        %3096 = vmatprep.subr.mxu0 0.0
        %3097 = vmatpush1.xpose.msra.mxu0 0.0
        %3098 = vmatprep.subr.mxu0 0.0
        %3099 = vmatpush1.xpose.msra.mxu0 0.0
        %3100 = vmatprep.subr.mxu0 0.0
        %3101 = vmatpush1.xpose.msra.mxu0 0.0
        %3102 = vmatprep.subr.mxu0 0.0
        %3103 = vmatpush1.xpose.msra.mxu0 0.0
        %3104 = vmatprep.subr.mxu0 0.0
        %3105 = vmatpush1.xpose.msra.mxu0 0.0
        %3106 = vmatprep.subr.mxu0 0.0
        %3107 = vmatpush1.xpose.msra.mxu0 0.0
        %3108 = vmatprep.subr.mxu0 0.0
        %3109 = vmatpush1.xpose.msra.mxu0 0.0
        %3110 = vmatprep.subr.mxu0 0.0
        %3111 = vmatpush1.xpose.msra.mxu0 0.0
        %3112 = vmatprep.subr.mxu0 0.0
        %3113 = vmatpush1.xpose.msra.mxu0 0.0
        %3114 = vmatprep.subr.mxu0 0.0
        %3115 = vmatpush1.xpose.msra.mxu0 0.0
        %3116 = vmatprep.subr.mxu0 0.0
        %3117 = vmatpush1.xpose.msra.mxu0 0.0
        %3118 = vmatprep.subr.mxu0 0.0
        %3119 = vmatpush1.xpose.msra.mxu0 0.0
        %3120 = vmatprep.subr.mxu0 0.0
        %3121 = vmatpush1.xpose.msra.mxu0 0.0
        %3122 = vmatprep.subr.mxu0 0.0
        %3123 = vmatpush1.xpose.msra.mxu0 0.0
        %3124 = vmatprep.subr.mxu0 0.0
        %3125 = vmatpush1.xpose.msra.mxu0 %v3092
        %3126 = vmatprep.subr.mxu0 0.0
        %3127 = vmatpush2.xpose.msra.mxu0 0.0
        %3128 = vmatprep.subr.mxu0 0.0
        %3129 = vmatpush2.xpose.msra.mxu0 0.0
        %3130 = vmatprep.subr.mxu0 0.0
        %3131 = vmatpush2.xpose.msra.mxu0 0.0
        %3132 = vmatprep.subr.mxu0 0.0
        %3133 = vmatpush2.xpose.msra.mxu0 0.0
        %3134 = vmatprep.subr.mxu0 0.0
        %3135 = vmatpush2.xpose.msra.mxu0 0.0
        %3136 = vmatprep.subr.mxu0 0.0
        %3137 = vmatpush2.xpose.msra.mxu0 0.0
        %3138 = vmatprep.subr.mxu0 0.0
        %3139 = vmatpush2.xpose.msra.mxu0 0.0
        %3140 = vmatprep.subr.mxu0 0.0
        %3141 = vmatpush2.xpose.msra.mxu0 0.0
        %3142 = vmatprep.subr.mxu0 0.0
        %3143 = vmatpush2.xpose.msra.mxu0 0.0
        %3144 = vmatprep.subr.mxu0 0.0
        %3145 = vmatpush2.xpose.msra.mxu0 0.0
        %3146 = vmatprep.subr.mxu0 0.0
        %3147 = vmatpush2.xpose.msra.mxu0 0.0
        %3148 = vmatprep.subr.mxu0 0.0
        %3149 = vmatpush2.xpose.msra.mxu0 0.0
        %3150 = vmatprep.subr.mxu0 0.0
        %3151 = vmatpush2.xpose.msra.mxu0 0.0
        %3152 = vmatprep.subr.mxu0 0.0
        %3153 = vmatpush2.xpose.msra.mxu0 0.0
        %3154 = vmatprep.subr.mxu0 0.0
        %3155 = vmatpush2.xpose.msra.mxu0 0.0
        %3156 = vmatprep.subr.mxu0 0.0
        %3157 = vmatpush2.xpose.msra.mxu0 0.0
        %3158 = vmatprep.mubr.f32.mxu0 0.0
        %3159 = vmatmul.mubr.f32.gmra.mxu0 %v3089
        %v3160 = vpop.f32.mrf.mxu0
        %v3161 = vadd.f32 0.0, %v3160
        %v3162 = vpop.f32.mrf.mxu0
        %3163 = vdwg.mxu0
        %v3164 = vsel %vm1201, -1e+09, %v3085
        %v3165 = vsel %vm1201, -1e+09, %v3161
        %v3166 = vsel %vm1204, %v3164, -inf
        %3167 = vmax.xlane.f32.xlu0 %v3166
        %v3168 = vpop.xlane.xlu0 %3167
        %v3169 = vsel %vm1204, %v3165, -inf
        %3170 = vmax.xlane.f32.xlu0 %v3169
        %v3171 = vpop.xlane.xlu0 %3170
        %v3172 = vsub.f32 %v3164, %v3168
        %v3173 = vsub.f32 %v3165, %v3171
        %v3174 = vmul.f32 %v3172, 1.442695
        %v3175 = vpow.pop %v3174
        %v3176 = vmul.f32 %v3173, 1.442695
        %v3177 = vpow.pop %v3176
        %v3178 = vsel %vm1204, %v3175, 0.0
        %3179 = vadd.xlane.f32.xlu0 %v3178
        %v3180 = vpop.xlane.xlu0 %3179
        %v3181 = vsel %vm1204, %v3177, 0.0
        %3182 = vadd.xlane.f32.xlu0 %v3181
        %v3183 = vpop.xlane.xlu0 %3182
        %v3184 = vrcp.pop %v3180
        %v3185 = vrcp.pop %v3183
        %v3186 = vmul.f32 %v3175, %v3184
        %v3187 = vmul.f32 %v3177, %v3185
        %v3189 = vsel %vm1204, %v3186, 0
        %3191 = vmatprep.subr.mxu0 0.0
        %3192 = vmatpush1.msra.mxu0 0.0
        %3193 = vmatprep.subr.mxu0 0.0
        %3194 = vmatpush1.msra.mxu0 0.0
        %3195 = vmatprep.subr.mxu0 0.0
        %3196 = vmatpush1.msra.mxu0 0.0
        %3197 = vmatprep.subr.mxu0 0.0
        %3198 = vmatpush1.msra.mxu0 0.0
        %3199 = vmatprep.subr.mxu0 0.0
        %3200 = vmatpush1.msra.mxu0 0.0
        %3201 = vmatprep.subr.mxu0 0.0
        %3202 = vmatpush1.msra.mxu0 0.0
        %3203 = vmatprep.subr.mxu0 0.0
        %3204 = vmatpush1.msra.mxu0 0.0
        %3205 = vmatprep.subr.mxu0 0.0
        %3206 = vmatpush1.msra.mxu0 0.0
        %3207 = vmatprep.subr.mxu0 0.0
        %3208 = vmatpush1.msra.mxu0 0.0
        %3209 = vmatprep.subr.mxu0 0.0
        %3210 = vmatpush1.msra.mxu0 0.0
        %3211 = vmatprep.subr.mxu0 0.0
        %3212 = vmatpush1.msra.mxu0 0.0
        %3213 = vmatprep.subr.mxu0 0.0
        %3214 = vmatpush1.msra.mxu0 0.0
        %3215 = vmatprep.subr.mxu0 0.0
        %3216 = vmatpush1.msra.mxu0 0.0
        %3217 = vmatprep.subr.mxu0 0.0
        %3218 = vmatpush1.msra.mxu0 0.0
        %3219 = vmatprep.subr.mxu0 0.0
        %3220 = vmatpush1.msra.mxu0 0.0
        %3221 = vmatprep.subr.mxu0 0.0
        %3222 = vmatpush1.msra.mxu0 %v2939
        %3223 = vmatprep.subr.mxu0 0.0
        %3224 = vmatpush2.msra.mxu0 0.0
        %3225 = vmatprep.subr.mxu0 0.0
        %3226 = vmatpush2.msra.mxu0 0.0
        %3227 = vmatprep.subr.mxu0 0.0
        %3228 = vmatpush2.msra.mxu0 0.0
        %3229 = vmatprep.subr.mxu0 0.0
        %3230 = vmatpush2.msra.mxu0 0.0
        %3231 = vmatprep.subr.mxu0 0.0
        %3232 = vmatpush2.msra.mxu0 0.0
        %3233 = vmatprep.subr.mxu0 0.0
        %3234 = vmatpush2.msra.mxu0 0.0
        %3235 = vmatprep.subr.mxu0 0.0
        %3236 = vmatpush2.msra.mxu0 0.0
        %3237 = vmatprep.subr.mxu0 0.0
        %3238 = vmatpush2.msra.mxu0 0.0
        %3239 = vmatprep.subr.mxu0 0.0
        %3240 = vmatpush2.msra.mxu0 0.0
        %3241 = vmatprep.subr.mxu0 0.0
        %3242 = vmatpush2.msra.mxu0 0.0
        %3243 = vmatprep.subr.mxu0 0.0
        %3244 = vmatpush2.msra.mxu0 0.0
        %3245 = vmatprep.subr.mxu0 0.0
        %3246 = vmatpush2.msra.mxu0 0.0
        %3247 = vmatprep.subr.mxu0 0.0
        %3248 = vmatpush2.msra.mxu0 0.0
        %3249 = vmatprep.subr.mxu0 0.0
        %3250 = vmatpush2.msra.mxu0 0.0
        %3251 = vmatprep.subr.mxu0 0.0
        %3252 = vmatpush2.msra.mxu0 0.0
        %3253 = vmatprep.subr.mxu0 0.0
        %3254 = vmatpush2.msra.mxu0 0.0
        %3255 = vmatprep.mubr.f32.mxu0 0.0
        %3256 = vmatmul.mubr.f32.gmra.mxu0 %v3189
        %v3257 = vpop.f32.mrf.mxu0
        %v3258 = vadd.f32 0.0, %v3257
        %v3259 = vpop.f32.mrf.mxu0
        %3260 = vdwg.mxu0
        %v3262 = vsel %vm1204, %v3187, 0
        %3264 = vmatprep.subr.mxu0 0.0
        %3265 = vmatpush1.msra.mxu0 0.0
        %3266 = vmatprep.subr.mxu0 0.0
        %3267 = vmatpush1.msra.mxu0 0.0
        %3268 = vmatprep.subr.mxu0 0.0
        %3269 = vmatpush1.msra.mxu0 0.0
        %3270 = vmatprep.subr.mxu0 0.0
        %3271 = vmatpush1.msra.mxu0 0.0
        %3272 = vmatprep.subr.mxu0 0.0
        %3273 = vmatpush1.msra.mxu0 0.0
        %3274 = vmatprep.subr.mxu0 0.0
        %3275 = vmatpush1.msra.mxu0 0.0
        %3276 = vmatprep.subr.mxu0 0.0
        %3277 = vmatpush1.msra.mxu0 0.0
        %3278 = vmatprep.subr.mxu0 0.0
        %3279 = vmatpush1.msra.mxu0 0.0
        %3280 = vmatprep.subr.mxu0 0.0
        %3281 = vmatpush1.msra.mxu0 0.0
        %3282 = vmatprep.subr.mxu0 0.0
        %3283 = vmatpush1.msra.mxu0 0.0
        %3284 = vmatprep.subr.mxu0 0.0
        %3285 = vmatpush1.msra.mxu0 0.0
        %3286 = vmatprep.subr.mxu0 0.0
        %3287 = vmatpush1.msra.mxu0 0.0
        %3288 = vmatprep.subr.mxu0 0.0
        %3289 = vmatpush1.msra.mxu0 0.0
        %3290 = vmatprep.subr.mxu0 0.0
        %3291 = vmatpush1.msra.mxu0 0.0
        %3292 = vmatprep.subr.mxu0 0.0
        %3293 = vmatpush1.msra.mxu0 0.0
        %3294 = vmatprep.subr.mxu0 0.0
        %3295 = vmatpush1.msra.mxu0 %v3009
        %3296 = vmatprep.subr.mxu0 0.0
        %3297 = vmatpush2.msra.mxu0 0.0
        %3298 = vmatprep.subr.mxu0 0.0
        %3299 = vmatpush2.msra.mxu0 0.0
        %3300 = vmatprep.subr.mxu0 0.0
        %3301 = vmatpush2.msra.mxu0 0.0
        %3302 = vmatprep.subr.mxu0 0.0
        %3303 = vmatpush2.msra.mxu0 0.0
        %3304 = vmatprep.subr.mxu0 0.0
        %3305 = vmatpush2.msra.mxu0 0.0
        %3306 = vmatprep.subr.mxu0 0.0
        %3307 = vmatpush2.msra.mxu0 0.0
        %3308 = vmatprep.subr.mxu0 0.0
        %3309 = vmatpush2.msra.mxu0 0.0
        %3310 = vmatprep.subr.mxu0 0.0
        %3311 = vmatpush2.msra.mxu0 0.0
        %3312 = vmatprep.subr.mxu0 0.0
        %3313 = vmatpush2.msra.mxu0 0.0
        %3314 = vmatprep.subr.mxu0 0.0
        %3315 = vmatpush2.msra.mxu0 0.0
        %3316 = vmatprep.subr.mxu0 0.0
        %3317 = vmatpush2.msra.mxu0 0.0
        %3318 = vmatprep.subr.mxu0 0.0
        %3319 = vmatpush2.msra.mxu0 0.0
        %3320 = vmatprep.subr.mxu0 0.0
        %3321 = vmatpush2.msra.mxu0 0.0
        %3322 = vmatprep.subr.mxu0 0.0
        %3323 = vmatpush2.msra.mxu0 0.0
        %3324 = vmatprep.subr.mxu0 0.0
        %3325 = vmatpush2.msra.mxu0 0.0
        %3326 = vmatprep.subr.mxu0 0.0
        %3327 = vmatpush2.msra.mxu0 0.0
        %3328 = vmatprep.mubr.f32.mxu0 0.0
        %3329 = vmatmul.mubr.f32.gmra.mxu0 %v3262
        %v3330 = vpop.f32.mrf.mxu0
        %v3331 = vadd.f32 0.0, %v3330
        %v3332 = vpop.f32.mrf.mxu0
        %3333 = vdwg.mxu0
        %3335 = vrot.lane.b32.xlu0 %v3331, 16
        %v3336 = vpop.permute.xlu0 %3335
        %v3338 = vsel %vm1046, %v3258, %v3336
        %v3340 = vsel %vm622, %v3338, 0
        %3342 = vmatprep.subr.mxu0 0.0
        %3343 = vmatpush1.msra.mxu0 0.0
        %3344 = vmatprep.subr.mxu0 0.0
        %3345 = vmatpush1.msra.mxu0 0.0
        %3346 = vmatprep.subr.mxu0 0.0
        %3347 = vmatpush1.msra.mxu0 0.0
        %3348 = vmatprep.subr.mxu0 0.0
        %3349 = vmatpush1.msra.mxu0 0.0
        %3350 = vmatprep.subr.mxu0 0.0
        %3351 = vmatpush1.msra.mxu0 0.0
        %3352 = vmatprep.subr.mxu0 0.0
        %3353 = vmatpush1.msra.mxu0 0.0
        %3354 = vmatprep.subr.mxu0 0.0
        %3355 = vmatpush1.msra.mxu0 0.0
        %3356 = vmatprep.subr.mxu0 0.0
        %3357 = vmatpush1.msra.mxu0 0.0
        %3358 = vmatprep.subr.mxu0 0.0
        %3359 = vmatpush1.msra.mxu0 0.0
        %3360 = vmatprep.subr.mxu0 0.0
        %3361 = vmatpush1.msra.mxu0 0.0
        %3362 = vmatprep.subr.mxu0 0.0
        %3363 = vmatpush1.msra.mxu0 0.0
        %3364 = vmatprep.subr.mxu0 0.0
        %3365 = vmatpush1.msra.mxu0 0.0
        %3366 = vmatprep.subr.mxu0 0.0
        %3367 = vmatpush1.msra.mxu0 %v2588
        %3368 = vmatprep.subr.mxu0 0.0
        %3369 = vmatpush1.msra.mxu0 %v2587
        %3370 = vmatprep.subr.mxu0 0.0
        %3371 = vmatpush1.msra.mxu0 %v2586
        %3372 = vmatprep.subr.mxu0 0.0
        %3373 = vmatpush1.msra.mxu0 %v2585
        %3374 = vmatprep.subr.mxu0 0.0
        %3375 = vmatpush2.msra.mxu0 0.0
        %3376 = vmatprep.subr.mxu0 0.0
        %3377 = vmatpush2.msra.mxu0 0.0
        %3378 = vmatprep.subr.mxu0 0.0
        %3379 = vmatpush2.msra.mxu0 0.0
        %3380 = vmatprep.subr.mxu0 0.0
        %3381 = vmatpush2.msra.mxu0 0.0
        %3382 = vmatprep.subr.mxu0 0.0
        %3383 = vmatpush2.msra.mxu0 0.0
        %3384 = vmatprep.subr.mxu0 0.0
        %3385 = vmatpush2.msra.mxu0 0.0
        %3386 = vmatprep.subr.mxu0 0.0
        %3387 = vmatpush2.msra.mxu0 0.0
        %3388 = vmatprep.subr.mxu0 0.0
        %3389 = vmatpush2.msra.mxu0 0.0
        %3390 = vmatprep.subr.mxu0 0.0
        %3391 = vmatpush2.msra.mxu0 0.0
        %3392 = vmatprep.subr.mxu0 0.0
        %3393 = vmatpush2.msra.mxu0 0.0
        %3394 = vmatprep.subr.mxu0 0.0
        %3395 = vmatpush2.msra.mxu0 0.0
        %3396 = vmatprep.subr.mxu0 0.0
        %3397 = vmatpush2.msra.mxu0 0.0
        %3398 = vmatprep.subr.mxu0 0.0
        %3399 = vmatpush2.msra.mxu0 0.0
        %3400 = vmatprep.subr.mxu0 0.0
        %3401 = vmatpush2.msra.mxu0 0.0
        %3402 = vmatprep.subr.mxu0 0.0
        %3403 = vmatpush2.msra.mxu0 0.0
        %3404 = vmatprep.subr.mxu0 0.0
        %3405 = vmatpush2.msra.mxu0 0.0
        %3406 = vmatprep.mubr.f32.mxu0 0.0
        %3407 = vmatmul.mubr.f32.gmra.mxu0 %v3340
        %v3408 = vpop.f32.mrf.mxu0
        %v3409 = vadd.f32 %v2556, %v3408
        %v3410 = vpop.f32.mrf.mxu0
        %3411 = vdwg.mxu0
        %v3412 = vsel %vm622, %v3409, 0.0
        %3413 = vadd.xlane.f32.xlu0 %v3412
        %v3414 = vpop.xlane.xlu0 %3413
        %v3415 = vmul.f32 %v3414, %v1454
        %v3416 = vmul.f32 %v3409, %v3409
        %v3417 = vsel %vm622, %v3416, 0.0
        %3418 = vadd.xlane.f32.xlu0 %v3417
        %v3419 = vpop.xlane.xlu0 %3418
        %v3420 = vmul.f32 %v3419, %v1454
        %v3421 = vmul.f32 %v3415, %v3415
        %v3422 = vsub.f32 %v3420, %v3421
        %v3423 = vsub.f32 %v3409, %v3415
        %v3424 = vadd.f32 %v3422, 1e-05
        %v3425 = vrsqrt.pop %v3424
        %v3426 = vmul.f32 %v3423, %v3425
        %s3427 = scalar_lea.vmem %s8, 64
        %v3428 = vld [vmem:[%s3427] sm:$0xff]
        %v3429 = vld [vmem:[%s3427 + $0x8] sm:$0xff]
        %v3430 = vld [vmem:[%s3427 + $0x10] sm:$0xff]
        %v3431 = vld [vmem:[%s3427 + $0x18] sm:$0xff]
        %v3432 = vld [vmem:[%s3427 + $0x20] sm:$0xff]
        %v3433 = vld [vmem:[%s3427 + $0x28] sm:$0xff]
        %v3434 = vld [vmem:[%s3427 + $0x30] sm:$0xff]
        %v3435 = vld [vmem:[%s3427 + $0x38] sm:$0xff]
        %s3436 = scalar_lea.vmem %s9, 64
        %v3437 = vld [vmem:[%s3436] sm:$0xff]
        %v3438 = vld [vmem:[%s3436 + $0x8] sm:$0xff]
        %v3439 = vld [vmem:[%s3436 + $0x10] sm:$0xff]
        %v3440 = vld [vmem:[%s3436 + $0x18] sm:$0xff]
        %v3441 = vld [vmem:[%s3436 + $0x20] sm:$0xff]
        %v3442 = vld [vmem:[%s3436 + $0x28] sm:$0xff]
        %v3443 = vld [vmem:[%s3436 + $0x30] sm:$0xff]
        %v3444 = vld [vmem:[%s3436 + $0x38] sm:$0xff]
        %s3445 = scalar_lea.vmem %s10, 64
        %v3446 = vld [vmem:[%s3445] sm:$0xff]
        %v3447 = vld [vmem:[%s3445 + $0x8] sm:$0xff]
        %v3448 = vld [vmem:[%s3445 + $0x10] sm:$0xff]
        %v3449 = vld [vmem:[%s3445 + $0x18] sm:$0xff]
        %v3450 = vld [vmem:[%s3445 + $0x20] sm:$0xff]
        %v3451 = vld [vmem:[%s3445 + $0x28] sm:$0xff]
        %v3452 = vld [vmem:[%s3445 + $0x30] sm:$0xff]
        %v3453 = vld [vmem:[%s3445 + $0x38] sm:$0xff]
        %s3454 = scalar_lea.vmem %s11, 32
        %v3455 = vld [vmem:[%s3454] sm:$0xff]
        %v3456 = vld [vmem:[%s3454 + $0x8] sm:$0xff]
        %v3457 = vld [vmem:[%s3454 + $0x10] sm:$0xff]
        %v3458 = vld [vmem:[%s3454 + $0x18] sm:$0xff]
        %v3460 = vsel %vm622, %v3426, 0
        %3462 = vmatprep.subr.mxu0 0.0
        %3463 = vmatpush1.msra.mxu0 0.0
        %3464 = vmatprep.subr.mxu0 0.0
        %3465 = vmatpush1.msra.mxu0 0.0
        %3466 = vmatprep.subr.mxu0 0.0
        %3467 = vmatpush1.msra.mxu0 0.0
        %3468 = vmatprep.subr.mxu0 0.0
        %3469 = vmatpush1.msra.mxu0 0.0
        %3470 = vmatprep.subr.mxu0 0.0
        %3471 = vmatpush1.msra.mxu0 0.0
        %3472 = vmatprep.subr.mxu0 0.0
        %3473 = vmatpush1.msra.mxu0 0.0
        %3474 = vmatprep.subr.mxu0 0.0
        %3475 = vmatpush1.msra.mxu0 0.0
        %3476 = vmatprep.subr.mxu0 0.0
        %3477 = vmatpush1.msra.mxu0 0.0
        %3478 = vmatprep.subr.mxu0 0.0
        %3479 = vmatpush1.msra.mxu0 0.0
        %3480 = vmatprep.subr.mxu0 0.0
        %3481 = vmatpush1.msra.mxu0 0.0
        %3482 = vmatprep.subr.mxu0 0.0
        %3483 = vmatpush1.msra.mxu0 0.0
        %3484 = vmatprep.subr.mxu0 0.0
        %3485 = vmatpush1.msra.mxu0 0.0
        %3486 = vmatprep.subr.mxu0 0.0
        %3487 = vmatpush1.msra.mxu0 %v3431
        %3488 = vmatprep.subr.mxu0 0.0
        %3489 = vmatpush1.msra.mxu0 %v3430
        %3490 = vmatprep.subr.mxu0 0.0
        %3491 = vmatpush1.msra.mxu0 %v3429
        %3492 = vmatprep.subr.mxu0 0.0
        %3493 = vmatpush1.msra.mxu0 %v3428
        %3494 = vmatprep.subr.mxu0 0.0
        %3495 = vmatpush2.msra.mxu0 0.0
        %3496 = vmatprep.subr.mxu0 0.0
        %3497 = vmatpush2.msra.mxu0 0.0
        %3498 = vmatprep.subr.mxu0 0.0
        %3499 = vmatpush2.msra.mxu0 0.0
        %3500 = vmatprep.subr.mxu0 0.0
        %3501 = vmatpush2.msra.mxu0 0.0
        %3502 = vmatprep.subr.mxu0 0.0
        %3503 = vmatpush2.msra.mxu0 0.0
        %3504 = vmatprep.subr.mxu0 0.0
        %3505 = vmatpush2.msra.mxu0 0.0
        %3506 = vmatprep.subr.mxu0 0.0
        %3507 = vmatpush2.msra.mxu0 0.0
        %3508 = vmatprep.subr.mxu0 0.0
        %3509 = vmatpush2.msra.mxu0 0.0
        %3510 = vmatprep.subr.mxu0 0.0
        %3511 = vmatpush2.msra.mxu0 0.0
        %3512 = vmatprep.subr.mxu0 0.0
        %3513 = vmatpush2.msra.mxu0 0.0
        %3514 = vmatprep.subr.mxu0 0.0
        %3515 = vmatpush2.msra.mxu0 0.0
        %3516 = vmatprep.subr.mxu0 0.0
        %3517 = vmatpush2.msra.mxu0 0.0
        %3518 = vmatprep.subr.mxu0 0.0
        %3519 = vmatpush2.msra.mxu0 0.0
        %3520 = vmatprep.subr.mxu0 0.0
        %3521 = vmatpush2.msra.mxu0 0.0
        %3522 = vmatprep.subr.mxu0 0.0
        %3523 = vmatpush2.msra.mxu0 0.0
        %3524 = vmatprep.subr.mxu0 0.0
        %3525 = vmatpush2.msra.mxu0 0.0
        %3526 = vmatprep.mubr.f32.mxu0 0.0
        %3527 = vmatmul.mubr.f32.gmra.mxu0 %v3460
        %v3528 = vpop.f32.mrf.mxu0
        %v3529 = vadd.f32 0.0, %v3528
        %v3530 = vpop.f32.mrf.mxu0
        %3531 = vdwg.mxu0
        %3532 = vmatprep.subr.mxu0 0.0
        %3533 = vmatpush1.msra.mxu0 0.0
        %3534 = vmatprep.subr.mxu0 0.0
        %3535 = vmatpush1.msra.mxu0 0.0
        %3536 = vmatprep.subr.mxu0 0.0
        %3537 = vmatpush1.msra.mxu0 0.0
        %3538 = vmatprep.subr.mxu0 0.0
        %3539 = vmatpush1.msra.mxu0 0.0
        %3540 = vmatprep.subr.mxu0 0.0
        %3541 = vmatpush1.msra.mxu0 0.0
        %3542 = vmatprep.subr.mxu0 0.0
        %3543 = vmatpush1.msra.mxu0 0.0
        %3544 = vmatprep.subr.mxu0 0.0
        %3545 = vmatpush1.msra.mxu0 0.0
        %3546 = vmatprep.subr.mxu0 0.0
        %3547 = vmatpush1.msra.mxu0 0.0
        %3548 = vmatprep.subr.mxu0 0.0
        %3549 = vmatpush1.msra.mxu0 0.0
        %3550 = vmatprep.subr.mxu0 0.0
        %3551 = vmatpush1.msra.mxu0 0.0
        %3552 = vmatprep.subr.mxu0 0.0
        %3553 = vmatpush1.msra.mxu0 0.0
        %3554 = vmatprep.subr.mxu0 0.0
        %3555 = vmatpush1.msra.mxu0 0.0
        %3556 = vmatprep.subr.mxu0 0.0
        %3557 = vmatpush1.msra.mxu0 %v3435
        %3558 = vmatprep.subr.mxu0 0.0
        %3559 = vmatpush1.msra.mxu0 %v3434
        %3560 = vmatprep.subr.mxu0 0.0
        %3561 = vmatpush1.msra.mxu0 %v3433
        %3562 = vmatprep.subr.mxu0 0.0
        %3563 = vmatpush1.msra.mxu0 %v3432
        %3564 = vmatprep.subr.mxu0 0.0
        %3565 = vmatpush2.msra.mxu0 0.0
        %3566 = vmatprep.subr.mxu0 0.0
        %3567 = vmatpush2.msra.mxu0 0.0
        %3568 = vmatprep.subr.mxu0 0.0
        %3569 = vmatpush2.msra.mxu0 0.0
        %3570 = vmatprep.subr.mxu0 0.0
        %3571 = vmatpush2.msra.mxu0 0.0
        %3572 = vmatprep.subr.mxu0 0.0
        %3573 = vmatpush2.msra.mxu0 0.0
        %3574 = vmatprep.subr.mxu0 0.0
        %3575 = vmatpush2.msra.mxu0 0.0
        %3576 = vmatprep.subr.mxu0 0.0
        %3577 = vmatpush2.msra.mxu0 0.0
        %3578 = vmatprep.subr.mxu0 0.0
        %3579 = vmatpush2.msra.mxu0 0.0
        %3580 = vmatprep.subr.mxu0 0.0
        %3581 = vmatpush2.msra.mxu0 0.0
        %3582 = vmatprep.subr.mxu0 0.0
        %3583 = vmatpush2.msra.mxu0 0.0
        %3584 = vmatprep.subr.mxu0 0.0
        %3585 = vmatpush2.msra.mxu0 0.0
        %3586 = vmatprep.subr.mxu0 0.0
        %3587 = vmatpush2.msra.mxu0 0.0
        %3588 = vmatprep.subr.mxu0 0.0
        %3589 = vmatpush2.msra.mxu0 0.0
        %3590 = vmatprep.subr.mxu0 0.0
        %3591 = vmatpush2.msra.mxu0 0.0
        %3592 = vmatprep.subr.mxu0 0.0
        %3593 = vmatpush2.msra.mxu0 0.0
        %3594 = vmatprep.subr.mxu0 0.0
        %3595 = vmatpush2.msra.mxu0 0.0
        %3596 = vmatprep.mubr.f32.mxu0 0.0
        %3597 = vmatmul.mubr.f32.gmra.mxu0 %v3460
        %v3598 = vpop.f32.mrf.mxu0
        %v3599 = vadd.f32 0.0, %v3598
        %v3600 = vpop.f32.mrf.mxu0
        %3601 = vdwg.mxu0
        %3602 = vmatprep.subr.mxu0 0.0
        %3603 = vmatpush1.msra.mxu0 0.0
        %3604 = vmatprep.subr.mxu0 0.0
        %3605 = vmatpush1.msra.mxu0 0.0
        %3606 = vmatprep.subr.mxu0 0.0
        %3607 = vmatpush1.msra.mxu0 0.0
        %3608 = vmatprep.subr.mxu0 0.0
        %3609 = vmatpush1.msra.mxu0 0.0
        %3610 = vmatprep.subr.mxu0 0.0
        %3611 = vmatpush1.msra.mxu0 0.0
        %3612 = vmatprep.subr.mxu0 0.0
        %3613 = vmatpush1.msra.mxu0 0.0
        %3614 = vmatprep.subr.mxu0 0.0
        %3615 = vmatpush1.msra.mxu0 0.0
        %3616 = vmatprep.subr.mxu0 0.0
        %3617 = vmatpush1.msra.mxu0 0.0
        %3618 = vmatprep.subr.mxu0 0.0
        %3619 = vmatpush1.msra.mxu0 0.0
        %3620 = vmatprep.subr.mxu0 0.0
        %3621 = vmatpush1.msra.mxu0 0.0
        %3622 = vmatprep.subr.mxu0 0.0
        %3623 = vmatpush1.msra.mxu0 0.0
        %3624 = vmatprep.subr.mxu0 0.0
        %3625 = vmatpush1.msra.mxu0 0.0
        %3626 = vmatprep.subr.mxu0 0.0
        %3627 = vmatpush1.msra.mxu0 %v3440
        %3628 = vmatprep.subr.mxu0 0.0
        %3629 = vmatpush1.msra.mxu0 %v3439
        %3630 = vmatprep.subr.mxu0 0.0
        %3631 = vmatpush1.msra.mxu0 %v3438
        %3632 = vmatprep.subr.mxu0 0.0
        %3633 = vmatpush1.msra.mxu0 %v3437
        %3634 = vmatprep.subr.mxu0 0.0
        %3635 = vmatpush2.msra.mxu0 0.0
        %3636 = vmatprep.subr.mxu0 0.0
        %3637 = vmatpush2.msra.mxu0 0.0
        %3638 = vmatprep.subr.mxu0 0.0
        %3639 = vmatpush2.msra.mxu0 0.0
        %3640 = vmatprep.subr.mxu0 0.0
        %3641 = vmatpush2.msra.mxu0 0.0
        %3642 = vmatprep.subr.mxu0 0.0
        %3643 = vmatpush2.msra.mxu0 0.0
        %3644 = vmatprep.subr.mxu0 0.0
        %3645 = vmatpush2.msra.mxu0 0.0
        %3646 = vmatprep.subr.mxu0 0.0
        %3647 = vmatpush2.msra.mxu0 0.0
        %3648 = vmatprep.subr.mxu0 0.0
        %3649 = vmatpush2.msra.mxu0 0.0
        %3650 = vmatprep.subr.mxu0 0.0
        %3651 = vmatpush2.msra.mxu0 0.0
        %3652 = vmatprep.subr.mxu0 0.0
        %3653 = vmatpush2.msra.mxu0 0.0
        %3654 = vmatprep.subr.mxu0 0.0
        %3655 = vmatpush2.msra.mxu0 0.0
        %3656 = vmatprep.subr.mxu0 0.0
        %3657 = vmatpush2.msra.mxu0 0.0
        %3658 = vmatprep.subr.mxu0 0.0
        %3659 = vmatpush2.msra.mxu0 0.0
        %3660 = vmatprep.subr.mxu0 0.0
        %3661 = vmatpush2.msra.mxu0 0.0
        %3662 = vmatprep.subr.mxu0 0.0
        %3663 = vmatpush2.msra.mxu0 0.0
        %3664 = vmatprep.subr.mxu0 0.0
        %3665 = vmatpush2.msra.mxu0 0.0
        %3666 = vmatprep.mubr.f32.mxu0 0.0
        %3667 = vmatmul.mubr.f32.gmra.mxu0 %v1639
        %v3668 = vpop.f32.mrf.mxu0
        %v3669 = vadd.f32 0.0, %v3668
        %v3670 = vpop.f32.mrf.mxu0
        %3671 = vmatprep.mubr.f32.mxu0 0.0
        %3672 = vmatmul.mubr.f32.gmra.mxu0 %v1642
        %v3673 = vpop.f32.mrf.mxu0
        %v3674 = vadd.f32 0.0, %v3673
        %v3675 = vpop.f32.mrf.mxu0
        %3676 = vdwg.mxu0
        %3677 = vmatprep.subr.mxu0 0.0
        %3678 = vmatpush1.msra.mxu0 0.0
        %3679 = vmatprep.subr.mxu0 0.0
        %3680 = vmatpush1.msra.mxu0 0.0
        %3681 = vmatprep.subr.mxu0 0.0
        %3682 = vmatpush1.msra.mxu0 0.0
        %3683 = vmatprep.subr.mxu0 0.0
        %3684 = vmatpush1.msra.mxu0 0.0
        %3685 = vmatprep.subr.mxu0 0.0
        %3686 = vmatpush1.msra.mxu0 0.0
        %3687 = vmatprep.subr.mxu0 0.0
        %3688 = vmatpush1.msra.mxu0 0.0
        %3689 = vmatprep.subr.mxu0 0.0
        %3690 = vmatpush1.msra.mxu0 0.0
        %3691 = vmatprep.subr.mxu0 0.0
        %3692 = vmatpush1.msra.mxu0 0.0
        %3693 = vmatprep.subr.mxu0 0.0
        %3694 = vmatpush1.msra.mxu0 0.0
        %3695 = vmatprep.subr.mxu0 0.0
        %3696 = vmatpush1.msra.mxu0 0.0
        %3697 = vmatprep.subr.mxu0 0.0
        %3698 = vmatpush1.msra.mxu0 0.0
        %3699 = vmatprep.subr.mxu0 0.0
        %3700 = vmatpush1.msra.mxu0 0.0
        %3701 = vmatprep.subr.mxu0 0.0
        %3702 = vmatpush1.msra.mxu0 %v3444
        %3703 = vmatprep.subr.mxu0 0.0
        %3704 = vmatpush1.msra.mxu0 %v3443
        %3705 = vmatprep.subr.mxu0 0.0
        %3706 = vmatpush1.msra.mxu0 %v3442
        %3707 = vmatprep.subr.mxu0 0.0
        %3708 = vmatpush1.msra.mxu0 %v3441
        %3709 = vmatprep.subr.mxu0 0.0
        %3710 = vmatpush2.msra.mxu0 0.0
        %3711 = vmatprep.subr.mxu0 0.0
        %3712 = vmatpush2.msra.mxu0 0.0
        %3713 = vmatprep.subr.mxu0 0.0
        %3714 = vmatpush2.msra.mxu0 0.0
        %3715 = vmatprep.subr.mxu0 0.0
        %3716 = vmatpush2.msra.mxu0 0.0
        %3717 = vmatprep.subr.mxu0 0.0
        %3718 = vmatpush2.msra.mxu0 0.0
        %3719 = vmatprep.subr.mxu0 0.0
        %3720 = vmatpush2.msra.mxu0 0.0
        %3721 = vmatprep.subr.mxu0 0.0
        %3722 = vmatpush2.msra.mxu0 0.0
        %3723 = vmatprep.subr.mxu0 0.0
        %3724 = vmatpush2.msra.mxu0 0.0
        %3725 = vmatprep.subr.mxu0 0.0
        %3726 = vmatpush2.msra.mxu0 0.0
        %3727 = vmatprep.subr.mxu0 0.0
        %3728 = vmatpush2.msra.mxu0 0.0
        %3729 = vmatprep.subr.mxu0 0.0
        %3730 = vmatpush2.msra.mxu0 0.0
        %3731 = vmatprep.subr.mxu0 0.0
        %3732 = vmatpush2.msra.mxu0 0.0
        %3733 = vmatprep.subr.mxu0 0.0
        %3734 = vmatpush2.msra.mxu0 0.0
        %3735 = vmatprep.subr.mxu0 0.0
        %3736 = vmatpush2.msra.mxu0 0.0
        %3737 = vmatprep.subr.mxu0 0.0
        %3738 = vmatpush2.msra.mxu0 0.0
        %3739 = vmatprep.subr.mxu0 0.0
        %3740 = vmatpush2.msra.mxu0 0.0
        %3741 = vmatprep.mubr.f32.mxu0 0.0
        %3742 = vmatmul.mubr.f32.gmra.mxu0 %v1639
        %v3743 = vpop.f32.mrf.mxu0
        %v3744 = vadd.f32 0.0, %v3743
        %v3745 = vpop.f32.mrf.mxu0
        %3746 = vmatprep.mubr.f32.mxu0 0.0
        %3747 = vmatmul.mubr.f32.gmra.mxu0 %v1642
        %v3748 = vpop.f32.mrf.mxu0
        %v3749 = vadd.f32 0.0, %v3748
        %v3750 = vpop.f32.mrf.mxu0
        %3751 = vdwg.mxu0
        %3752 = vmatprep.subr.mxu0 0.0
        %3753 = vmatpush1.msra.mxu0 0.0
        %3754 = vmatprep.subr.mxu0 0.0
        %3755 = vmatpush1.msra.mxu0 0.0
        %3756 = vmatprep.subr.mxu0 0.0
        %3757 = vmatpush1.msra.mxu0 0.0
        %3758 = vmatprep.subr.mxu0 0.0
        %3759 = vmatpush1.msra.mxu0 0.0
        %3760 = vmatprep.subr.mxu0 0.0
        %3761 = vmatpush1.msra.mxu0 0.0
        %3762 = vmatprep.subr.mxu0 0.0
        %3763 = vmatpush1.msra.mxu0 0.0
        %3764 = vmatprep.subr.mxu0 0.0
        %3765 = vmatpush1.msra.mxu0 0.0
        %3766 = vmatprep.subr.mxu0 0.0
        %3767 = vmatpush1.msra.mxu0 0.0
        %3768 = vmatprep.subr.mxu0 0.0
        %3769 = vmatpush1.msra.mxu0 0.0
        %3770 = vmatprep.subr.mxu0 0.0
        %3771 = vmatpush1.msra.mxu0 0.0
        %3772 = vmatprep.subr.mxu0 0.0
        %3773 = vmatpush1.msra.mxu0 0.0
        %3774 = vmatprep.subr.mxu0 0.0
        %3775 = vmatpush1.msra.mxu0 0.0
        %3776 = vmatprep.subr.mxu0 0.0
        %3777 = vmatpush1.msra.mxu0 %v3449
        %3778 = vmatprep.subr.mxu0 0.0
        %3779 = vmatpush1.msra.mxu0 %v3448
        %3780 = vmatprep.subr.mxu0 0.0
        %3781 = vmatpush1.msra.mxu0 %v3447
        %3782 = vmatprep.subr.mxu0 0.0
        %3783 = vmatpush1.msra.mxu0 %v3446
        %3784 = vmatprep.subr.mxu0 0.0
        %3785 = vmatpush2.msra.mxu0 0.0
        %3786 = vmatprep.subr.mxu0 0.0
        %3787 = vmatpush2.msra.mxu0 0.0
        %3788 = vmatprep.subr.mxu0 0.0
        %3789 = vmatpush2.msra.mxu0 0.0
        %3790 = vmatprep.subr.mxu0 0.0
        %3791 = vmatpush2.msra.mxu0 0.0
        %3792 = vmatprep.subr.mxu0 0.0
        %3793 = vmatpush2.msra.mxu0 0.0
        %3794 = vmatprep.subr.mxu0 0.0
        %3795 = vmatpush2.msra.mxu0 0.0
        %3796 = vmatprep.subr.mxu0 0.0
        %3797 = vmatpush2.msra.mxu0 0.0
        %3798 = vmatprep.subr.mxu0 0.0
        %3799 = vmatpush2.msra.mxu0 0.0
        %3800 = vmatprep.subr.mxu0 0.0
        %3801 = vmatpush2.msra.mxu0 0.0
        %3802 = vmatprep.subr.mxu0 0.0
        %3803 = vmatpush2.msra.mxu0 0.0
        %3804 = vmatprep.subr.mxu0 0.0
        %3805 = vmatpush2.msra.mxu0 0.0
        %3806 = vmatprep.subr.mxu0 0.0
        %3807 = vmatpush2.msra.mxu0 0.0
        %3808 = vmatprep.subr.mxu0 0.0
        %3809 = vmatpush2.msra.mxu0 0.0
        %3810 = vmatprep.subr.mxu0 0.0
        %3811 = vmatpush2.msra.mxu0 0.0
        %3812 = vmatprep.subr.mxu0 0.0
        %3813 = vmatpush2.msra.mxu0 0.0
        %3814 = vmatprep.subr.mxu0 0.0
        %3815 = vmatpush2.msra.mxu0 0.0
        %3816 = vmatprep.mubr.f32.mxu0 0.0
        %3817 = vmatmul.mubr.f32.gmra.mxu0 %v1639
        %v3818 = vpop.f32.mrf.mxu0
        %v3819 = vadd.f32 0.0, %v3818
        %v3820 = vpop.f32.mrf.mxu0
        %3821 = vmatprep.mubr.f32.mxu0 0.0
        %3822 = vmatmul.mubr.f32.gmra.mxu0 %v1642
        %v3823 = vpop.f32.mrf.mxu0
        %v3824 = vadd.f32 0.0, %v3823
        %v3825 = vpop.f32.mrf.mxu0
        %3826 = vdwg.mxu0
        %3827 = vmatprep.subr.mxu0 0.0
        %3828 = vmatpush1.msra.mxu0 0.0
        %3829 = vmatprep.subr.mxu0 0.0
        %3830 = vmatpush1.msra.mxu0 0.0
        %3831 = vmatprep.subr.mxu0 0.0
        %3832 = vmatpush1.msra.mxu0 0.0
        %3833 = vmatprep.subr.mxu0 0.0
        %3834 = vmatpush1.msra.mxu0 0.0
        %3835 = vmatprep.subr.mxu0 0.0
        %3836 = vmatpush1.msra.mxu0 0.0
        %3837 = vmatprep.subr.mxu0 0.0
        %3838 = vmatpush1.msra.mxu0 0.0
        %3839 = vmatprep.subr.mxu0 0.0
        %3840 = vmatpush1.msra.mxu0 0.0
        %3841 = vmatprep.subr.mxu0 0.0
        %3842 = vmatpush1.msra.mxu0 0.0
        %3843 = vmatprep.subr.mxu0 0.0
        %3844 = vmatpush1.msra.mxu0 0.0
        %3845 = vmatprep.subr.mxu0 0.0
        %3846 = vmatpush1.msra.mxu0 0.0
        %3847 = vmatprep.subr.mxu0 0.0
        %3848 = vmatpush1.msra.mxu0 0.0
        %3849 = vmatprep.subr.mxu0 0.0
        %3850 = vmatpush1.msra.mxu0 0.0
        %3851 = vmatprep.subr.mxu0 0.0
        %3852 = vmatpush1.msra.mxu0 %v3453
        %3853 = vmatprep.subr.mxu0 0.0
        %3854 = vmatpush1.msra.mxu0 %v3452
        %3855 = vmatprep.subr.mxu0 0.0
        %3856 = vmatpush1.msra.mxu0 %v3451
        %3857 = vmatprep.subr.mxu0 0.0
        %3858 = vmatpush1.msra.mxu0 %v3450
        %3859 = vmatprep.subr.mxu0 0.0
        %3860 = vmatpush2.msra.mxu0 0.0
        %3861 = vmatprep.subr.mxu0 0.0
        %3862 = vmatpush2.msra.mxu0 0.0
        %3863 = vmatprep.subr.mxu0 0.0
        %3864 = vmatpush2.msra.mxu0 0.0
        %3865 = vmatprep.subr.mxu0 0.0
        %3866 = vmatpush2.msra.mxu0 0.0
        %3867 = vmatprep.subr.mxu0 0.0
        %3868 = vmatpush2.msra.mxu0 0.0
        %3869 = vmatprep.subr.mxu0 0.0
        %3870 = vmatpush2.msra.mxu0 0.0
        %3871 = vmatprep.subr.mxu0 0.0
        %3872 = vmatpush2.msra.mxu0 0.0
        %3873 = vmatprep.subr.mxu0 0.0
        %3874 = vmatpush2.msra.mxu0 0.0
        %3875 = vmatprep.subr.mxu0 0.0
        %3876 = vmatpush2.msra.mxu0 0.0
        %3877 = vmatprep.subr.mxu0 0.0
        %3878 = vmatpush2.msra.mxu0 0.0
        %3879 = vmatprep.subr.mxu0 0.0
        %3880 = vmatpush2.msra.mxu0 0.0
        %3881 = vmatprep.subr.mxu0 0.0
        %3882 = vmatpush2.msra.mxu0 0.0
        %3883 = vmatprep.subr.mxu0 0.0
        %3884 = vmatpush2.msra.mxu0 0.0
        %3885 = vmatprep.subr.mxu0 0.0
        %3886 = vmatpush2.msra.mxu0 0.0
        %3887 = vmatprep.subr.mxu0 0.0
        %3888 = vmatpush2.msra.mxu0 0.0
        %3889 = vmatprep.subr.mxu0 0.0
        %3890 = vmatpush2.msra.mxu0 0.0
        %3891 = vmatprep.mubr.f32.mxu0 0.0
        %3892 = vmatmul.mubr.f32.gmra.mxu0 %v1639
        %v3893 = vpop.f32.mrf.mxu0
        %v3894 = vadd.f32 0.0, %v3893
        %v3895 = vpop.f32.mrf.mxu0
        %3896 = vmatprep.mubr.f32.mxu0 0.0
        %3897 = vmatmul.mubr.f32.gmra.mxu0 %v1642
        %v3898 = vpop.f32.mrf.mxu0
        %v3899 = vadd.f32 0.0, %v3898
        %v3900 = vpop.f32.mrf.mxu0
        %3901 = vdwg.mxu0
        %v3903 = vsel %vm1046, %v3529, 0
        %v3906 = vsel %vm1046, %v3669, 0
        %v3909 = vsel %vm1046, %v3674, 0
        %3911 = vmatprep.subr.mxu0 0.0
        %3912 = vmatpush1.xpose.msra.mxu0 0.0
        %3913 = vmatprep.subr.mxu0 0.0
        %3914 = vmatpush1.xpose.msra.mxu0 0.0
        %3915 = vmatprep.subr.mxu0 0.0
        %3916 = vmatpush1.xpose.msra.mxu0 0.0
        %3917 = vmatprep.subr.mxu0 0.0
        %3918 = vmatpush1.xpose.msra.mxu0 0.0
        %3919 = vmatprep.subr.mxu0 0.0
        %3920 = vmatpush1.xpose.msra.mxu0 0.0
        %3921 = vmatprep.subr.mxu0 0.0
        %3922 = vmatpush1.xpose.msra.mxu0 0.0
        %3923 = vmatprep.subr.mxu0 0.0
        %3924 = vmatpush1.xpose.msra.mxu0 0.0
        %3925 = vmatprep.subr.mxu0 0.0
        %3926 = vmatpush1.xpose.msra.mxu0 0.0
        %3927 = vmatprep.subr.mxu0 0.0
        %3928 = vmatpush1.xpose.msra.mxu0 0.0
        %3929 = vmatprep.subr.mxu0 0.0
        %3930 = vmatpush1.xpose.msra.mxu0 0.0
        %3931 = vmatprep.subr.mxu0 0.0
        %3932 = vmatpush1.xpose.msra.mxu0 0.0
        %3933 = vmatprep.subr.mxu0 0.0
        %3934 = vmatpush1.xpose.msra.mxu0 0.0
        %3935 = vmatprep.subr.mxu0 0.0
        %3936 = vmatpush1.xpose.msra.mxu0 0.0
        %3937 = vmatprep.subr.mxu0 0.0
        %3938 = vmatpush1.xpose.msra.mxu0 0.0
        %3939 = vmatprep.subr.mxu0 0.0
        %3940 = vmatpush1.xpose.msra.mxu0 %v3909
        %3941 = vmatprep.subr.mxu0 0.0
        %3942 = vmatpush1.xpose.msra.mxu0 %v3906
        %3943 = vmatprep.subr.mxu0 0.0
        %3944 = vmatpush2.xpose.msra.mxu0 0.0
        %3945 = vmatprep.subr.mxu0 0.0
        %3946 = vmatpush2.xpose.msra.mxu0 0.0
        %3947 = vmatprep.subr.mxu0 0.0
        %3948 = vmatpush2.xpose.msra.mxu0 0.0
        %3949 = vmatprep.subr.mxu0 0.0
        %3950 = vmatpush2.xpose.msra.mxu0 0.0
        %3951 = vmatprep.subr.mxu0 0.0
        %3952 = vmatpush2.xpose.msra.mxu0 0.0
        %3953 = vmatprep.subr.mxu0 0.0
        %3954 = vmatpush2.xpose.msra.mxu0 0.0
        %3955 = vmatprep.subr.mxu0 0.0
        %3956 = vmatpush2.xpose.msra.mxu0 0.0
        %3957 = vmatprep.subr.mxu0 0.0
        %3958 = vmatpush2.xpose.msra.mxu0 0.0
        %3959 = vmatprep.subr.mxu0 0.0
        %3960 = vmatpush2.xpose.msra.mxu0 0.0
        %3961 = vmatprep.subr.mxu0 0.0
        %3962 = vmatpush2.xpose.msra.mxu0 0.0
        %3963 = vmatprep.subr.mxu0 0.0
        %3964 = vmatpush2.xpose.msra.mxu0 0.0
        %3965 = vmatprep.subr.mxu0 0.0
        %3966 = vmatpush2.xpose.msra.mxu0 0.0
        %3967 = vmatprep.subr.mxu0 0.0
        %3968 = vmatpush2.xpose.msra.mxu0 0.0
        %3969 = vmatprep.subr.mxu0 0.0
        %3970 = vmatpush2.xpose.msra.mxu0 0.0
        %3971 = vmatprep.subr.mxu0 0.0
        %3972 = vmatpush2.xpose.msra.mxu0 0.0
        %3973 = vmatprep.subr.mxu0 0.0
        %3974 = vmatpush2.xpose.msra.mxu0 0.0
        %3975 = vmatprep.mubr.f32.mxu0 0.0
        %3976 = vmatmul.mubr.f32.gmra.mxu0 %v3903
        %v3977 = vpop.f32.mrf.mxu0
        %v3978 = vadd.f32 0.0, %v3977
        %v3979 = vpop.f32.mrf.mxu0
        %3980 = vdwg.mxu0
        %v3982 = vsel %vm1046, %v3599, 0
        %v3985 = vsel %vm1046, %v3744, 0
        %v3988 = vsel %vm1046, %v3749, 0
        %3990 = vmatprep.subr.mxu0 0.0
        %3991 = vmatpush1.xpose.msra.mxu0 0.0
        %3992 = vmatprep.subr.mxu0 0.0
        %3993 = vmatpush1.xpose.msra.mxu0 0.0
        %3994 = vmatprep.subr.mxu0 0.0
        %3995 = vmatpush1.xpose.msra.mxu0 0.0
        %3996 = vmatprep.subr.mxu0 0.0
        %3997 = vmatpush1.xpose.msra.mxu0 0.0
        %3998 = vmatprep.subr.mxu0 0.0
        %3999 = vmatpush1.xpose.msra.mxu0 0.0
        %4000 = vmatprep.subr.mxu0 0.0
        %4001 = vmatpush1.xpose.msra.mxu0 0.0
        %4002 = vmatprep.subr.mxu0 0.0
        %4003 = vmatpush1.xpose.msra.mxu0 0.0
        %4004 = vmatprep.subr.mxu0 0.0
        %4005 = vmatpush1.xpose.msra.mxu0 0.0
        %4006 = vmatprep.subr.mxu0 0.0
        %4007 = vmatpush1.xpose.msra.mxu0 0.0
        %4008 = vmatprep.subr.mxu0 0.0
        %4009 = vmatpush1.xpose.msra.mxu0 0.0
        %4010 = vmatprep.subr.mxu0 0.0
        %4011 = vmatpush1.xpose.msra.mxu0 0.0
        %4012 = vmatprep.subr.mxu0 0.0
        %4013 = vmatpush1.xpose.msra.mxu0 0.0
        %4014 = vmatprep.subr.mxu0 0.0
        %4015 = vmatpush1.xpose.msra.mxu0 0.0
        %4016 = vmatprep.subr.mxu0 0.0
        %4017 = vmatpush1.xpose.msra.mxu0 0.0
        %4018 = vmatprep.subr.mxu0 0.0
        %4019 = vmatpush1.xpose.msra.mxu0 %v3988
        %4020 = vmatprep.subr.mxu0 0.0
        %4021 = vmatpush1.xpose.msra.mxu0 %v3985
        %4022 = vmatprep.subr.mxu0 0.0
        %4023 = vmatpush2.xpose.msra.mxu0 0.0
        %4024 = vmatprep.subr.mxu0 0.0
        %4025 = vmatpush2.xpose.msra.mxu0 0.0
        %4026 = vmatprep.subr.mxu0 0.0
        %4027 = vmatpush2.xpose.msra.mxu0 0.0
        %4028 = vmatprep.subr.mxu0 0.0
        %4029 = vmatpush2.xpose.msra.mxu0 0.0
        %4030 = vmatprep.subr.mxu0 0.0
        %4031 = vmatpush2.xpose.msra.mxu0 0.0
        %4032 = vmatprep.subr.mxu0 0.0
        %4033 = vmatpush2.xpose.msra.mxu0 0.0
        %4034 = vmatprep.subr.mxu0 0.0
        %4035 = vmatpush2.xpose.msra.mxu0 0.0
        %4036 = vmatprep.subr.mxu0 0.0
        %4037 = vmatpush2.xpose.msra.mxu0 0.0
        %4038 = vmatprep.subr.mxu0 0.0
        %4039 = vmatpush2.xpose.msra.mxu0 0.0
        %4040 = vmatprep.subr.mxu0 0.0
        %4041 = vmatpush2.xpose.msra.mxu0 0.0
        %4042 = vmatprep.subr.mxu0 0.0
        %4043 = vmatpush2.xpose.msra.mxu0 0.0
        %4044 = vmatprep.subr.mxu0 0.0
        %4045 = vmatpush2.xpose.msra.mxu0 0.0
        %4046 = vmatprep.subr.mxu0 0.0
        %4047 = vmatpush2.xpose.msra.mxu0 0.0
        %4048 = vmatprep.subr.mxu0 0.0
        %4049 = vmatpush2.xpose.msra.mxu0 0.0
        %4050 = vmatprep.subr.mxu0 0.0
        %4051 = vmatpush2.xpose.msra.mxu0 0.0
        %4052 = vmatprep.subr.mxu0 0.0
        %4053 = vmatpush2.xpose.msra.mxu0 0.0
        %4054 = vmatprep.mubr.f32.mxu0 0.0
        %4055 = vmatmul.mubr.f32.gmra.mxu0 %v3982
        %v4056 = vpop.f32.mrf.mxu0
        %v4057 = vadd.f32 0.0, %v4056
        %v4058 = vpop.f32.mrf.mxu0
        %4059 = vdwg.mxu0
        %v4060 = vsel %vm2104, -1e+09, %v3978
        %v4061 = vsel %vm2104, -1e+09, %v4057
        %v4062 = vsel %vm2107, %v4060, -inf
        %4063 = vmax.xlane.f32.xlu0 %v4062
        %v4064 = vpop.xlane.xlu0 %4063
        %v4065 = vsel %vm2107, %v4061, -inf
        %4066 = vmax.xlane.f32.xlu0 %v4065
        %v4067 = vpop.xlane.xlu0 %4066
        %v4068 = vsub.f32 %v4060, %v4064
        %v4069 = vsub.f32 %v4061, %v4067
        %v4070 = vmul.f32 %v4068, 1.442695
        %v4071 = vpow.pop %v4070
        %v4072 = vmul.f32 %v4069, 1.442695
        %v4073 = vpow.pop %v4072
        %v4074 = vsel %vm2107, %v4071, 0.0
        %4075 = vadd.xlane.f32.xlu0 %v4074
        %v4076 = vpop.xlane.xlu0 %4075
        %v4077 = vsel %vm2107, %v4073, 0.0
        %4078 = vadd.xlane.f32.xlu0 %v4077
        %v4079 = vpop.xlane.xlu0 %4078
        %v4080 = vrcp.pop %v4076
        %v4081 = vrcp.pop %v4079
        %v4082 = vmul.f32 %v4071, %v4080
        %v4083 = vmul.f32 %v4073, %v4081
        %v4085 = vsel %vm2107, %v4082, 0
        %v4088 = vsel %vm2133, %v3824, 0
        %4090 = vmatprep.subr.mxu0 0.0
        %4091 = vmatpush1.msra.mxu0 0.0
        %4092 = vmatprep.subr.mxu0 0.0
        %4093 = vmatpush1.msra.mxu0 0.0
        %4094 = vmatprep.subr.mxu0 0.0
        %4095 = vmatpush1.msra.mxu0 0.0
        %4096 = vmatprep.subr.mxu0 0.0
        %4097 = vmatpush1.msra.mxu0 0.0
        %4098 = vmatprep.subr.mxu0 0.0
        %4099 = vmatpush1.msra.mxu0 0.0
        %4100 = vmatprep.subr.mxu0 0.0
        %4101 = vmatpush1.msra.mxu0 0.0
        %4102 = vmatprep.subr.mxu0 0.0
        %4103 = vmatpush1.msra.mxu0 0.0
        %4104 = vmatprep.subr.mxu0 0.0
        %4105 = vmatpush1.msra.mxu0 0.0
        %4106 = vmatprep.subr.mxu0 0.0
        %4107 = vmatpush1.msra.mxu0 0.0
        %4108 = vmatprep.subr.mxu0 0.0
        %4109 = vmatpush1.msra.mxu0 0.0
        %4110 = vmatprep.subr.mxu0 0.0
        %4111 = vmatpush1.msra.mxu0 0.0
        %4112 = vmatprep.subr.mxu0 0.0
        %4113 = vmatpush1.msra.mxu0 0.0
        %4114 = vmatprep.subr.mxu0 0.0
        %4115 = vmatpush1.msra.mxu0 0.0
        %4116 = vmatprep.subr.mxu0 0.0
        %4117 = vmatpush1.msra.mxu0 0.0
        %4118 = vmatprep.subr.mxu0 0.0
        %4119 = vmatpush1.msra.mxu0 %v4088
        %4120 = vmatprep.subr.mxu0 0.0
        %4121 = vmatpush1.msra.mxu0 %v3819
        %4122 = vmatprep.subr.mxu0 0.0
        %4123 = vmatpush2.msra.mxu0 0.0
        %4124 = vmatprep.subr.mxu0 0.0
        %4125 = vmatpush2.msra.mxu0 0.0
        %4126 = vmatprep.subr.mxu0 0.0
        %4127 = vmatpush2.msra.mxu0 0.0
        %4128 = vmatprep.subr.mxu0 0.0
        %4129 = vmatpush2.msra.mxu0 0.0
        %4130 = vmatprep.subr.mxu0 0.0
        %4131 = vmatpush2.msra.mxu0 0.0
        %4132 = vmatprep.subr.mxu0 0.0
        %4133 = vmatpush2.msra.mxu0 0.0
        %4134 = vmatprep.subr.mxu0 0.0
        %4135 = vmatpush2.msra.mxu0 0.0
        %4136 = vmatprep.subr.mxu0 0.0
        %4137 = vmatpush2.msra.mxu0 0.0
        %4138 = vmatprep.subr.mxu0 0.0
        %4139 = vmatpush2.msra.mxu0 0.0
        %4140 = vmatprep.subr.mxu0 0.0
        %4141 = vmatpush2.msra.mxu0 0.0
        %4142 = vmatprep.subr.mxu0 0.0
        %4143 = vmatpush2.msra.mxu0 0.0
        %4144 = vmatprep.subr.mxu0 0.0
        %4145 = vmatpush2.msra.mxu0 0.0
        %4146 = vmatprep.subr.mxu0 0.0
        %4147 = vmatpush2.msra.mxu0 0.0
        %4148 = vmatprep.subr.mxu0 0.0
        %4149 = vmatpush2.msra.mxu0 0.0
        %4150 = vmatprep.subr.mxu0 0.0
        %4151 = vmatpush2.msra.mxu0 0.0
        %4152 = vmatprep.subr.mxu0 0.0
        %4153 = vmatpush2.msra.mxu0 0.0
        %4154 = vmatprep.mubr.f32.mxu0 0.0
        %4155 = vmatmul.mubr.f32.gmra.mxu0 %v4085
        %v4156 = vpop.f32.mrf.mxu0
        %v4157 = vadd.f32 0.0, %v4156
        %v4158 = vpop.f32.mrf.mxu0
        %4159 = vdwg.mxu0
        %v4161 = vsel %vm2107, %v4083, 0
        %v4164 = vsel %vm2133, %v3899, 0
        %4166 = vmatprep.subr.mxu0 0.0
        %4167 = vmatpush1.msra.mxu0 0.0
        %4168 = vmatprep.subr.mxu0 0.0
        %4169 = vmatpush1.msra.mxu0 0.0
        %4170 = vmatprep.subr.mxu0 0.0
        %4171 = vmatpush1.msra.mxu0 0.0
        %4172 = vmatprep.subr.mxu0 0.0
        %4173 = vmatpush1.msra.mxu0 0.0
        %4174 = vmatprep.subr.mxu0 0.0
        %4175 = vmatpush1.msra.mxu0 0.0
        %4176 = vmatprep.subr.mxu0 0.0
        %4177 = vmatpush1.msra.mxu0 0.0
        %4178 = vmatprep.subr.mxu0 0.0
        %4179 = vmatpush1.msra.mxu0 0.0
        %4180 = vmatprep.subr.mxu0 0.0
        %4181 = vmatpush1.msra.mxu0 0.0
        %4182 = vmatprep.subr.mxu0 0.0
        %4183 = vmatpush1.msra.mxu0 0.0
        %4184 = vmatprep.subr.mxu0 0.0
        %4185 = vmatpush1.msra.mxu0 0.0
        %4186 = vmatprep.subr.mxu0 0.0
        %4187 = vmatpush1.msra.mxu0 0.0
        %4188 = vmatprep.subr.mxu0 0.0
        %4189 = vmatpush1.msra.mxu0 0.0
        %4190 = vmatprep.subr.mxu0 0.0
        %4191 = vmatpush1.msra.mxu0 0.0
        %4192 = vmatprep.subr.mxu0 0.0
        %4193 = vmatpush1.msra.mxu0 0.0
        %4194 = vmatprep.subr.mxu0 0.0
        %4195 = vmatpush1.msra.mxu0 %v4164
        %4196 = vmatprep.subr.mxu0 0.0
        %4197 = vmatpush1.msra.mxu0 %v3894
        %4198 = vmatprep.subr.mxu0 0.0
        %4199 = vmatpush2.msra.mxu0 0.0
        %4200 = vmatprep.subr.mxu0 0.0
        %4201 = vmatpush2.msra.mxu0 0.0
        %4202 = vmatprep.subr.mxu0 0.0
        %4203 = vmatpush2.msra.mxu0 0.0
        %4204 = vmatprep.subr.mxu0 0.0
        %4205 = vmatpush2.msra.mxu0 0.0
        %4206 = vmatprep.subr.mxu0 0.0
        %4207 = vmatpush2.msra.mxu0 0.0
        %4208 = vmatprep.subr.mxu0 0.0
        %4209 = vmatpush2.msra.mxu0 0.0
        %4210 = vmatprep.subr.mxu0 0.0
        %4211 = vmatpush2.msra.mxu0 0.0
        %4212 = vmatprep.subr.mxu0 0.0
        %4213 = vmatpush2.msra.mxu0 0.0
        %4214 = vmatprep.subr.mxu0 0.0
        %4215 = vmatpush2.msra.mxu0 0.0
        %4216 = vmatprep.subr.mxu0 0.0
        %4217 = vmatpush2.msra.mxu0 0.0
        %4218 = vmatprep.subr.mxu0 0.0
        %4219 = vmatpush2.msra.mxu0 0.0
        %4220 = vmatprep.subr.mxu0 0.0
        %4221 = vmatpush2.msra.mxu0 0.0
        %4222 = vmatprep.subr.mxu0 0.0
        %4223 = vmatpush2.msra.mxu0 0.0
        %4224 = vmatprep.subr.mxu0 0.0
        %4225 = vmatpush2.msra.mxu0 0.0
        %4226 = vmatprep.subr.mxu0 0.0
        %4227 = vmatpush2.msra.mxu0 0.0
        %4228 = vmatprep.subr.mxu0 0.0
        %4229 = vmatpush2.msra.mxu0 0.0
        %4230 = vmatprep.mubr.f32.mxu0 0.0
        %4231 = vmatmul.mubr.f32.gmra.mxu0 %v4161
        %v4232 = vpop.f32.mrf.mxu0
        %v4233 = vadd.f32 0.0, %v4232
        %v4234 = vpop.f32.mrf.mxu0
        %4235 = vdwg.mxu0
        %4237 = vrot.lane.b32.xlu0 %v4233, 16
        %v4238 = vpop.permute.xlu0 %4237
        %v4240 = vsel %vm1046, %v4157, %v4238
        %v4242 = vsel %vm622, %v4240, 0
        %4244 = vmatprep.subr.mxu0 0.0
        %4245 = vmatpush1.msra.mxu0 0.0
        %4246 = vmatprep.subr.mxu0 0.0
        %4247 = vmatpush1.msra.mxu0 0.0
        %4248 = vmatprep.subr.mxu0 0.0
        %4249 = vmatpush1.msra.mxu0 0.0
        %4250 = vmatprep.subr.mxu0 0.0
        %4251 = vmatpush1.msra.mxu0 0.0
        %4252 = vmatprep.subr.mxu0 0.0
        %4253 = vmatpush1.msra.mxu0 0.0
        %4254 = vmatprep.subr.mxu0 0.0
        %4255 = vmatpush1.msra.mxu0 0.0
        %4256 = vmatprep.subr.mxu0 0.0
        %4257 = vmatpush1.msra.mxu0 0.0
        %4258 = vmatprep.subr.mxu0 0.0
        %4259 = vmatpush1.msra.mxu0 0.0
        %4260 = vmatprep.subr.mxu0 0.0
        %4261 = vmatpush1.msra.mxu0 0.0
        %4262 = vmatprep.subr.mxu0 0.0
        %4263 = vmatpush1.msra.mxu0 0.0
        %4264 = vmatprep.subr.mxu0 0.0
        %4265 = vmatpush1.msra.mxu0 0.0
        %4266 = vmatprep.subr.mxu0 0.0
        %4267 = vmatpush1.msra.mxu0 0.0
        %4268 = vmatprep.subr.mxu0 0.0
        %4269 = vmatpush1.msra.mxu0 %v3458
        %4270 = vmatprep.subr.mxu0 0.0
        %4271 = vmatpush1.msra.mxu0 %v3457
        %4272 = vmatprep.subr.mxu0 0.0
        %4273 = vmatpush1.msra.mxu0 %v3456
        %4274 = vmatprep.subr.mxu0 0.0
        %4275 = vmatpush1.msra.mxu0 %v3455
        %4276 = vmatprep.subr.mxu0 0.0
        %4277 = vmatpush2.msra.mxu0 0.0
        %4278 = vmatprep.subr.mxu0 0.0
        %4279 = vmatpush2.msra.mxu0 0.0
        %4280 = vmatprep.subr.mxu0 0.0
        %4281 = vmatpush2.msra.mxu0 0.0
        %4282 = vmatprep.subr.mxu0 0.0
        %4283 = vmatpush2.msra.mxu0 0.0
        %4284 = vmatprep.subr.mxu0 0.0
        %4285 = vmatpush2.msra.mxu0 0.0
        %4286 = vmatprep.subr.mxu0 0.0
        %4287 = vmatpush2.msra.mxu0 0.0
        %4288 = vmatprep.subr.mxu0 0.0
        %4289 = vmatpush2.msra.mxu0 0.0
        %4290 = vmatprep.subr.mxu0 0.0
        %4291 = vmatpush2.msra.mxu0 0.0
        %4292 = vmatprep.subr.mxu0 0.0
        %4293 = vmatpush2.msra.mxu0 0.0
        %4294 = vmatprep.subr.mxu0 0.0
        %4295 = vmatpush2.msra.mxu0 0.0
        %4296 = vmatprep.subr.mxu0 0.0
        %4297 = vmatpush2.msra.mxu0 0.0
        %4298 = vmatprep.subr.mxu0 0.0
        %4299 = vmatpush2.msra.mxu0 0.0
        %4300 = vmatprep.subr.mxu0 0.0
        %4301 = vmatpush2.msra.mxu0 0.0
        %4302 = vmatprep.subr.mxu0 0.0
        %4303 = vmatpush2.msra.mxu0 0.0
        %4304 = vmatprep.subr.mxu0 0.0
        %4305 = vmatpush2.msra.mxu0 0.0
        %4306 = vmatprep.subr.mxu0 0.0
        %4307 = vmatpush2.msra.mxu0 0.0
        %4308 = vmatprep.mubr.f32.mxu0 0.0
        %4309 = vmatmul.mubr.f32.gmra.mxu0 %v4242
        %v4310 = vpop.f32.mrf.mxu0
        %v4311 = vadd.f32 %v3426, %v4310
        %v4312 = vpop.f32.mrf.mxu0
        %4313 = vdwg.mxu0
        %v4314 = vsel %vm622, %v4311, 0.0
        %4315 = vadd.xlane.f32.xlu0 %v4314
        %v4316 = vpop.xlane.xlu0 %4315
        %v4317 = vmul.f32 %v4316, %v1454
        %v4318 = vmul.f32 %v4311, %v4311
        %v4319 = vsel %vm622, %v4318, 0.0
        %4320 = vadd.xlane.f32.xlu0 %v4319
        %v4321 = vpop.xlane.xlu0 %4320
        %v4322 = vmul.f32 %v4321, %v1454
        %v4323 = vmul.f32 %v4317, %v4317
        %v4324 = vsub.f32 %v4322, %v4323
        %v4325 = vsub.f32 %v4311, %v4317
        %v4326 = vadd.f32 %v4324, 1e-05
        %v4327 = vrsqrt.pop %v4326
        %v4328 = vmul.f32 %v4325, %v4327
        %s4329 = scalar_lea.vmem %s564, 16 [#allocation4]
        %4330 = vst.msk [vmem:[%s4329] sm:$0xff] %vm1204, %v3186
        %s4331 = scalar_lea.vmem %s571, 16 [#allocation6]
        %4332 = vst.msk [vmem:[%s4331] sm:$0xff] %vm2107, %v4082
        %s4333 = scalar_lea.vmem %s564, 24 [#allocation4]
        %4334 = vst.msk [vmem:[%s4333] sm:$0xff] %vm1204, %v3187
        %s4335 = scalar_lea.vmem %s571, 24 [#allocation6]
        %4336 = vst.msk [vmem:[%s4335] sm:$0xff] %vm2107, %v4083
        %s4337 = scalar_lea.vmem %s12, 32
        %v4338 = vld [vmem:[%s4337] sm:$0xff]
        %v4339 = vld [vmem:[%s4337 + $0x8] sm:$0xff]
        %v4340 = vld [vmem:[%s4337 + $0x10] sm:$0xff]
        %v4341 = vld [vmem:[%s4337 + $0x18] sm:$0xff]
        %v4343 = vsel %vm622, %v4328, 0
        %4345 = vmatprep.subr.mxu0 0.0
        %4346 = vmatpush1.msra.mxu0 0.0
        %4347 = vmatprep.subr.mxu0 0.0
        %4348 = vmatpush1.msra.mxu0 0.0
        %4349 = vmatprep.subr.mxu0 0.0
        %4350 = vmatpush1.msra.mxu0 0.0
        %4351 = vmatprep.subr.mxu0 0.0
        %4352 = vmatpush1.msra.mxu0 0.0
        %4353 = vmatprep.subr.mxu0 0.0
        %4354 = vmatpush1.msra.mxu0 0.0
        %4355 = vmatprep.subr.mxu0 0.0
        %4356 = vmatpush1.msra.mxu0 0.0
        %4357 = vmatprep.subr.mxu0 0.0
        %4358 = vmatpush1.msra.mxu0 0.0
        %4359 = vmatprep.subr.mxu0 0.0
        %4360 = vmatpush1.msra.mxu0 0.0
        %4361 = vmatprep.subr.mxu0 0.0
        %4362 = vmatpush1.msra.mxu0 0.0
        %4363 = vmatprep.subr.mxu0 0.0
        %4364 = vmatpush1.msra.mxu0 0.0
        %4365 = vmatprep.subr.mxu0 0.0
        %4366 = vmatpush1.msra.mxu0 0.0
        %4367 = vmatprep.subr.mxu0 0.0
        %4368 = vmatpush1.msra.mxu0 0.0
        %4369 = vmatprep.subr.mxu0 0.0
        %4370 = vmatpush1.msra.mxu0 %v4341
        %4371 = vmatprep.subr.mxu0 0.0
        %4372 = vmatpush1.msra.mxu0 %v4340
        %4373 = vmatprep.subr.mxu0 0.0
        %4374 = vmatpush1.msra.mxu0 %v4339
        %4375 = vmatprep.subr.mxu0 0.0
        %4376 = vmatpush1.msra.mxu0 %v4338
        %4377 = vmatprep.subr.mxu0 0.0
        %4378 = vmatpush2.msra.mxu0 0.0
        %4379 = vmatprep.subr.mxu0 0.0
        %4380 = vmatpush2.msra.mxu0 0.0
        %4381 = vmatprep.subr.mxu0 0.0
        %4382 = vmatpush2.msra.mxu0 0.0
        %4383 = vmatprep.subr.mxu0 0.0
        %4384 = vmatpush2.msra.mxu0 0.0
        %4385 = vmatprep.subr.mxu0 0.0
        %4386 = vmatpush2.msra.mxu0 0.0
        %4387 = vmatprep.subr.mxu0 0.0
        %4388 = vmatpush2.msra.mxu0 0.0
        %4389 = vmatprep.subr.mxu0 0.0
        %4390 = vmatpush2.msra.mxu0 0.0
        %4391 = vmatprep.subr.mxu0 0.0
        %4392 = vmatpush2.msra.mxu0 0.0
        %4393 = vmatprep.subr.mxu0 0.0
        %4394 = vmatpush2.msra.mxu0 0.0
        %4395 = vmatprep.subr.mxu0 0.0
        %4396 = vmatpush2.msra.mxu0 0.0
        %4397 = vmatprep.subr.mxu0 0.0
        %4398 = vmatpush2.msra.mxu0 0.0
        %4399 = vmatprep.subr.mxu0 0.0
        %4400 = vmatpush2.msra.mxu0 0.0
        %4401 = vmatprep.subr.mxu0 0.0
        %4402 = vmatpush2.msra.mxu0 0.0
        %4403 = vmatprep.subr.mxu0 0.0
        %4404 = vmatpush2.msra.mxu0 0.0
        %4405 = vmatprep.subr.mxu0 0.0
        %4406 = vmatpush2.msra.mxu0 0.0
        %4407 = vmatprep.subr.mxu0 0.0
        %4408 = vmatpush2.msra.mxu0 0.0
        %4409 = vmatprep.mubr.f32.mxu0 0.0
        %4410 = vmatmul.mubr.f32.gmra.mxu0 %v4343
        %v4411 = vpop.f32.mrf.mxu0
        %v4412 = vadd.f32 0.0, %v4411
        %v4413 = vpop.f32.mrf.mxu0
        %4414 = vdwg.mxu0
        %v4415 = vmax.f32 %v4412, 0.0
        %s4416 = scalar_lea.vmem %s13, 64
        %v4417 = vld [vmem:[%s4416] sm:$0xff]
        %v4418 = vld [vmem:[%s4416 + $0x8] sm:$0xff]
        %v4419 = vld [vmem:[%s4416 + $0x10] sm:$0xff]
        %v4420 = vld [vmem:[%s4416 + $0x18] sm:$0xff]
        %v4421 = vld [vmem:[%s4416 + $0x20] sm:$0xff]
        %v4422 = vld [vmem:[%s4416 + $0x28] sm:$0xff]
        %v4423 = vld [vmem:[%s4416 + $0x30] sm:$0xff]
        %v4424 = vld [vmem:[%s4416 + $0x38] sm:$0xff]
        %v4426 = vsel %vm2468, %v4415, 0
        %4428 = vmatprep.subr.mxu0 0.0
        %4429 = vmatpush1.msra.mxu0 0.0
        %4430 = vmatprep.subr.mxu0 0.0
        %4431 = vmatpush1.msra.mxu0 0.0
        %4432 = vmatprep.subr.mxu0 0.0
        %4433 = vmatpush1.msra.mxu0 0.0
        %4434 = vmatprep.subr.mxu0 0.0
        %4435 = vmatpush1.msra.mxu0 0.0
        %4436 = vmatprep.subr.mxu0 0.0
        %4437 = vmatpush1.msra.mxu0 0.0
        %4438 = vmatprep.subr.mxu0 0.0
        %4439 = vmatpush1.msra.mxu0 0.0
        %4440 = vmatprep.subr.mxu0 0.0
        %4441 = vmatpush1.msra.mxu0 0.0
        %4442 = vmatprep.subr.mxu0 0.0
        %4443 = vmatpush1.msra.mxu0 0.0
        %4444 = vmatprep.subr.mxu0 0.0
        %4445 = vmatpush1.msra.mxu0 %v4424
        %4446 = vmatprep.subr.mxu0 0.0
        %4447 = vmatpush1.msra.mxu0 %v4423
        %4448 = vmatprep.subr.mxu0 0.0
        %4449 = vmatpush1.msra.mxu0 %v4422
        %4450 = vmatprep.subr.mxu0 0.0
        %4451 = vmatpush1.msra.mxu0 %v4421
        %4452 = vmatprep.subr.mxu0 0.0
        %4453 = vmatpush1.msra.mxu0 %v4420
        %4454 = vmatprep.subr.mxu0 0.0
        %4455 = vmatpush1.msra.mxu0 %v4419
        %4456 = vmatprep.subr.mxu0 0.0
        %4457 = vmatpush1.msra.mxu0 %v4418
        %4458 = vmatprep.subr.mxu0 0.0
        %4459 = vmatpush1.msra.mxu0 %v4417
        %4460 = vmatprep.subr.mxu0 0.0
        %4461 = vmatpush2.msra.mxu0 0.0
        %4462 = vmatprep.subr.mxu0 0.0
        %4463 = vmatpush2.msra.mxu0 0.0
        %4464 = vmatprep.subr.mxu0 0.0
        %4465 = vmatpush2.msra.mxu0 0.0
        %4466 = vmatprep.subr.mxu0 0.0
        %4467 = vmatpush2.msra.mxu0 0.0
        %4468 = vmatprep.subr.mxu0 0.0
        %4469 = vmatpush2.msra.mxu0 0.0
        %4470 = vmatprep.subr.mxu0 0.0
        %4471 = vmatpush2.msra.mxu0 0.0
        %4472 = vmatprep.subr.mxu0 0.0
        %4473 = vmatpush2.msra.mxu0 0.0
        %4474 = vmatprep.subr.mxu0 0.0
        %4475 = vmatpush2.msra.mxu0 0.0
        %4476 = vmatprep.subr.mxu0 0.0
        %4477 = vmatpush2.msra.mxu0 0.0
        %4478 = vmatprep.subr.mxu0 0.0
        %4479 = vmatpush2.msra.mxu0 0.0
        %4480 = vmatprep.subr.mxu0 0.0
        %4481 = vmatpush2.msra.mxu0 0.0
        %4482 = vmatprep.subr.mxu0 0.0
        %4483 = vmatpush2.msra.mxu0 0.0
        %4484 = vmatprep.subr.mxu0 0.0
        %4485 = vmatpush2.msra.mxu0 0.0
        %4486 = vmatprep.subr.mxu0 0.0
        %4487 = vmatpush2.msra.mxu0 0.0
        %4488 = vmatprep.subr.mxu0 0.0
        %4489 = vmatpush2.msra.mxu0 0.0
        %4490 = vmatprep.subr.mxu0 0.0
        %4491 = vmatpush2.msra.mxu0 0.0
        %4492 = vmatprep.mubr.f32.mxu0 0.0
        %4493 = vmatmul.mubr.f32.gmra.mxu0 %v4426
        %v4494 = vpop.f32.mrf.mxu0
        %v4495 = vadd.f32 %v4328, %v4494
        %v4496 = vpop.f32.mrf.mxu0
        %4497 = vdwg.mxu0
        %v4498 = vsel %vm622, %v4495, 0.0
        %4499 = vadd.xlane.f32.xlu0 %v4498
        %v4500 = vpop.xlane.xlu0 %4499
        %v4501 = vmul.f32 %v4500, %v1454
        %v4502 = vmul.f32 %v4495, %v4495
        %v4503 = vsel %vm622, %v4502, 0.0
        %4504 = vadd.xlane.f32.xlu0 %v4503
        %v4505 = vpop.xlane.xlu0 %4504
        %v4506 = vmul.f32 %v4505, %v1454
        %v4507 = vmul.f32 %v4501, %v4501
        %v4508 = vsub.f32 %v4506, %v4507
        %v4509 = vsub.f32 %v4495, %v4501
        %v4510 = vadd.f32 %v4508, 1e-05
        %v4511 = vrsqrt.pop %v4510
        %v4512 = vmul.f32 %v4509, %v4511
        %4513 = vst.msk [vmem:[%s557] sm:$0xff] %vm622, %v4512
        %s4514 = sand.u32 %s356, 1
        %s4515 = scalar_lea.sflag [#allocation3], %s4514
        %s4516 = sand.u32 %s356, 1
        %s4517 = smul.addr %s4516, 8
        %s4518 = scalar_lea.vmem [#allocation2], %s4517
        %s4519 = sand.u32 %s34, 1
        %s4520 = scalar_lea.sflag [#allocation5], %s4519
        %s4521 = sand.u32 %s382, 1
        %s4522 = smul.addr %s4521, 32
        %s4523 = scalar_lea.vmem [#allocation4], %s4522
        %s4524 = sand.u32 %s34, 1
        %s4525 = scalar_lea.sflag [#allocation5], %s4524
        %s4526 = sand.u32 %s408, 1
        %s4527 = smul.addr %s4526, 32
        %s4528 = scalar_lea.vmem [#allocation6], %s4527
        // Predicated region
        $region77: #{tpu_custom_call.1} parent=75 // pred_check
          %p4529 = pneg %p366
        $region78: #{tpu_custom_call.1} parent=75 // pred_check_branch
          %4531 = sbr.rel (%p4529) target = $region80
        $region79: #{tpu_custom_call.1} parent=75 // pred_region
          %s4533 = ssub.s32 128, 128
          %4534 = vsyncadd %s4515, %s4533
          %s4535 = smul.addr %s34, 128
          %s4536 = scalar_lea.hbm %s14, %s4535
          %s4538 = sshll.u32 %s4518, 4
          %s4539 = int_to_ptr.vmem [resolvable:$true] %s4538
          %4541 = dma.vmem_to_hbm [thread:$0]  %s4539, 128, %s4536, %s4515
        $region80: #{tpu_custom_call.1} parent=75 // pred_fallthru
          _
        // Predicated region
        $region81: #{tpu_custom_call.1} parent=75 // pred_check
          %p4542 = pneg %p392
        $region82: #{tpu_custom_call.1} parent=75 // pred_check_branch
          %4544 = sbr.rel (%p4542) target = $region84
        $region83: #{tpu_custom_call.1} parent=75 // pred_region
          %s4546 = ssub.s32 512, 512
          %4547 = vsyncadd %s4520, %s4546
          %s4548 = smul.addr %s34, 4
          %s4549 = smul.addr %s4548, 128
          %s4550 = scalar_lea.hbm %s15, %s4549
          %s4551 = sshll.u32 %s4523, 4
          %s4552 = int_to_ptr.vmem [resolvable:$true] %s4551
          %4557 = dma.vmem_to_hbm [thread:$0]  %s4552, 512, %s4550, %s4520, 128, 128, 8
        $region84: #{tpu_custom_call.1} parent=75 // pred_fallthru
          _
        // Predicated region
        $region85: #{tpu_custom_call.1} parent=75 // pred_check
          %p4558 = pneg %p418
        $region86: #{tpu_custom_call.1} parent=75 // pred_check_branch
          %4560 = sbr.rel (%p4558) target = $region88
        $region87: #{tpu_custom_call.1} parent=75 // pred_region
          %s4562 = ssub.s32 512, 512
          %4563 = vsyncadd %s4525, %s4562
          %s4564 = smul.addr %s34, 4
          %s4565 = smul.addr %s4564, 128
          %s4566 = scalar_lea.hbm %s16, %s4565
          %s4567 = sshll.u32 %s4528, 4
          %s4568 = int_to_ptr.vmem [resolvable:$true] %s4567
          %4573 = dma.vmem_to_hbm [thread:$0]  %s4568, 512, %s4566, %s4525, 128, 128, 8
        $region88: #{tpu_custom_call.1} parent=75 // pred_fallthru
          _
      $region76: #{tpu_custom_call.1} parent=5 // pred_fallthru
        _
      %p4574 = scmp.le.s32.totalorder 2, %s29
      // Predicated region
      $region89: #{tpu_custom_call.1} parent=5 // pred_check
        %p4575 = pneg %p4574
      $region90: #{tpu_custom_call.1} parent=5 // pred_check_branch
        %4577 = sbr.rel (%p4575) target = $region92
      $region91: #{tpu_custom_call.1} parent=5 // pred_region
        %s4578 = ssub.s32 %s29, 2
        // Predicated region
        $region93: #{tpu_custom_call.1} parent=91 // pred_check
          %p4579 = pneg %p372
        $region94: #{tpu_custom_call.1} parent=91 // pred_check_branch
          %4581 = sbr.rel (%p4579) target = $region96
        $region95: #{tpu_custom_call.1} parent=91 // pred_region
          %s4582 = sand.u32 %s357, 1
          %s4583 = scalar_lea.sflag [#allocation3], %s4582
          %s4584 = sand.u32 %s357, 1
          %s4585 = smul.addr %s4584, 8
          %s4586 = scalar_lea.vmem [#allocation2], %s4585
          %4587 = dma.done %s4583, 128
        $region96: #{tpu_custom_call.1} parent=91 // pred_fallthru
          _
        // Predicated region
        $region97: #{tpu_custom_call.1} parent=91 // pred_check
          %p4588 = pneg %p398
        $region98: #{tpu_custom_call.1} parent=91 // pred_check_branch
          %4590 = sbr.rel (%p4588) target = $region100
        $region99: #{tpu_custom_call.1} parent=91 // pred_region
          %s4591 = sand.u32 %s35, 1
          %s4592 = scalar_lea.sflag [#allocation5], %s4591
          %s4593 = sand.u32 %s383, 1
          %s4594 = smul.addr %s4593, 32
          %s4595 = scalar_lea.vmem [#allocation4], %s4594
          %4596 = dma.done %s4592, 512
        $region100: #{tpu_custom_call.1} parent=91 // pred_fallthru
          _
        // Predicated region
        $region101: #{tpu_custom_call.1} parent=91 // pred_check
          %p4597 = pneg %p424
        $region102: #{tpu_custom_call.1} parent=91 // pred_check_branch
          %4599 = sbr.rel (%p4597) target = $region104
        $region103: #{tpu_custom_call.1} parent=91 // pred_region
          %s4600 = sand.u32 %s35, 1
          %s4601 = scalar_lea.sflag [#allocation5], %s4600
          %s4602 = sand.u32 %s409, 1
          %s4603 = smul.addr %s4602, 32
          %s4604 = scalar_lea.vmem [#allocation6], %s4603
          %4605 = dma.done %s4601, 512
        $region104: #{tpu_custom_call.1} parent=91 // pred_fallthru
          _
      $region92: #{tpu_custom_call.1} parent=5 // pred_fallthru
        _
    $region6: #{tpu_custom_call.1} parent=1 // loop_footer
      %s33 = sadd.s32 1, %s29
    $region7: #{tpu_custom_call.1} parent=1 // loop_footer_branch
      %28 = sbr.rel target = $region3
    $region8: #{tpu_custom_call.1} parent=1 // loop_exit
      _
    %4606 = vsyncpa [#allocation3], 1
    %s4607 = scalar_lea.sflag [#allocation3], 1
    %4608 = vsyncpa %s4607, 1
    %4609 = vsyncpa [#allocation5], 1
    %s4610 = scalar_lea.sflag [#allocation5], 1
    %4611 = vsyncpa %s4610, 1

</llo_original>
